<compile_context>
chip_gen: v6e
topology: v6e:2x2x1
jax: 0.10.0
libtpu: 0.0.40
codegen_flags: <defaults>
</compile_context>

<pallas_src>
import functools

import jax
import jax.numpy as jnp
from jax.experimental import pallas as pl
from jax.experimental.pallas import tpu as pltpu


def _ln(x, gamma, beta, eps=1e-5):
    mu = jnp.mean(x, axis=-1, keepdims=True)
    var = jnp.mean((x - mu) ** 2, axis=-1, keepdims=True)
    return (x - mu) * jax.lax.rsqrt(var + eps) * gamma + beta


def decoder_kernel(emb_ref, ctx_ref, hid_ref,
                   wxce_ref, wxch_ref, bxc_ref,
                   wpgh_ref, wpge_ref, bpg_ref,
                   wih_ref, bih_ref, whh_ref, bhh_ref,
                   lngi_ref, lnbi_ref, lngh_ref, lnbh_ref,
                   wfch_ref, sfch_ref, wfcc_ref, sfcc_ref, bfc_ref,
                   logits_ref, hnew_ref, pgen_ref, m_ref, l_ref,
                   hbf_sc, cbf_sc, m_sc, l_sc,
                   *, hid_dim):
    H = hid_dim
    j = pl.program_id(1)
    nj = pl.num_programs(1)

    # ---- first vocab tile of this core: x_context + p_gen + LN-GRU ---------
    @pl.when(j == 0)
    def _():
        emb = emb_ref[...]                                    # (B, E) f32
        ctx = ctx_ref[...]                                    # (B, H) f32
        hid = hid_ref[...]                                    # (B, H) f32

        # inp = relu(W_xc_e @ emb + W_xc_h @ ctx + b)  (split matmuls, no cat)
        inp = (jnp.dot(emb.astype(jnp.bfloat16), wxce_ref[...],
                       preferred_element_type=jnp.float32)
               + jnp.dot(ctx.astype(jnp.bfloat16), wxch_ref[...],
                         preferred_element_type=jnp.float32)
               + bxc_ref[...])
        inp = jnp.maximum(inp, 0.0)                           # (B, E) f32

        # p_gen on the VPU (N=1 matmul avoided): sigmoid(hid.w_h + inp.w_e + b)
        pg = (jnp.sum(hid * wpgh_ref[...], axis=-1, keepdims=True)
              + jnp.sum(inp * wpge_ref[...], axis=-1, keepdims=True)
              + bpg_ref[...])
        pg = jax.nn.sigmoid(pg)                               # (B, 1)
        pgen_ref[0] = jnp.broadcast_to(pg, pgen_ref.shape[1:])  # lane-dense

        # LayerNorm GRU cell: fused gate matmuls (E,3H) / (H,3H)
        gi = (jnp.dot(inp.astype(jnp.bfloat16), wih_ref[...],
                      preferred_element_type=jnp.float32) + bih_ref[...])
        gh = (jnp.dot(hid.astype(jnp.bfloat16), whh_ref[...],
                      preferred_element_type=jnp.float32) + bhh_ref[...])
        lngi, lnbi = lngi_ref[...], lnbi_ref[...]
        lngh, lnbh = lngh_ref[...], lnbh_ref[...]

        def gate(g, gamma, beta, k):
            sl = slice(k * H, (k + 1) * H)
            return _ln(g[:, sl], gamma[:, sl], beta[:, sl])

        r = jax.nn.sigmoid(gate(gi, lngi, lnbi, 0) + gate(gh, lngh, lnbh, 0))
        z = jax.nn.sigmoid(gate(gi, lngi, lnbi, 1) + gate(gh, lngh, lnbh, 1))
        n = jnp.tanh(gate(gi, lngi, lnbi, 2) + r * gate(gh, lngh, lnbh, 2))
        h_new = (1.0 - z) * n + z * hid                       # (B, H) f32
        hnew_ref[0] = h_new

        # cache bf16 activations reused by every streamed fc_out tile
        hbf_sc[...] = h_new.astype(jnp.bfloat16)
        cbf_sc[...] = ctx.astype(jnp.bfloat16)

        # init online-softmax stats
        m_sc[...] = jnp.full_like(m_sc, -jnp.inf)
        l_sc[...] = jnp.zeros_like(l_sc)

    # ---- every step: one vocab tile of fc_out (int8 weight streaming) ------
    w_h = wfch_ref[...].astype(jnp.bfloat16)                  # (H, tv) dequant (VPU)
    w_c = wfcc_ref[...].astype(jnp.bfloat16)
    logits = (jnp.dot(hbf_sc[...], w_h, preferred_element_type=jnp.float32)
              * sfch_ref[...]
              + jnp.dot(cbf_sc[...], w_c, preferred_element_type=jnp.float32)
              * sfcc_ref[...]
              + bfc_ref[...])                                 # (B, tv) f32
    logits_ref[...] = logits                                  # streamed to HBM

    m_old = m_sc[...]
    m_new = jnp.maximum(m_old, jnp.max(logits, axis=-1, keepdims=True))
    l_sc[...] = (l_sc[...] * jnp.exp(m_old - m_new)
                 + jnp.sum(jnp.exp(logits - m_new), axis=-1, keepdims=True))
    m_sc[...] = m_new

    # ---- last tile of this core: emit softmax stats -------------------------
    @pl.when(j == nj - 1)
    def _():
        m_ref[0] = jnp.broadcast_to(m_sc[...], m_ref.shape[1:])
        l_ref[0] = jnp.broadcast_to(l_sc[...], l_ref.shape[1:])


def _pick_vmem_limit(B, E, H, tile_v):
    """Generation-aware VMEM budget: cover our buffers + margin, leave headroom."""
    f32, bf16, i8 = 4, 2, 1
    resident = ((B * E + 2 * B * H) * f32                       # emb, ctx, hid
                + (E * E + H * E) * bf16 + E * f32              # x_context
                + (H + E + 1) * f32                             # p_gen
                + (E * 3 * H + H * 3 * H) * bf16                # GRU weights
                + (2 * 3 * H + 4 * 3 * H) * f32                 # GRU biases + LN
                + (B * H + 3 * B * 128) * f32                   # hnew/pgen/m/l out
                + 2 * B * H * bf16 + 2 * B * f32)               # scratch
    streamed = (2 * H * tile_v * i8                              # int8 weights
                + 3 * tile_v * f32                               # scales + bias
                + B * tile_v * f32)                              # logits tile out
    need = 2 * (resident + streamed)          # default double-buffering
    want = 2 * need + (16 << 20)              # margin for compiler scratch
    try:
        phys = int(pltpu.get_tpu_info().vmem_capacity_bytes)
    except Exception:
        phys = 64 << 20                       # conservative: v7x per-TC VMEM
    headroom = 12 << 20
    return int(max(16 << 20, min(phys - headroom, want)))


def init_params(key, emb_vocab, emb_dim, hid_dim, vocab_size):
    E, H, V = emb_dim, hid_dim, vocab_size
    ks = jax.random.split(key, 16)

    def normal(k, shape, std):
        return std * jax.random.normal(k, shape, jnp.float32)

    bf = lambda x: x.astype(jnp.bfloat16)

    def quant_cols(w):  # symmetric per-output-column int8
        amax = jnp.max(jnp.abs(w), axis=0, keepdims=True)
        scale = jnp.maximum(amax, 1e-30) / 127.0
        q = jnp.clip(jnp.round(w / scale), -127.0, 127.0).astype(jnp.int8)
        return q, scale.astype(jnp.float32)

    w_fc_h, s_fc_h = quant_cols(normal(ks[11], (H, V), 1e-4))
    w_fc_c, s_fc_c = quant_cols(normal(ks[12], (H, V), 1e-4))

    return dict(
        emb_table=normal(ks[0], (emb_vocab, E), 1.0),
        # x_context: Linear(hid+emb -> emb), split along input (emb | ctx)
        w_xc_e=bf(normal(ks[1], (E, E), 0.05)),
        w_xc_h=bf(normal(ks[2], (H, E), 0.05)),
        b_xc=normal(ks[3], (1, E), 0.05),
        # p_gen_linear: Linear(hid+emb -> 1), init std=1e-4, split (hid | inp)
        w_pg_h=normal(ks[4], (1, H), 1e-4),
        w_pg_e=normal(ks[5], (1, E), 1e-4),
        b_pg=normal(ks[6], (1, 1), 1e-4),
        # LayerNorm GRU cell (emb -> hid); fused gates (r|z|n) along lanes
        w_ih=bf(normal(ks[7], (E, 3 * H), 0.05)),
        b_ih=normal(ks[8], (1, 3 * H), 0.05),
        w_hh=bf(normal(ks[9], (H, 3 * H), 0.05)),
        b_hh=normal(ks[10], (1, 3 * H), 0.05),
        ln_g_i=jnp.ones((1, 3 * H), jnp.float32),
        ln_b_i=jnp.zeros((1, 3 * H), jnp.float32),
        ln_g_h=jnp.ones((1, 3 * H), jnp.float32),
        ln_b_h=jnp.zeros((1, 3 * H), jnp.float32),
        # fc_out: Linear(2*hid -> V), init std=1e-4, split (hidden | context),
        # streamed as int8 + per-column scales
        w_fc_h=w_fc_h, s_fc_h=s_fc_h,
        w_fc_c=w_fc_c, s_fc_c=s_fc_c,
        b_fc=normal(ks[13], (1, V), 1e-4),
    )


def decoder_forward(params, input_ids, hidden, context, *, tile_v=512):
    """input_ids: (B,) int32; hidden: (1, B, H); context: (1, B, H)."""
    B = input_ids.shape[0]
    H = hidden.shape[-1]
    E = params["b_xc"].shape[-1]
    V = params["b_fc"].shape[-1]
    assert tile_v % 128 == 0, "vocab tile must be a multiple of the lane width"
    assert V % tile_v == 0, "vocab must be a multiple of the vocab tile"
    n_tiles = V // tile_v
    # split the vocab sweep across 2 TensorCores (v7x); serial & harmless on 1-TC chips
    n_split = 2 if (n_tiles >= 2 and n_tiles % 2 == 0) else 1
    npc = n_tiles // n_split

    embedded = params["emb_table"][input_ids]        # (B, E) gather (JAX glue)
    ctx = context.reshape(B, H).astype(jnp.float32)
    hid = hidden.reshape(B, H).astype(jnp.float32)

    def rspec(shape):  # resident full block, constant index across the grid
        return pl.BlockSpec(shape, lambda p, j, _s=shape: (0,) * len(_s))

    def vstream(shape):  # streamed along vocab; tile = p * npc + j
        return pl.BlockSpec(shape, lambda p, j: (0, p * npc + j))

    def cspec(shape):  # per-core resident output block
        return pl.BlockSpec(shape, lambda p, j: (p, 0, 0))

    in_specs = [
        rspec((B, E)),            # emb
        rspec((B, H)),            # ctx
        rspec((B, H)),            # hid
        rspec((E, E)),            # w_xc_e
        rspec((H, E)),            # w_xc_h
        rspec((1, E)),            # b_xc
        rspec((1, H)),            # w_pg_h
        rspec((1, E)),            # w_pg_e
        rspec((1, 1)),            # b_pg
        rspec((E, 3 * H)),        # w_ih
        rspec((1, 3 * H)),        # b_ih
        rspec((H, 3 * H)),        # w_hh
        rspec((1, 3 * H)),        # b_hh
        rspec((1, 3 * H)),        # ln_g_i
        rspec((1, 3 * H)),        # ln_b_i
        rspec((1, 3 * H)),        # ln_g_h
        rspec((1, 3 * H)),        # ln_b_h
        vstream((H, tile_v)),     # w_fc_h (int8, streamed)
        vstream((1, tile_v)),     # s_fc_h
        vstream((H, tile_v)),     # w_fc_c (int8, streamed)
        vstream((1, tile_v)),     # s_fc_c
        vstream((1, tile_v)),     # b_fc
    ]
    out_specs = (
        vstream((B, tile_v)),     # raw logits, streamed out per vocab tile
        cspec((1, B, H)),         # new hidden (per core copy)
        cspec((1, B, 128)),       # p_gen padded lane-dense (per core copy)
        cspec((1, B, 128)),       # running max m (per core)
        cspec((1, B, 128)),       # running sum l (per core)
    )
    out_shape = (
        jax.ShapeDtypeStruct((B, V), jnp.float32),
        jax.ShapeDtypeStruct((n_split, B, H), jnp.float32),
        jax.ShapeDtypeStruct((n_split, B, 128), jnp.float32),
        jax.ShapeDtypeStruct((n_split, B, 128), jnp.float32),
        jax.ShapeDtypeStruct((n_split, B, 128), jnp.float32),
    )

    args = (embedded, ctx, hid,
            params["w_xc_e"], params["w_xc_h"], params["b_xc"],
            params["w_pg_h"], params["w_pg_e"], params["b_pg"],
            params["w_ih"], params["b_ih"], params["w_hh"], params["b_hh"],
            params["ln_g_i"], params["ln_b_i"], params["ln_g_h"], params["ln_b_h"],
            params["w_fc_h"], params["s_fc_h"],
            params["w_fc_c"], params["s_fc_c"], params["b_fc"])

    logits, hnew_pc, pgen_pc, m_pc, l_pc = pl.pallas_call(
        functools.partial(decoder_kernel, hid_dim=H),
        out_shape=out_shape,
        grid_spec=pltpu.PrefetchScalarGridSpec(
            num_scalar_prefetch=0,
            grid=(n_split, npc),
            in_specs=in_specs,
            out_specs=out_specs,
            scratch_shapes=[pltpu.VMEM((B, H), jnp.bfloat16),   # cached bf16 h_new
                            pltpu.VMEM((B, H), jnp.bfloat16),   # cached bf16 ctx
                            pltpu.VMEM((B, 1), jnp.float32),    # running max
                            pltpu.VMEM((B, 1), jnp.float32)],   # running sum
        ),
        compiler_params=pltpu.CompilerParams(
            dimension_semantics=("parallel", "arbitrary"),
            vmem_limit_bytes=_pick_vmem_limit(B, E, H, tile_v)),
    )(*args)

    # Combine per-core softmax stats and normalize exactly in the wrapper
    # (one cheap elementwise pass; no approx reciprocal).
    m_pc = m_pc[:, :, 0]                                    # (n_split, B)
    l_pc = l_pc[:, :, 0]                                    # (n_split, B)
    m = jnp.max(m_pc, axis=0)                               # (B,)
    l = jnp.sum(l_pc * jnp.exp(m_pc - m[None, :]), axis=0)  # (B,)
    probs = jnp.exp(logits - m[:, None]) / l[:, None]

    # match PyTorch return shapes: outp (B,V), hidden (1,B,H), p_gen (B,1)
    return probs, hnew_pc[0].reshape(1, B, H), pgen_pc[0, :, :1]


if __name__ == "__main__":
    B, E, H, V, EMB_VOCAB, TILE_V = 8, 32, 32, 2048, 100, 512

    key = jax.random.PRNGKey(0)
    kp, ki, kh, kc = jax.random.split(key, 4)

    params = init_params(kp, EMB_VOCAB, E, H, V)
    input_ids = jax.random.randint(ki, (B,), 0, EMB_VOCAB)
    hidden = jax.random.normal(kh, (1, B, H), jnp.float32)
    context = jax.random.normal(kc, (1, B, H), jnp.float32)

    outp, h_new, p_gen = decoder_forward(params, input_ids, hidden, context,
                                         tile_v=TILE_V)
    (outp, h_new, p_gen) = jax.block_until_ready((outp, h_new, p_gen))

    assert outp.shape == (B, V)
    assert h_new.shape == (1, B, H)
    assert p_gen.shape == (B, 1)
    assert bool(jnp.all(jnp.isfinite(outp)))
    assert bool(jnp.all(jnp.isfinite(h_new)))
    assert bool(jnp.all((p_gen > 0.0) & (p_gen < 1.0)))
    # exact normalization in the wrapper -> rows sum to 1 within f32 rounding
    assert bool(jnp.allclose(jnp.sum(outp, axis=1), 1.0, atol=1e-3))

    print("KERNEL_OK")
</pallas_src>

<mosaic_0001>
module attributes {stable_mosaic.version = 11 : i64} {
  func.func @decoder_kernel(%arg0: i32, %arg1: i32, %arg2: memref<8x32xf32, #tpu.memory_space<vmem>>, %arg3: memref<8x32xf32, #tpu.memory_space<vmem>>, %arg4: memref<8x32xf32, #tpu.memory_space<vmem>>, %arg5: memref<32x32xbf16, #tpu.memory_space<vmem>>, %arg6: memref<32x32xbf16, #tpu.memory_space<vmem>>, %arg7: memref<1x32xf32, #tpu.memory_space<vmem>>, %arg8: memref<1x32xf32, #tpu.memory_space<vmem>>, %arg9: memref<1x32xf32, #tpu.memory_space<vmem>>, %arg10: memref<1x1xf32, #tpu.memory_space<vmem>>, %arg11: memref<32x96xbf16, #tpu.memory_space<vmem>>, %arg12: memref<1x96xf32, #tpu.memory_space<vmem>>, %arg13: memref<32x96xbf16, #tpu.memory_space<vmem>>, %arg14: memref<1x96xf32, #tpu.memory_space<vmem>>, %arg15: memref<1x96xf32, #tpu.memory_space<vmem>>, %arg16: memref<1x96xf32, #tpu.memory_space<vmem>>, %arg17: memref<1x96xf32, #tpu.memory_space<vmem>>, %arg18: memref<1x96xf32, #tpu.memory_space<vmem>>, %arg19: memref<32x512xi8, #tpu.memory_space<vmem>>, %arg20: memref<1x512xf32, #tpu.memory_space<vmem>>, %arg21: memref<32x512xi8, #tpu.memory_space<vmem>>, %arg22: memref<1x512xf32, #tpu.memory_space<vmem>>, %arg23: memref<1x512xf32, #tpu.memory_space<vmem>>, %arg24: memref<8x512xf32, #tpu.memory_space<vmem>>, %arg25: memref<1x8x32xf32, #tpu.memory_space<vmem>>, %arg26: memref<1x8x128xf32, #tpu.memory_space<vmem>>, %arg27: memref<1x8x128xf32, #tpu.memory_space<vmem>>, %arg28: memref<1x8x128xf32, #tpu.memory_space<vmem>>, %arg29: memref<8x32xbf16, #tpu.memory_space<vmem>>, %arg30: memref<8x32xbf16, #tpu.memory_space<vmem>>, %arg31: memref<8x1xf32, #tpu.memory_space<vmem>>, %arg32: memref<8x1xf32, #tpu.memory_space<vmem>>) attributes {dimension_semantics = [#tpu.dimension_semantics<parallel>, #tpu.dimension_semantics<arbitrary>], iteration_bounds = array<i64: 2, 2>, scalar_prefetch = 0 : i64, scratch_operands = 4 : i64, tpu.core_type = #tpu.core_type<tc>, window_params = [{pipeline_mode = #tpu.pipeline_mode<synchronous>, transform_indices = @transform_0, window_bounds = array<i64: 8, 32>}, {pipeline_mode = #tpu.pipeline_mode<synchronous>, transform_indices = @transform_1, window_bounds = array<i64: 8, 32>}, {pipeline_mode = #tpu.pipeline_mode<synchronous>, transform_indices = @transform_2, window_bounds = array<i64: 8, 32>}, {pipeline_mode = #tpu.pipeline_mode<synchronous>, transform_indices = @transform_3, window_bounds = array<i64: 32, 32>}, {pipeline_mode = #tpu.pipeline_mode<synchronous>, transform_indices = @transform_4, window_bounds = array<i64: 32, 32>}, {pipeline_mode = #tpu.pipeline_mode<synchronous>, transform_indices = @transform_5, window_bounds = array<i64: 1, 32>}, {pipeline_mode = #tpu.pipeline_mode<synchronous>, transform_indices = @transform_6, window_bounds = array<i64: 1, 32>}, {pipeline_mode = #tpu.pipeline_mode<synchronous>, transform_indices = @transform_7, window_bounds = array<i64: 1, 32>}, {pipeline_mode = #tpu.pipeline_mode<synchronous>, transform_indices = @transform_8, window_bounds = array<i64: 1, 1>}, {pipeline_mode = #tpu.pipeline_mode<synchronous>, transform_indices = @transform_9, window_bounds = array<i64: 32, 96>}, {pipeline_mode = #tpu.pipeline_mode<synchronous>, transform_indices = @transform_10, window_bounds = array<i64: 1, 96>}, {pipeline_mode = #tpu.pipeline_mode<synchronous>, transform_indices = @transform_11, window_bounds = array<i64: 32, 96>}, {pipeline_mode = #tpu.pipeline_mode<synchronous>, transform_indices = @transform_12, window_bounds = array<i64: 1, 96>}, {pipeline_mode = #tpu.pipeline_mode<synchronous>, transform_indices = @transform_13, window_bounds = array<i64: 1, 96>}, {pipeline_mode = #tpu.pipeline_mode<synchronous>, transform_indices = @transform_14, window_bounds = array<i64: 1, 96>}, {pipeline_mode = #tpu.pipeline_mode<synchronous>, transform_indices = @transform_15, window_bounds = array<i64: 1, 96>}, {pipeline_mode = #tpu.pipeline_mode<synchronous>, transform_indices = @transform_16, window_bounds = array<i64: 1, 96>}, {transform_indices = @transform_17, window_bounds = array<i64: 32, 512>}, {transform_indices = @transform_18, window_bounds = array<i64: 1, 512>}, {transform_indices = @transform_19, window_bounds = array<i64: 32, 512>}, {transform_indices = @transform_20, window_bounds = array<i64: 1, 512>}, {transform_indices = @transform_21, window_bounds = array<i64: 1, 512>}, {transform_indices = @transform_22, window_bounds = array<i64: 8, 512>}, {transform_indices = @transform_23, window_bounds = array<i64: 1, 8, 32>}, {transform_indices = @transform_24, window_bounds = array<i64: 1, 8, 128>}, {transform_indices = @transform_25, window_bounds = array<i64: 1, 8, 128>}, {transform_indices = @transform_26, window_bounds = array<i64: 1, 8, 128>}]} {
    %c0_i32 = arith.constant 0 : i32
    %0 = arith.cmpi eq, %arg1, %c0_i32 : i32
    %1 = arith.extui %0 : i1 to i32
    %c0_i32_0 = arith.constant 0 : i32
    %2 = arith.cmpi ne, %1, %c0_i32_0 : i32
    scf.if %2 {
      %c0_28 = arith.constant 0 : index
      %c0_29 = arith.constant 0 : index
      %41 = vector.load %arg2[%c0_28, %c0_29] : memref<8x32xf32, #tpu.memory_space<vmem>>, vector<8x32xf32>
      %c0_30 = arith.constant 0 : index
      %c0_31 = arith.constant 0 : index
      %42 = vector.load %arg3[%c0_30, %c0_31] : memref<8x32xf32, #tpu.memory_space<vmem>>, vector<8x32xf32>
      %c0_32 = arith.constant 0 : index
      %c0_33 = arith.constant 0 : index
      %43 = vector.load %arg4[%c0_32, %c0_33] : memref<8x32xf32, #tpu.memory_space<vmem>>, vector<8x32xf32>
      %44 = arith.truncf %41 : vector<8x32xf32> to vector<8x32xbf16>
      %c0_34 = arith.constant 0 : index
      %c0_35 = arith.constant 0 : index
      %45 = vector.load %arg5[%c0_34, %c0_35] : memref<32x32xbf16, #tpu.memory_space<vmem>>, vector<32x32xbf16>
      %cst_36 = arith.constant dense<0.000000e+00> : vector<8x32xf32>
      %46 = tpu.matmul %44, %45, %cst_36 {dimension_numbers = #tpu.dot_dimension_numbers<[1], [0], [0], [1], [0, 0, 1, 1], [], []>} : vector<8x32xbf16>, vector<32x32xbf16>, vector<8x32xf32> -> vector<8x32xf32>
      %47 = arith.truncf %42 : vector<8x32xf32> to vector<8x32xbf16>
      %c0_37 = arith.constant 0 : index
      %c0_38 = arith.constant 0 : index
      %48 = vector.load %arg6[%c0_37, %c0_38] : memref<32x32xbf16, #tpu.memory_space<vmem>>, vector<32x32xbf16>
      %cst_39 = arith.constant dense<0.000000e+00> : vector<8x32xf32>
      %49 = tpu.matmul %47, %48, %cst_39 {dimension_numbers = #tpu.dot_dimension_numbers<[1], [0], [0], [1], [0, 0, 1, 1], [], []>} : vector<8x32xbf16>, vector<32x32xbf16>, vector<8x32xf32> -> vector<8x32xf32>
      %50 = arith.addf %46, %49 : vector<8x32xf32>
      %c0_40 = arith.constant 0 : index
      %c0_41 = arith.constant 0 : index
      %51 = vector.load %arg7[%c0_40, %c0_41] : memref<1x32xf32, #tpu.memory_space<vmem>>, vector<1x32xf32>
      %52 = vector.broadcast %51 : vector<1x32xf32> to vector<8x32xf32>
      %53 = arith.addf %50, %52 : vector<8x32xf32>
      %cst_42 = arith.constant 0.000000e+00 : f32
      %54 = vector.broadcast %cst_42 : f32 to vector<8x32xf32>
      %55 = arith.maximumf %53, %54 : vector<8x32xf32>
      %c0_43 = arith.constant 0 : index
      %c0_44 = arith.constant 0 : index
      %56 = vector.load %arg8[%c0_43, %c0_44] : memref<1x32xf32, #tpu.memory_space<vmem>>, vector<1x32xf32>
      %57 = vector.broadcast %56 : vector<1x32xf32> to vector<8x32xf32>
      %58 = arith.mulf %43, %57 : vector<8x32xf32>
      %cst_45 = arith.constant dense<0.000000e+00> : vector<8xf32>
      %59 = vector.multi_reduction <add>, %58, %cst_45 [1] : vector<8x32xf32> to vector<8xf32>
      %60 = vector.shape_cast %59 : vector<8xf32> to vector<8x1xf32>
      %c0_46 = arith.constant 0 : index
      %c0_47 = arith.constant 0 : index
      %61 = vector.load %arg9[%c0_46, %c0_47] : memref<1x32xf32, #tpu.memory_space<vmem>>, vector<1x32xf32>
      %62 = vector.broadcast %61 : vector<1x32xf32> to vector<8x32xf32>
      %63 = arith.mulf %55, %62 : vector<8x32xf32>
      %cst_48 = arith.constant dense<0.000000e+00> : vector<8xf32>
      %64 = vector.multi_reduction <add>, %63, %cst_48 [1] : vector<8x32xf32> to vector<8xf32>
      %65 = vector.shape_cast %64 : vector<8xf32> to vector<8x1xf32>
      %66 = arith.addf %60, %65 : vector<8x1xf32>
      %c0_49 = arith.constant 0 : index
      %c0_50 = arith.constant 0 : index
      %67 = vector.load %arg10[%c0_49, %c0_50] : memref<1x1xf32, #tpu.memory_space<vmem>>, vector<1x1xf32>
      %68 = vector.broadcast %67 : vector<1x1xf32> to vector<8x1xf32>
      %69 = arith.addf %66, %68 : vector<8x1xf32>
      %70 = arith.negf %69 : vector<8x1xf32>
      %71 = math.exp %70 : vector<8x1xf32>
      %cst_51 = arith.constant 1.000000e+00 : f32
      %72 = vector.broadcast %cst_51 : f32 to vector<8x1xf32>
      %73 = arith.addf %72, %71 : vector<8x1xf32>
      %74 = arith.divf %72, %73 : vector<8x1xf32>
      %75 = vector.shape_cast %74 : vector<8x1xf32> to vector<8x1xf32>
      %76 = vector.broadcast %75 : vector<8x1xf32> to vector<8x128xf32>
      %c0_52 = arith.constant 0 : index
      %c0_53 = arith.constant 0 : index
      %c0_54 = arith.constant 0 : index
      %77 = vector.load %arg26[%c0_52, %c0_53, %c0_54] : memref<1x8x128xf32, #tpu.memory_space<vmem>>, vector<1x8x128xf32>
      %78 = vector.shape_cast %77 : vector<1x8x128xf32> to vector<8x128xf32>
      %79 = vector.shape_cast %76 : vector<8x128xf32> to vector<1x8x128xf32>
      tpu.vector_store %arg26[%c0_52, %c0_53, %c0_54], %79 {strides = array<i32>} : memref<1x8x128xf32, #tpu.memory_space<vmem>>, vector<1x8x128xf32>,
      %80 = arith.truncf %55 : vector<8x32xf32> to vector<8x32xbf16>
      %c0_55 = arith.constant 0 : index
      %c0_56 = arith.constant 0 : index
      %81 = vector.load %arg11[%c0_55, %c0_56] : memref<32x96xbf16, #tpu.memory_space<vmem>>, vector<32x96xbf16>
      %cst_57 = arith.constant dense<0.000000e+00> : vector<8x96xf32>
      %82 = tpu.matmul %80, %81, %cst_57 {dimension_numbers = #tpu.dot_dimension_numbers<[1], [0], [0], [1], [0, 0, 1, 1], [], []>} : vector<8x32xbf16>, vector<32x96xbf16>, vector<8x96xf32> -> vector<8x96xf32>
      %c0_58 = arith.constant 0 : index
      %c0_59 = arith.constant 0 : index
      %83 = vector.load %arg12[%c0_58, %c0_59] : memref<1x96xf32, #tpu.memory_space<vmem>>, vector<1x96xf32>
      %84 = vector.broadcast %83 : vector<1x96xf32> to vector<8x96xf32>
      %85 = arith.addf %82, %84 : vector<8x96xf32>
      %86 = arith.truncf %43 : vector<8x32xf32> to vector<8x32xbf16>
      %c0_60 = arith.constant 0 : index
      %c0_61 = arith.constant 0 : index
      %87 = vector.load %arg13[%c0_60, %c0_61] : memref<32x96xbf16, #tpu.memory_space<vmem>>, vector<32x96xbf16>
      %cst_62 = arith.constant dense<0.000000e+00> : vector<8x96xf32>
      %88 = tpu.matmul %86, %87, %cst_62 {dimension_numbers = #tpu.dot_dimension_numbers<[1], [0], [0], [1], [0, 0, 1, 1], [], []>} : vector<8x32xbf16>, vector<32x96xbf16>, vector<8x96xf32> -> vector<8x96xf32>
      %c0_63 = arith.constant 0 : index
      %c0_64 = arith.constant 0 : index
      %89 = vector.load %arg14[%c0_63, %c0_64] : memref<1x96xf32, #tpu.memory_space<vmem>>, vector<1x96xf32>
      %90 = vector.broadcast %89 : vector<1x96xf32> to vector<8x96xf32>
      %91 = arith.addf %88, %90 : vector<8x96xf32>
      %c0_65 = arith.constant 0 : index
      %c0_66 = arith.constant 0 : index
      %92 = vector.load %arg15[%c0_65, %c0_66] : memref<1x96xf32, #tpu.memory_space<vmem>>, vector<1x96xf32>
      %c0_67 = arith.constant 0 : index
      %c0_68 = arith.constant 0 : index
      %93 = vector.load %arg16[%c0_67, %c0_68] : memref<1x96xf32, #tpu.memory_space<vmem>>, vector<1x96xf32>
      %c0_69 = arith.constant 0 : index
      %c0_70 = arith.constant 0 : index
      %94 = vector.load %arg17[%c0_69, %c0_70] : memref<1x96xf32, #tpu.memory_space<vmem>>, vector<1x96xf32>
      %c0_71 = arith.constant 0 : index
      %c0_72 = arith.constant 0 : index
      %95 = vector.load %arg18[%c0_71, %c0_72] : memref<1x96xf32, #tpu.memory_space<vmem>>, vector<1x96xf32>
      %96 = vector.extract_strided_slice %85 {offsets = [0, 0], sizes = [8, 32], strides = [1, 1]} : vector<8x96xf32> to vector<8x32xf32>
      %97 = vector.extract_strided_slice %92 {offsets = [0, 0], sizes = [1, 32], strides = [1, 1]} : vector<1x96xf32> to vector<1x32xf32>
      %98 = vector.extract_strided_slice %93 {offsets = [0, 0], sizes = [1, 32], strides = [1, 1]} : vector<1x96xf32> to vector<1x32xf32>
      %cst_73 = arith.constant dense<0.000000e+00> : vector<8xf32>
      %99 = vector.multi_reduction <add>, %96, %cst_73 [1] : vector<8x32xf32> to vector<8xf32>
      %100 = vector.shape_cast %99 : vector<8xf32> to vector<8x1xf32>
      %cst_74 = arith.constant 3.200000e+01 : f32
      %101 = vector.broadcast %cst_74 : f32 to vector<8x1xf32>
      %102 = arith.divf %100, %101 : vector<8x1xf32>
      %103 = vector.broadcast %102 : vector<8x1xf32> to vector<8x32xf32>
      %104 = arith.subf %96, %103 : vector<8x32xf32>
      %105 = arith.mulf %104, %104 : vector<8x32xf32>
      %cst_75 = arith.constant dense<0.000000e+00> : vector<8xf32>
      %106 = vector.multi_reduction <add>, %105, %cst_75 [1] : vector<8x32xf32> to vector<8xf32>
      %107 = vector.shape_cast %106 : vector<8xf32> to vector<8x1xf32>
      %cst_76 = arith.constant 3.200000e+01 : f32
      %108 = vector.broadcast %cst_76 : f32 to vector<8x1xf32>
      %109 = arith.divf %107, %108 : vector<8x1xf32>
      %110 = vector.broadcast %102 : vector<8x1xf32> to vector<8x32xf32>
      %111 = arith.subf %96, %110 : vector<8x32xf32>
      %cst_77 = arith.constant 9.99999974E-6 : f32
      %112 = vector.broadcast %cst_77 : f32 to vector<8x1xf32>
      %113 = arith.addf %109, %112 : vector<8x1xf32>
      %114 = math.rsqrt %113 : vector<8x1xf32>
      %115 = vector.broadcast %114 : vector<8x1xf32> to vector<8x32xf32>
      %116 = arith.mulf %111, %115 : vector<8x32xf32>
      %117 = vector.broadcast %97 : vector<1x32xf32> to vector<8x32xf32>
      %118 = arith.mulf %116, %117 : vector<8x32xf32>
      %119 = vector.broadcast %98 : vector<1x32xf32> to vector<8x32xf32>
      %120 = arith.addf %118, %119 : vector<8x32xf32>
      %121 = vector.extract_strided_slice %91 {offsets = [0, 0], sizes = [8, 32], strides = [1, 1]} : vector<8x96xf32> to vector<8x32xf32>
      %122 = vector.extract_strided_slice %94 {offsets = [0, 0], sizes = [1, 32], strides = [1, 1]} : vector<1x96xf32> to vector<1x32xf32>
      %123 = vector.extract_strided_slice %95 {offsets = [0, 0], sizes = [1, 32], strides = [1, 1]} : vector<1x96xf32> to vector<1x32xf32>
      %cst_78 = arith.constant dense<0.000000e+00> : vector<8xf32>
      %124 = vector.multi_reduction <add>, %121, %cst_78 [1] : vector<8x32xf32> to vector<8xf32>
      %125 = vector.shape_cast %124 : vector<8xf32> to vector<8x1xf32>
      %cst_79 = arith.constant 3.200000e+01 : f32
      %126 = vector.broadcast %cst_79 : f32 to vector<8x1xf32>
      %127 = arith.divf %125, %126 : vector<8x1xf32>
      %128 = vector.broadcast %127 : vector<8x1xf32> to vector<8x32xf32>
      %129 = arith.subf %121, %128 : vector<8x32xf32>
      %130 = arith.mulf %129, %129 : vector<8x32xf32>
      %cst_80 = arith.constant dense<0.000000e+00> : vector<8xf32>
      %131 = vector.multi_reduction <add>, %130, %cst_80 [1] : vector<8x32xf32> to vector<8xf32>
      %132 = vector.shape_cast %131 : vector<8xf32> to vector<8x1xf32>
      %cst_81 = arith.constant 3.200000e+01 : f32
      %133 = vector.broadcast %cst_81 : f32 to vector<8x1xf32>
      %134 = arith.divf %132, %133 : vector<8x1xf32>
      %135 = vector.broadcast %127 : vector<8x1xf32> to vector<8x32xf32>
      %136 = arith.subf %121, %135 : vector<8x32xf32>
      %cst_82 = arith.constant 9.99999974E-6 : f32
      %137 = vector.broadcast %cst_82 : f32 to vector<8x1xf32>
      %138 = arith.addf %134, %137 : vector<8x1xf32>
      %139 = math.rsqrt %138 : vector<8x1xf32>
      %140 = vector.broadcast %139 : vector<8x1xf32> to vector<8x32xf32>
      %141 = arith.mulf %136, %140 : vector<8x32xf32>
      %142 = vector.broadcast %122 : vector<1x32xf32> to vector<8x32xf32>
      %143 = arith.mulf %141, %142 : vector<8x32xf32>
      %144 = vector.broadcast %123 : vector<1x32xf32> to vector<8x32xf32>
      %145 = arith.addf %143, %144 : vector<8x32xf32>
      %146 = arith.addf %120, %145 : vector<8x32xf32>
      %147 = arith.negf %146 : vector<8x32xf32>
      %148 = math.exp %147 : vector<8x32xf32>
      %cst_83 = arith.constant 1.000000e+00 : f32
      %149 = vector.broadcast %cst_83 : f32 to vector<8x32xf32>
      %150 = arith.addf %149, %148 : vector<8x32xf32>
      %151 = arith.divf %149, %150 : vector<8x32xf32>
      %152 = vector.extract_strided_slice %85 {offsets = [0, 32], sizes = [8, 32], strides = [1, 1]} : vector<8x96xf32> to vector<8x32xf32>
      %153 = vector.extract_strided_slice %92 {offsets = [0, 32], sizes = [1, 32], strides = [1, 1]} : vector<1x96xf32> to vector<1x32xf32>
      %154 = vector.extract_strided_slice %93 {offsets = [0, 32], sizes = [1, 32], strides = [1, 1]} : vector<1x96xf32> to vector<1x32xf32>
      %cst_84 = arith.constant dense<0.000000e+00> : vector<8xf32>
      %155 = vector.multi_reduction <add>, %152, %cst_84 [1] : vector<8x32xf32> to vector<8xf32>
      %156 = vector.shape_cast %155 : vector<8xf32> to vector<8x1xf32>
      %cst_85 = arith.constant 3.200000e+01 : f32
      %157 = vector.broadcast %cst_85 : f32 to vector<8x1xf32>
      %158 = arith.divf %156, %157 : vector<8x1xf32>
      %159 = vector.broadcast %158 : vector<8x1xf32> to vector<8x32xf32>
      %160 = arith.subf %152, %159 : vector<8x32xf32>
      %161 = arith.mulf %160, %160 : vector<8x32xf32>
      %cst_86 = arith.constant dense<0.000000e+00> : vector<8xf32>
      %162 = vector.multi_reduction <add>, %161, %cst_86 [1] : vector<8x32xf32> to vector<8xf32>
      %163 = vector.shape_cast %162 : vector<8xf32> to vector<8x1xf32>
      %cst_87 = arith.constant 3.200000e+01 : f32
      %164 = vector.broadcast %cst_87 : f32 to vector<8x1xf32>
      %165 = arith.divf %163, %164 : vector<8x1xf32>
      %166 = vector.broadcast %158 : vector<8x1xf32> to vector<8x32xf32>
      %167 = arith.subf %152, %166 : vector<8x32xf32>
      %cst_88 = arith.constant 9.99999974E-6 : f32
      %168 = vector.broadcast %cst_88 : f32 to vector<8x1xf32>
      %169 = arith.addf %165, %168 : vector<8x1xf32>
      %170 = math.rsqrt %169 : vector<8x1xf32>
      %171 = vector.broadcast %170 : vector<8x1xf32> to vector<8x32xf32>
      %172 = arith.mulf %167, %171 : vector<8x32xf32>
      %173 = vector.broadcast %153 : vector<1x32xf32> to vector<8x32xf32>
      %174 = arith.mulf %172, %173 : vector<8x32xf32>
      %175 = vector.broadcast %154 : vector<1x32xf32> to vector<8x32xf32>
      %176 = arith.addf %174, %175 : vector<8x32xf32>
      %177 = vector.extract_strided_slice %91 {offsets = [0, 32], sizes = [8, 32], strides = [1, 1]} : vector<8x96xf32> to vector<8x32xf32>
      %178 = vector.extract_strided_slice %94 {offsets = [0, 32], sizes = [1, 32], strides = [1, 1]} : vector<1x96xf32> to vector<1x32xf32>
      %179 = vector.extract_strided_slice %95 {offsets = [0, 32], sizes = [1, 32], strides = [1, 1]} : vector<1x96xf32> to vector<1x32xf32>
      %cst_89 = arith.constant dense<0.000000e+00> : vector<8xf32>
      %180 = vector.multi_reduction <add>, %177, %cst_89 [1] : vector<8x32xf32> to vector<8xf32>
      %181 = vector.shape_cast %180 : vector<8xf32> to vector<8x1xf32>
      %cst_90 = arith.constant 3.200000e+01 : f32
      %182 = vector.broadcast %cst_90 : f32 to vector<8x1xf32>
      %183 = arith.divf %181, %182 : vector<8x1xf32>
      %184 = vector.broadcast %183 : vector<8x1xf32> to vector<8x32xf32>
      %185 = arith.subf %177, %184 : vector<8x32xf32>
      %186 = arith.mulf %185, %185 : vector<8x32xf32>
      %cst_91 = arith.constant dense<0.000000e+00> : vector<8xf32>
      %187 = vector.multi_reduction <add>, %186, %cst_91 [1] : vector<8x32xf32> to vector<8xf32>
      %188 = vector.shape_cast %187 : vector<8xf32> to vector<8x1xf32>
      %cst_92 = arith.constant 3.200000e+01 : f32
      %189 = vector.broadcast %cst_92 : f32 to vector<8x1xf32>
      %190 = arith.divf %188, %189 : vector<8x1xf32>
      %191 = vector.broadcast %183 : vector<8x1xf32> to vector<8x32xf32>
      %192 = arith.subf %177, %191 : vector<8x32xf32>
      %cst_93 = arith.constant 9.99999974E-6 : f32
      %193 = vector.broadcast %cst_93 : f32 to vector<8x1xf32>
      %194 = arith.addf %190, %193 : vector<8x1xf32>
      %195 = math.rsqrt %194 : vector<8x1xf32>
      %196 = vector.broadcast %195 : vector<8x1xf32> to vector<8x32xf32>
      %197 = arith.mulf %192, %196 : vector<8x32xf32>
      %198 = vector.broadcast %178 : vector<1x32xf32> to vector<8x32xf32>
      %199 = arith.mulf %197, %198 : vector<8x32xf32>
      %200 = vector.broadcast %179 : vector<1x32xf32> to vector<8x32xf32>
      %201 = arith.addf %199, %200 : vector<8x32xf32>
      %202 = arith.addf %176, %201 : vector<8x32xf32>
      %203 = arith.negf %202 : vector<8x32xf32>
      %204 = math.exp %203 : vector<8x32xf32>
      %cst_94 = arith.constant 1.000000e+00 : f32
      %205 = vector.broadcast %cst_94 : f32 to vector<8x32xf32>
      %206 = arith.addf %205, %204 : vector<8x32xf32>
      %207 = arith.divf %205, %206 : vector<8x32xf32>
      %208 = vector.extract_strided_slice %85 {offsets = [0, 64], sizes = [8, 32], strides = [1, 1]} : vector<8x96xf32> to vector<8x32xf32>
      %209 = vector.extract_strided_slice %92 {offsets = [0, 64], sizes = [1, 32], strides = [1, 1]} : vector<1x96xf32> to vector<1x32xf32>
      %210 = vector.extract_strided_slice %93 {offsets = [0, 64], sizes = [1, 32], strides = [1, 1]} : vector<1x96xf32> to vector<1x32xf32>
      %cst_95 = arith.constant dense<0.000000e+00> : vector<8xf32>
      %211 = vector.multi_reduction <add>, %208, %cst_95 [1] : vector<8x32xf32> to vector<8xf32>
      %212 = vector.shape_cast %211 : vector<8xf32> to vector<8x1xf32>
      %cst_96 = arith.constant 3.200000e+01 : f32
      %213 = vector.broadcast %cst_96 : f32 to vector<8x1xf32>
      %214 = arith.divf %212, %213 : vector<8x1xf32>
      %215 = vector.broadcast %214 : vector<8x1xf32> to vector<8x32xf32>
      %216 = arith.subf %208, %215 : vector<8x32xf32>
      %217 = arith.mulf %216, %216 : vector<8x32xf32>
      %cst_97 = arith.constant dense<0.000000e+00> : vector<8xf32>
      %218 = vector.multi_reduction <add>, %217, %cst_97 [1] : vector<8x32xf32> to vector<8xf32>
      %219 = vector.shape_cast %218 : vector<8xf32> to vector<8x1xf32>
      %cst_98 = arith.constant 3.200000e+01 : f32
      %220 = vector.broadcast %cst_98 : f32 to vector<8x1xf32>
      %221 = arith.divf %219, %220 : vector<8x1xf32>
      %222 = vector.broadcast %214 : vector<8x1xf32> to vector<8x32xf32>
      %223 = arith.subf %208, %222 : vector<8x32xf32>
      %cst_99 = arith.constant 9.99999974E-6 : f32
      %224 = vector.broadcast %cst_99 : f32 to vector<8x1xf32>
      %225 = arith.addf %221, %224 : vector<8x1xf32>
      %226 = math.rsqrt %225 : vector<8x1xf32>
      %227 = vector.broadcast %226 : vector<8x1xf32> to vector<8x32xf32>
      %228 = arith.mulf %223, %227 : vector<8x32xf32>
      %229 = vector.broadcast %209 : vector<1x32xf32> to vector<8x32xf32>
      %230 = arith.mulf %228, %229 : vector<8x32xf32>
      %231 = vector.broadcast %210 : vector<1x32xf32> to vector<8x32xf32>
      %232 = arith.addf %230, %231 : vector<8x32xf32>
      %233 = vector.extract_strided_slice %91 {offsets = [0, 64], sizes = [8, 32], strides = [1, 1]} : vector<8x96xf32> to vector<8x32xf32>
      %234 = vector.extract_strided_slice %94 {offsets = [0, 64], sizes = [1, 32], strides = [1, 1]} : vector<1x96xf32> to vector<1x32xf32>
      %235 = vector.extract_strided_slice %95 {offsets = [0, 64], sizes = [1, 32], strides = [1, 1]} : vector<1x96xf32> to vector<1x32xf32>
      %cst_100 = arith.constant dense<0.000000e+00> : vector<8xf32>
      %236 = vector.multi_reduction <add>, %233, %cst_100 [1] : vector<8x32xf32> to vector<8xf32>
      %237 = vector.shape_cast %236 : vector<8xf32> to vector<8x1xf32>
      %cst_101 = arith.constant 3.200000e+01 : f32
      %238 = vector.broadcast %cst_101 : f32 to vector<8x1xf32>
      %239 = arith.divf %237, %238 : vector<8x1xf32>
      %240 = vector.broadcast %239 : vector<8x1xf32> to vector<8x32xf32>
      %241 = arith.subf %233, %240 : vector<8x32xf32>
      %242 = arith.mulf %241, %241 : vector<8x32xf32>
      %cst_102 = arith.constant dense<0.000000e+00> : vector<8xf32>
      %243 = vector.multi_reduction <add>, %242, %cst_102 [1] : vector<8x32xf32> to vector<8xf32>
      %244 = vector.shape_cast %243 : vector<8xf32> to vector<8x1xf32>
      %cst_103 = arith.constant 3.200000e+01 : f32
      %245 = vector.broadcast %cst_103 : f32 to vector<8x1xf32>
      %246 = arith.divf %244, %245 : vector<8x1xf32>
      %247 = vector.broadcast %239 : vector<8x1xf32> to vector<8x32xf32>
      %248 = arith.subf %233, %247 : vector<8x32xf32>
      %cst_104 = arith.constant 9.99999974E-6 : f32
      %249 = vector.broadcast %cst_104 : f32 to vector<8x1xf32>
      %250 = arith.addf %246, %249 : vector<8x1xf32>
      %251 = math.rsqrt %250 : vector<8x1xf32>
      %252 = vector.broadcast %251 : vector<8x1xf32> to vector<8x32xf32>
      %253 = arith.mulf %248, %252 : vector<8x32xf32>
      %254 = vector.broadcast %234 : vector<1x32xf32> to vector<8x32xf32>
      %255 = arith.mulf %253, %254 : vector<8x32xf32>
      %256 = vector.broadcast %235 : vector<1x32xf32> to vector<8x32xf32>
      %257 = arith.addf %255, %256 : vector<8x32xf32>
      %258 = arith.mulf %151, %257 : vector<8x32xf32>
      %259 = arith.addf %232, %258 : vector<8x32xf32>
      %260 = math.tanh %259 : vector<8x32xf32>
      %cst_105 = arith.constant 1.000000e+00 : f32
      %261 = vector.broadcast %cst_105 : f32 to vector<8x32xf32>
      %262 = arith.subf %261, %207 : vector<8x32xf32>
      %263 = arith.mulf %262, %260 : vector<8x32xf32>
      %264 = arith.mulf %207, %43 : vector<8x32xf32>
      %265 = arith.addf %263, %264 : vector<8x32xf32>
      %c0_106 = arith.constant 0 : index
      %c0_107 = arith.constant 0 : index
      %c0_108 = arith.constant 0 : index
      %266 = vector.load %arg25[%c0_106, %c0_107, %c0_108] : memref<1x8x32xf32, #tpu.memory_space<vmem>>, vector<1x8x32xf32>
      %267 = vector.shape_cast %266 : vector<1x8x32xf32> to vector<8x32xf32>
      %268 = vector.shape_cast %265 : vector<8x32xf32> to vector<1x8x32xf32>
      tpu.vector_store %arg25[%c0_106, %c0_107, %c0_108], %268 {strides = array<i32>} : memref<1x8x32xf32, #tpu.memory_space<vmem>>, vector<1x8x32xf32>,
      %269 = arith.truncf %265 : vector<8x32xf32> to vector<8x32xbf16>
      %c0_109 = arith.constant 0 : index
      %c0_110 = arith.constant 0 : index
      %270 = vector.load %arg29[%c0_109, %c0_110] : memref<8x32xbf16, #tpu.memory_space<vmem>>, vector<8x32xbf16>
      tpu.vector_store %arg29[%c0_109, %c0_110], %269 {strides = array<i32>} : memref<8x32xbf16, #tpu.memory_space<vmem>>, vector<8x32xbf16>,
      %271 = arith.truncf %42 : vector<8x32xf32> to vector<8x32xbf16>
      %c0_111 = arith.constant 0 : index
      %c0_112 = arith.constant 0 : index
      %272 = vector.load %arg30[%c0_111, %c0_112] : memref<8x32xbf16, #tpu.memory_space<vmem>>, vector<8x32xbf16>
      tpu.vector_store %arg30[%c0_111, %c0_112], %271 {strides = array<i32>} : memref<8x32xbf16, #tpu.memory_space<vmem>>, vector<8x32xbf16>,
      %cst_113 = arith.constant 0xFF800000 : f32
      %273 = vector.broadcast %cst_113 : f32 to vector<8x1xf32>
      %c0_114 = arith.constant 0 : index
      %c0_115 = arith.constant 0 : index
      %274 = vector.load %arg31[%c0_114, %c0_115] : memref<8x1xf32, #tpu.memory_space<vmem>>, vector<8x1xf32>
      tpu.vector_store %arg31[%c0_114, %c0_115], %273 {strides = array<i32>} : memref<8x1xf32, #tpu.memory_space<vmem>>, vector<8x1xf32>,
      %cst_116 = arith.constant 0.000000e+00 : f32
      %275 = vector.broadcast %cst_116 : f32 to vector<8x1xf32>
      %c0_117 = arith.constant 0 : index
      %c0_118 = arith.constant 0 : index
      %276 = vector.load %arg32[%c0_117, %c0_118] : memref<8x1xf32, #tpu.memory_space<vmem>>, vector<8x1xf32>
      tpu.vector_store %arg32[%c0_117, %c0_118], %275 {strides = array<i32>} : memref<8x1xf32, #tpu.memory_space<vmem>>, vector<8x1xf32>,
    } else {
    }
    %c0 = arith.constant 0 : index
    %c0_1 = arith.constant 0 : index
    %3 = vector.load %arg19[%c0, %c0_1] : memref<32x512xi8, #tpu.memory_space<vmem>>, vector<32x512xi8>
    %4 = arith.sitofp %3 : vector<32x512xi8> to vector<32x512xbf16>
    %c0_2 = arith.constant 0 : index
    %c0_3 = arith.constant 0 : index
    %5 = vector.load %arg21[%c0_2, %c0_3] : memref<32x512xi8, #tpu.memory_space<vmem>>, vector<32x512xi8>
    %6 = arith.sitofp %5 : vector<32x512xi8> to vector<32x512xbf16>
    %c0_4 = arith.constant 0 : index
    %c0_5 = arith.constant 0 : index
    %7 = vector.load %arg29[%c0_4, %c0_5] : memref<8x32xbf16, #tpu.memory_space<vmem>>, vector<8x32xbf16>
    %cst = arith.constant dense<0.000000e+00> : vector<8x512xf32>
    %8 = tpu.matmul %7, %4, %cst {dimension_numbers = #tpu.dot_dimension_numbers<[1], [0], [0], [1], [0, 0, 1, 1], [], []>} : vector<8x32xbf16>, vector<32x512xbf16>, vector<8x512xf32> -> vector<8x512xf32>
    %c0_6 = arith.constant 0 : index
    %c0_7 = arith.constant 0 : index
    %9 = vector.load %arg20[%c0_6, %c0_7] : memref<1x512xf32, #tpu.memory_space<vmem>>, vector<1x512xf32>
    %10 = vector.broadcast %9 : vector<1x512xf32> to vector<8x512xf32>
    %11 = arith.mulf %8, %10 : vector<8x512xf32>
    %c0_8 = arith.constant 0 : index
    %c0_9 = arith.constant 0 : index
    %12 = vector.load %arg30[%c0_8, %c0_9] : memref<8x32xbf16, #tpu.memory_space<vmem>>, vector<8x32xbf16>
    %cst_10 = arith.constant dense<0.000000e+00> : vector<8x512xf32>
    %13 = tpu.matmul %12, %6, %cst_10 {dimension_numbers = #tpu.dot_dimension_numbers<[1], [0], [0], [1], [0, 0, 1, 1], [], []>} : vector<8x32xbf16>, vector<32x512xbf16>, vector<8x512xf32> -> vector<8x512xf32>
    %c0_11 = arith.constant 0 : index
    %c0_12 = arith.constant 0 : index
    %14 = vector.load %arg22[%c0_11, %c0_12] : memref<1x512xf32, #tpu.memory_space<vmem>>, vector<1x512xf32>
    %15 = vector.broadcast %14 : vector<1x512xf32> to vector<8x512xf32>
    %16 = arith.mulf %13, %15 : vector<8x512xf32>
    %17 = arith.addf %11, %16 : vector<8x512xf32>
    %c0_13 = arith.constant 0 : index
    %c0_14 = arith.constant 0 : index
    %18 = vector.load %arg23[%c0_13, %c0_14] : memref<1x512xf32, #tpu.memory_space<vmem>>, vector<1x512xf32>
    %19 = vector.broadcast %18 : vector<1x512xf32> to vector<8x512xf32>
    %20 = arith.addf %17, %19 : vector<8x512xf32>
    %c0_15 = arith.constant 0 : index
    %c0_16 = arith.constant 0 : index
    %21 = vector.load %arg24[%c0_15, %c0_16] : memref<8x512xf32, #tpu.memory_space<vmem>>, vector<8x512xf32>
    tpu.vector_store %arg24[%c0_15, %c0_16], %20 {strides = array<i32>} : memref<8x512xf32, #tpu.memory_space<vmem>>, vector<8x512xf32>,
    %c0_17 = arith.constant 0 : index
    %c0_18 = arith.constant 0 : index
    %22 = vector.load %arg31[%c0_17, %c0_18] : memref<8x1xf32, #tpu.memory_space<vmem>>, vector<8x1xf32>
    %cst_19 = arith.constant dense<0xFF800000> : vector<8xf32>
    %23 = vector.multi_reduction <maximumf>, %20, %cst_19 [1] : vector<8x512xf32> to vector<8xf32>
    %24 = vector.shape_cast %23 : vector<8xf32> to vector<8x1xf32>
    %25 = arith.maximumf %22, %24 : vector<8x1xf32>
    %c0_20 = arith.constant 0 : index
    %c0_21 = arith.constant 0 : index
    %26 = vector.load %arg32[%c0_20, %c0_21] : memref<8x1xf32, #tpu.memory_space<vmem>>, vector<8x1xf32>
    %27 = arith.subf %22, %25 : vector<8x1xf32>
    %28 = math.exp %27 : vector<8x1xf32>
    %29 = arith.mulf %26, %28 : vector<8x1xf32>
    %30 = vector.broadcast %25 : vector<8x1xf32> to vector<8x512xf32>
    %31 = arith.subf %20, %30 : vector<8x512xf32>
    %32 = math.exp %31 : vector<8x512xf32>
    %cst_22 = arith.constant dense<0.000000e+00> : vector<8xf32>
    %33 = vector.multi_reduction <add>, %32, %cst_22 [1] : vector<8x512xf32> to vector<8xf32>
    %34 = vector.shape_cast %33 : vector<8xf32> to vector<8x1xf32>
    %35 = arith.addf %29, %34 : vector<8x1xf32>
    %c0_23 = arith.constant 0 : index
    %c0_24 = arith.constant 0 : index
    %36 = vector.load %arg32[%c0_23, %c0_24] : memref<8x1xf32, #tpu.memory_space<vmem>>, vector<8x1xf32>
    tpu.vector_store %arg32[%c0_23, %c0_24], %35 {strides = array<i32>} : memref<8x1xf32, #tpu.memory_space<vmem>>, vector<8x1xf32>,
    %c0_25 = arith.constant 0 : index
    %c0_26 = arith.constant 0 : index
    %37 = vector.load %arg31[%c0_25, %c0_26] : memref<8x1xf32, #tpu.memory_space<vmem>>, vector<8x1xf32>
    tpu.vector_store %arg31[%c0_25, %c0_26], %25 {strides = array<i32>} : memref<8x1xf32, #tpu.memory_space<vmem>>, vector<8x1xf32>,
    %c1_i32 = arith.constant 1 : i32
    %38 = arith.cmpi eq, %arg1, %c1_i32 : i32
    %39 = arith.extui %38 : i1 to i32
    %c0_i32_27 = arith.constant 0 : i32
    %40 = arith.cmpi ne, %39, %c0_i32_27 : i32
    scf.if %40 {
      %c0_28 = arith.constant 0 : index
      %c0_29 = arith.constant 0 : index
      %41 = vector.load %arg31[%c0_28, %c0_29] : memref<8x1xf32, #tpu.memory_space<vmem>>, vector<8x1xf32>
      %42 = vector.shape_cast %41 : vector<8x1xf32> to vector<8x1xf32>
      %43 = vector.broadcast %42 : vector<8x1xf32> to vector<8x128xf32>
      %c0_30 = arith.constant 0 : index
      %c0_31 = arith.constant 0 : index
      %c0_32 = arith.constant 0 : index
      %44 = vector.load %arg27[%c0_30, %c0_31, %c0_32] : memref<1x8x128xf32, #tpu.memory_space<vmem>>, vector<1x8x128xf32>
      %45 = vector.shape_cast %44 : vector<1x8x128xf32> to vector<8x128xf32>
      %46 = vector.shape_cast %43 : vector<8x128xf32> to vector<1x8x128xf32>
      tpu.vector_store %arg27[%c0_30, %c0_31, %c0_32], %46 {strides = array<i32>} : memref<1x8x128xf32, #tpu.memory_space<vmem>>, vector<1x8x128xf32>,
      %c0_33 = arith.constant 0 : index
      %c0_34 = arith.constant 0 : index
      %47 = vector.load %arg32[%c0_33, %c0_34] : memref<8x1xf32, #tpu.memory_space<vmem>>, vector<8x1xf32>
      %48 = vector.shape_cast %47 : vector<8x1xf32> to vector<8x1xf32>
      %49 = vector.broadcast %48 : vector<8x1xf32> to vector<8x128xf32>
      %c0_35 = arith.constant 0 : index
      %c0_36 = arith.constant 0 : index
      %c0_37 = arith.constant 0 : index
      %50 = vector.load %arg28[%c0_35, %c0_36, %c0_37] : memref<1x8x128xf32, #tpu.memory_space<vmem>>, vector<1x8x128xf32>
      %51 = vector.shape_cast %50 : vector<1x8x128xf32> to vector<8x128xf32>
      %52 = vector.shape_cast %49 : vector<8x128xf32> to vector<1x8x128xf32>
      tpu.vector_store %arg28[%c0_35, %c0_36, %c0_37], %52 {strides = array<i32>} : memref<1x8x128xf32, #tpu.memory_space<vmem>>, vector<1x8x128xf32>,
    } else {
    }
    return
  }
  func.func @transform_0(%arg0: i32, %arg1: i32) -> (i32, i32) {
    %c0_i32 = arith.constant 0 : i32
    %c0_i32_0 = arith.constant 0 : i32
    %c0_i32_1 = arith.constant 0 : i32
    return %c0_i32, %c0_i32_0 : i32, i32
  }
  func.func @transform_1(%arg0: i32, %arg1: i32) -> (i32, i32) {
    %c0_i32 = arith.constant 0 : i32
    %c0_i32_0 = arith.constant 0 : i32
    %c0_i32_1 = arith.constant 0 : i32
    return %c0_i32, %c0_i32_0 : i32, i32
  }
  func.func @transform_2(%arg0: i32, %arg1: i32) -> (i32, i32) {
    %c0_i32 = arith.constant 0 : i32
    %c0_i32_0 = arith.constant 0 : i32
    %c0_i32_1 = arith.constant 0 : i32
    return %c0_i32, %c0_i32_0 : i32, i32
  }
  func.func @transform_3(%arg0: i32, %arg1: i32) -> (i32, i32) {
    %c0_i32 = arith.constant 0 : i32
    %c0_i32_0 = arith.constant 0 : i32
    %c0_i32_1 = arith.constant 0 : i32
    return %c0_i32, %c0_i32_0 : i32, i32
  }
  func.func @transform_4(%arg0: i32, %arg1: i32) -> (i32, i32) {
    %c0_i32 = arith.constant 0 : i32
    %c0_i32_0 = arith.constant 0 : i32
    %c0_i32_1 = arith.constant 0 : i32
    return %c0_i32, %c0_i32_0 : i32, i32
  }
  func.func @transform_5(%arg0: i32, %arg1: i32) -> (i32, i32) {
    %c0_i32 = arith.constant 0 : i32
    %c0_i32_0 = arith.constant 0 : i32
    %c0_i32_1 = arith.constant 0 : i32
    return %c0_i32, %c0_i32_0 : i32, i32
  }
  func.func @transform_6(%arg0: i32, %arg1: i32) -> (i32, i32) {
    %c0_i32 = arith.constant 0 : i32
    %c0_i32_0 = arith.constant 0 : i32
    %c0_i32_1 = arith.constant 0 : i32
    return %c0_i32, %c0_i32_0 : i32, i32
  }
  func.func @transform_7(%arg0: i32, %arg1: i32) -> (i32, i32) {
    %c0_i32 = arith.constant 0 : i32
    %c0_i32_0 = arith.constant 0 : i32
    %c0_i32_1 = arith.constant 0 : i32
    return %c0_i32, %c0_i32_0 : i32, i32
  }
  func.func @transform_8(%arg0: i32, %arg1: i32) -> (i32, i32) {
    %c0_i32 = arith.constant 0 : i32
    %c0_i32_0 = arith.constant 0 : i32
    %c0_i32_1 = arith.constant 0 : i32
    return %c0_i32, %c0_i32_0 : i32, i32
  }
  func.func @transform_9(%arg0: i32, %arg1: i32) -> (i32, i32) {
    %c0_i32 = arith.constant 0 : i32
    %c0_i32_0 = arith.constant 0 : i32
    %c0_i32_1 = arith.constant 0 : i32
    return %c0_i32, %c0_i32_0 : i32, i32
  }
  func.func @transform_10(%arg0: i32, %arg1: i32) -> (i32, i32) {
    %c0_i32 = arith.constant 0 : i32
    %c0_i32_0 = arith.constant 0 : i32
    %c0_i32_1 = arith.constant 0 : i32
    return %c0_i32, %c0_i32_0 : i32, i32
  }
  func.func @transform_11(%arg0: i32, %arg1: i32) -> (i32, i32) {
    %c0_i32 = arith.constant 0 : i32
    %c0_i32_0 = arith.constant 0 : i32
    %c0_i32_1 = arith.constant 0 : i32
    return %c0_i32, %c0_i32_0 : i32, i32
  }
  func.func @transform_12(%arg0: i32, %arg1: i32) -> (i32, i32) {
    %c0_i32 = arith.constant 0 : i32
    %c0_i32_0 = arith.constant 0 : i32
    %c0_i32_1 = arith.constant 0 : i32
    return %c0_i32, %c0_i32_0 : i32, i32
  }
  func.func @transform_13(%arg0: i32, %arg1: i32) -> (i32, i32) {
    %c0_i32 = arith.constant 0 : i32
    %c0_i32_0 = arith.constant 0 : i32
    %c0_i32_1 = arith.constant 0 : i32
    return %c0_i32, %c0_i32_0 : i32, i32
  }
  func.func @transform_14(%arg0: i32, %arg1: i32) -> (i32, i32) {
    %c0_i32 = arith.constant 0 : i32
    %c0_i32_0 = arith.constant 0 : i32
    %c0_i32_1 = arith.constant 0 : i32
    return %c0_i32, %c0_i32_0 : i32, i32
  }
  func.func @transform_15(%arg0: i32, %arg1: i32) -> (i32, i32) {
    %c0_i32 = arith.constant 0 : i32
    %c0_i32_0 = arith.constant 0 : i32
    %c0_i32_1 = arith.constant 0 : i32
    return %c0_i32, %c0_i32_0 : i32, i32
  }
  func.func @transform_16(%arg0: i32, %arg1: i32) -> (i32, i32) {
    %c0_i32 = arith.constant 0 : i32
    %c0_i32_0 = arith.constant 0 : i32
    %c0_i32_1 = arith.constant 0 : i32
    return %c0_i32, %c0_i32_0 : i32, i32
  }
  func.func @transform_17(%arg0: i32, %arg1: i32) -> (i32, i32) {
    %c2_i32 = arith.constant 2 : i32
    %0 = arith.muli %arg0, %c2_i32 : i32
    %1 = arith.addi %0, %arg1 : i32
    %c0_i32 = arith.constant 0 : i32
    %c0_i32_0 = arith.constant 0 : i32
    return %c0_i32, %1 : i32, i32
  }
  func.func @transform_18(%arg0: i32, %arg1: i32) -> (i32, i32) {
    %c2_i32 = arith.constant 2 : i32
    %0 = arith.muli %arg0, %c2_i32 : i32
    %1 = arith.addi %0, %arg1 : i32
    %c0_i32 = arith.constant 0 : i32
    %c0_i32_0 = arith.constant 0 : i32
    return %c0_i32, %1 : i32, i32
  }
  func.func @transform_19(%arg0: i32, %arg1: i32) -> (i32, i32) {
    %c2_i32 = arith.constant 2 : i32
    %0 = arith.muli %arg0, %c2_i32 : i32
    %1 = arith.addi %0, %arg1 : i32
    %c0_i32 = arith.constant 0 : i32
    %c0_i32_0 = arith.constant 0 : i32
    return %c0_i32, %1 : i32, i32
  }
  func.func @transform_20(%arg0: i32, %arg1: i32) -> (i32, i32) {
    %c2_i32 = arith.constant 2 : i32
    %0 = arith.muli %arg0, %c2_i32 : i32
    %1 = arith.addi %0, %arg1 : i32
    %c0_i32 = arith.constant 0 : i32
    %c0_i32_0 = arith.constant 0 : i32
    return %c0_i32, %1 : i32, i32
  }
  func.func @transform_21(%arg0: i32, %arg1: i32) -> (i32, i32) {
    %c2_i32 = arith.constant 2 : i32
    %0 = arith.muli %arg0, %c2_i32 : i32
    %1 = arith.addi %0, %arg1 : i32
    %c0_i32 = arith.constant 0 : i32
    %c0_i32_0 = arith.constant 0 : i32
    return %c0_i32, %1 : i32, i32
  }
  func.func @transform_22(%arg0: i32, %arg1: i32) -> (i32, i32) {
    %c2_i32 = arith.constant 2 : i32
    %0 = arith.muli %arg0, %c2_i32 : i32
    %1 = arith.addi %0, %arg1 : i32
    %c0_i32 = arith.constant 0 : i32
    %c0_i32_0 = arith.constant 0 : i32
    return %c0_i32, %1 : i32, i32
  }
  func.func @transform_23(%arg0: i32, %arg1: i32) -> (i32, i32, i32) {
    %c0_i32 = arith.constant 0 : i32
    %c0_i32_0 = arith.constant 0 : i32
    %c0_i32_1 = arith.constant 0 : i32
    return %arg0, %c0_i32, %c0_i32_0 : i32, i32, i32
  }
  func.func @transform_24(%arg0: i32, %arg1: i32) -> (i32, i32, i32) {
    %c0_i32 = arith.constant 0 : i32
    %c0_i32_0 = arith.constant 0 : i32
    %c0_i32_1 = arith.constant 0 : i32
    return %arg0, %c0_i32, %c0_i32_0 : i32, i32, i32
  }
  func.func @transform_25(%arg0: i32, %arg1: i32) -> (i32, i32, i32) {
    %c0_i32 = arith.constant 0 : i32
    %c0_i32_0 = arith.constant 0 : i32
    %c0_i32_1 = arith.constant 0 : i32
    return %arg0, %c0_i32, %c0_i32_0 : i32, i32, i32
  }
  func.func @transform_26(%arg0: i32, %arg1: i32) -> (i32, i32, i32) {
    %c0_i32 = arith.constant 0 : i32
    %c0_i32_0 = arith.constant 0 : i32
    %c0_i32_1 = arith.constant 0 : i32
    return %arg0, %c0_i32, %c0_i32_0 : i32, i32, i32
  }
}

</mosaic_0001>

<llo_original>
// kernel: tpu_custom_call.1
$region0: #{tpu_custom_call.1}
  #allocation0 [shape = 'u32[]', space=smem, size = 0x4, offset = 0x4, fixed_abs, tag = 'smem constant byte address 0x4 - core index']
  #allocation1 [shape = 'u32[144,128]{1,0:T(1,128)}', space=vmem, size = 0x12000, scoped, tag = 'internal scratch']
  #allocation2 [shape = 'bf16[8,32]{1,0:T(8,128)(2,1)}', space=vmem, size = 0x800, scoped, tag = 'scratch operand']
  #allocation3 [shape = 'bf16[8,32]{1,0:T(8,128)(2,1)}', space=vmem, size = 0x800, scoped, tag = 'scratch operand']
  #allocation4 [shape = 'f32[8,1]{1,0:T(8,128)}', space=vmem, size = 0x1000, scoped, tag = 'scratch operand']
  #allocation5 [shape = 'f32[8,1]{1,0:T(8,128)}', space=vmem, size = 0x1000, scoped, tag = 'scratch operand']
  #allocation6 [shape = 'f32[1,1]{1,0:T(1,128)S(1)}', space=vmem, size = 0x200, scoped, tag = 'scoped memory for tpu_custom_call.1']
  %s0 = inlined_call_operand.hbm [shape: f32[8,32], index: 0, kind: input, shape index: {}]
  %s1 = inlined_call_operand.hbm [shape: f32[8,32], index: 1, kind: input, shape index: {}]
  %s2 = inlined_call_operand.hbm [shape: f32[8,32], index: 2, kind: input, shape index: {}]
  %s3 = inlined_call_operand.hbm [shape: bf16[32,32], index: 3, kind: input, shape index: {}]
  %s4 = inlined_call_operand.hbm [shape: bf16[32,32], index: 4, kind: input, shape index: {}]
  %s5 = inlined_call_operand.hbm [shape: f32[1,32], index: 5, kind: input, shape index: {}]
  %s6 = inlined_call_operand.hbm [shape: f32[1,32], index: 6, kind: input, shape index: {}]
  %s7 = inlined_call_operand.hbm [shape: f32[1,32], index: 7, kind: input, shape index: {}]
  %s8 = inlined_call_operand.<no memory space> [shape: f32[1,1], index: 8, kind: input, shape index: {}]
  %s9 = inlined_call_operand.vmem [shape: bf16[32,96], index: 9, kind: input, shape index: {}]
  %s10 = inlined_call_operand.vmem [shape: f32[1,96], index: 10, kind: input, shape index: {}]
  %s11 = inlined_call_operand.hbm [shape: bf16[32,96], index: 11, kind: input, shape index: {}]
  %s12 = inlined_call_operand.hbm [shape: f32[1,96], index: 12, kind: input, shape index: {}]
  %s13 = inlined_call_operand.hbm [shape: f32[1,96], index: 13, kind: input, shape index: {}]
  %s14 = inlined_call_operand.hbm [shape: f32[1,96], index: 14, kind: input, shape index: {}]
  %s15 = inlined_call_operand.hbm [shape: f32[1,96], index: 15, kind: input, shape index: {}]
  %s16 = inlined_call_operand.hbm [shape: f32[1,96], index: 16, kind: input, shape index: {}]
  %s17 = inlined_call_operand.hbm [shape: s8[32,2048], index: 17, kind: input, shape index: {}]
  %s18 = inlined_call_operand.vmem [shape: f32[1,2048], index: 18, kind: input, shape index: {}]
  %s19 = inlined_call_operand.hbm [shape: s8[32,2048], index: 19, kind: input, shape index: {}]
  %s20 = inlined_call_operand.hbm [shape: f32[1,2048], index: 20, kind: input, shape index: {}]
  %s21 = inlined_call_operand.hbm [shape: f32[1,2048], index: 21, kind: input, shape index: {}]
  %s22 = inlined_call_operand.hbm [shape: f32[8,2048], index: 22, kind: output, shape index: {0}]
  %s23 = inlined_call_operand.hbm [shape: f32[2,8,32], index: 23, kind: output, shape index: {1}]
  %s24 = inlined_call_operand.hbm [shape: f32[2,8,128], index: 24, kind: output, shape index: {2}]
  %s25 = inlined_call_operand.hbm [shape: f32[2,8,128], index: 25, kind: output, shape index: {3}]
  %s26 = inlined_call_operand.hbm [shape: f32[2,8,128], index: 26, kind: output, shape index: {4}]
  %27 = xla_tuple %s22, %s23, %s24, %s25, %s26
  %s28 = sld [smem:[#allocation0]]
  $region233: #{tpu_custom_call.1} parent=0
    _
  %s30 = ssub.s32 1, %s28
  %s31 = scalar_select 0, %s30, %s28
  %v32 = vstv %s8
  %33 = vst [vmem:[#allocation6] sm:$0x1] %v32
  $region1: #{tpu_custom_call.1} parent=0
    #allocation7 [shape = 'u8[4096]{0}', space=vmem, size = 0x1000, scoped, tag = 'input window, operand 0, single buffered']
    #allocation8 [shape = 's32[2]{0}', space=sflag, size = 0x8, scoped, tag = 'scoped memory for tpu_custom_call.1']
    #allocation9 [shape = 's32[2]{0}', space=sflag, size = 0x8, scoped, tag = 'scoped memory for tpu_custom_call.1']
    #allocation10 [shape = 'u8[4096]{0}', space=vmem, size = 0x1000, scoped, tag = 'input window, operand 1, single buffered']
    #allocation11 [shape = 's32[1]{0}', space=sflag, size = 0x4, scoped, tag = 'scoped memory for tpu_custom_call.1']
    #allocation12 [shape = 'u8[4096]{0}', space=vmem, size = 0x1000, scoped, tag = 'input window, operand 2, single buffered']
    #allocation13 [shape = 'u8[8192]{0}', space=vmem, size = 0x2000, scoped, tag = 'input window, operand 3, single buffered']
    #allocation14 [shape = 's32[1]{0}', space=sflag, size = 0x4, scoped, tag = 'scoped memory for tpu_custom_call.1']
    #allocation15 [shape = 'u8[8192]{0}', space=vmem, size = 0x2000, scoped, tag = 'input window, operand 4, single buffered']
    #allocation16 [shape = 'u8[512]{0}', space=vmem, size = 0x400, scoped, tag = 'input window, operand 5, single buffered']
    #allocation17 [shape = 's32[1]{0}', space=sflag, size = 0x4, scoped, tag = 'scoped memory for tpu_custom_call.1']
    #allocation18 [shape = 'u8[512]{0}', space=vmem, size = 0x400, scoped, tag = 'input window, operand 6, single buffered']
    #allocation19 [shape = 'u8[512]{0}', space=vmem, size = 0x400, scoped, tag = 'input window, operand 7, single buffered']
    #allocation20 [shape = 's32[1]{0}', space=sflag, size = 0x4, scoped, tag = 'scoped memory for tpu_custom_call.1']
    #allocation21 [shape = 'u8[8192]{0}', space=vmem, size = 0x2000, scoped, tag = 'input window, operand 11, single buffered']
    #allocation22 [shape = 'u8[512]{0}', space=vmem, size = 0x400, scoped, tag = 'input window, operand 12, single buffered']
    #allocation23 [shape = 's32[1]{0}', space=sflag, size = 0x4, scoped, tag = 'scoped memory for tpu_custom_call.1']
    #allocation24 [shape = 'u8[512]{0}', space=vmem, size = 0x400, scoped, tag = 'input window, operand 13, single buffered']
    #allocation25 [shape = 'u8[512]{0}', space=vmem, size = 0x400, scoped, tag = 'input window, operand 14, single buffered']
    #allocation26 [shape = 's32[1]{0}', space=sflag, size = 0x4, scoped, tag = 'scoped memory for tpu_custom_call.1']
    #allocation27 [shape = 'u8[512]{0}', space=vmem, size = 0x400, scoped, tag = 'input window, operand 15, single buffered']
    #allocation28 [shape = 'u8[512]{0}', space=vmem, size = 0x400, scoped, tag = 'input window, operand 16, single buffered']
    #allocation29 [shape = 's32[1]{0}', space=sflag, size = 0x4, scoped, tag = 'scoped memory for tpu_custom_call.1']
    #allocation30 [shape = 'u8[32768]{0}', space=vmem, size = 0x8000, scoped, tag = 'input window, operand 17']
    #allocation31 [shape = 'u8[32768]{0}', space=vmem, size = 0x8000, scoped, tag = 'input window, operand 19']
    #allocation32 [shape = 'u8[4096]{0}', space=vmem, size = 0x1000, scoped, tag = 'input window, operand 20']
    #allocation33 [shape = 'u8[4096]{0}', space=vmem, size = 0x1000, scoped, tag = 'input window, operand 21']
    #allocation34 [shape = 'u8[32768]{0}', space=vmem, size = 0x8000, scoped, tag = 'output window, operand 0']
    #allocation35 [shape = 'u8[8192]{0}', space=vmem, size = 0x2000, scoped, tag = 'output window, operand 1']
    #allocation36 [shape = 's32[2]{0}', space=sflag, size = 0x8, scoped, tag = 'scoped memory for tpu_custom_call.1']
    #allocation37 [shape = 'u8[8192]{0}', space=vmem, size = 0x2000, scoped, tag = 'output window, operand 2']
    #allocation38 [shape = 'u8[8192]{0}', space=vmem, size = 0x2000, scoped, tag = 'output window, operand 3']
    #allocation39 [shape = 's32[2]{0}', space=sflag, size = 0x8, scoped, tag = 'scoped memory for tpu_custom_call.1']
    #allocation40 [shape = 'u8[8192]{0}', space=vmem, size = 0x2000, scoped, tag = 'output window, operand 4']
    %34 = vsyncpa [#allocation8], 0
    %35 = vsyncpa [#allocation11], 0
    %36 = vsyncpa [#allocation14], 0
    %37 = vsyncpa [#allocation17], 0
    %38 = vsyncpa [#allocation20], 0
    %39 = vsyncpa [#allocation23], 0
    %40 = vsyncpa [#allocation26], 0
    %41 = vsyncpa [#allocation29], 0
    %42 = vsyncpa [#allocation9], 0
    %s43 = scalar_lea.sflag [#allocation9], 1
    %44 = vsyncpa %s43, 0
    %45 = vsyncpa [#allocation36], 0
    %s46 = scalar_lea.sflag [#allocation36], 1
    %47 = vsyncpa %s46, 0
    %48 = vsyncpa [#allocation39], 0
    %s49 = scalar_lea.sflag [#allocation39], 1
    %50 = vsyncpa %s49, 0
    loop: start=0, step=1, limit=6
    $region2: #{tpu_custom_call.1} parent=1 // loop_pre_header
      _
    $region3: #{tpu_custom_call.1} parent=1 // loop_header
      %s52 = sphi 0, %s56
      %p53 = scmp.ge.s32.totalorder %s52, 6
      %s59 = sphi 0, %s71
      %s60 = sphi 0, %s67
      %s61 = sphi 0, %s59
      %s62 = sphi 0, %s60
      %s63 = sphi 0, %s61
      %s64 = sphi 0, %s62
      %s72 = sphi 0, %s72
      %s74 = sphi 0, %s72
      %s75 = sphi 0, %s74
      %s89 = sphi 0, %s75
      %s93 = sphi 0, %s93
      %s95 = sphi 0, %s93
      %s96 = sphi 0, %s95
      %s110 = sphi 0, %s96
      %s114 = sphi 0, %s114
      %s116 = sphi 0, %s114
      %s117 = sphi 0, %s116
      %s131 = sphi 0, %s117
      %s135 = sphi 0, %s135
      %s137 = sphi 0, %s135
      %s138 = sphi 0, %s137
      %s152 = sphi 0, %s138
      %s156 = sphi 0, %s156
      %s158 = sphi 0, %s156
      %s159 = sphi 0, %s158
      %s173 = sphi 0, %s159
      %s177 = sphi 0, %s177
      %s179 = sphi 0, %s177
      %s180 = sphi 0, %s179
      %s194 = sphi 0, %s180
      %s198 = sphi 0, %s198
      %s200 = sphi 0, %s198
      %s201 = sphi 0, %s200
      %s215 = sphi 0, %s201
      %s219 = sphi 0, %s219
      %s221 = sphi 0, %s219
      %s222 = sphi 0, %s221
      %s236 = sphi 0, %s222
      %s240 = sphi 0, %s240
      %s242 = sphi 0, %s240
      %s243 = sphi 0, %s242
      %s257 = sphi 0, %s243
      %s261 = sphi 0, %s261
      %s263 = sphi 0, %s261
      %s264 = sphi 0, %s263
      %s278 = sphi 0, %s264
      %s282 = sphi 0, %s282
      %s284 = sphi 0, %s282
      %s285 = sphi 0, %s284
      %s299 = sphi 0, %s285
      %s303 = sphi 0, %s303
      %s305 = sphi 0, %s303
      %s306 = sphi 0, %s305
      %s320 = sphi 0, %s306
      %s324 = sphi 0, %s324
      %s326 = sphi 0, %s324
      %s327 = sphi 0, %s326
      %s341 = sphi 0, %s327
      %s345 = sphi 0, %s345
      %s347 = sphi 0, %s345
      %s348 = sphi 0, %s347
      %s362 = sphi 0, %s348
      %s366 = sphi 0, %s366
      %s368 = sphi 0, %s366
      %s369 = sphi 0, %s368
      %s383 = sphi 0, %s369
      %s387 = sphi 0, %s387
      %s389 = sphi 0, %s387
      %s390 = sphi 0, %s389
      %s404 = sphi 0, %s390
      %s408 = sphi 0, %s408
      %s410 = sphi 0, %s408
      %s411 = sphi 0, %s410
      %s425 = sphi 0, %s411
      %s435 = sphi 0, %s437
      %s438 = sphi 0, %s435
      %s439 = sphi 0, %s438
      %s455 = sphi 0, %s439
      %s465 = sphi 0, %s467
      %s468 = sphi 0, %s465
      %s469 = sphi 0, %s468
      %s485 = sphi 0, %s469
      %s495 = sphi 0, %s497
      %s498 = sphi 0, %s495
      %s499 = sphi 0, %s498
      %s515 = sphi 0, %s499
      %s525 = sphi 0, %s527
      %s528 = sphi 0, %s525
      %s529 = sphi 0, %s528
      %s545 = sphi 0, %s529
      %s555 = sphi 0, %s557
      %s558 = sphi 0, %s555
      %s559 = sphi 0, %s558
      %s575 = sphi 0, %s559
      %s585 = sphi 0, %s587
      %s588 = sphi 0, %s585
      %s589 = sphi 0, %s588
      %s605 = sphi 0, %s589
      %s611 = sphi 0, %s613
      %s614 = sphi 0, %s611
      %s615 = sphi 0, %s614
      %s631 = sphi 0, %s615
      %s637 = sphi 0, %s639
      %s640 = sphi 0, %s637
      %s641 = sphi 0, %s640
      %s657 = sphi 0, %s641
      %s663 = sphi 0, %s665
      %s666 = sphi 0, %s663
      %s667 = sphi 0, %s666
      %s683 = sphi 0, %s667
      %s689 = sphi 0, %s691
      %s692 = sphi 0, %s689
      %s693 = sphi 0, %s692
      %s709 = sphi 0, %s693
    $region4: #{tpu_custom_call.1} parent=1 // loop_header_branch
      %55 = sbr.rel (%p53) target = $region8
    $region5: #{tpu_custom_call.1} parent=1 // loop_body
      %s57 = ssub.s32 %s52, 1
      %s58 = ssub.s32 %s52, 2
      %s65 = sadd.s32 1, %s60
      %p66 = scmp.ge.s32.totalorder %s65, 2
      %s67 = scalar_select %p66, 0, %s65
      %s68 = sadd.s32 1, %s59
      %s69 = scalar_select %p66, %s68, %s59
      %p70 = scmp.ge.s32.totalorder %s69, 2
      %s71 = scalar_select %p70, 0, %s69
      %s73 = sadd.s32 %s72, 1
      %p76 = scmp.eq.s32.totalorder %s52, 3
      %p77 = scmp.ne.s32.totalorder %s72, %s74
      %p78 = scmp.eq.s32.totalorder %s52, 0
      %p79 = por %p77, %p78
      %p80 = scmp.ne.s32.totalorder %s72, %s74
      %p81 = scmp.eq.s32.totalorder %s57, 3
      %p82 = por %p80, %p81
      %p83 = scmp.ne.s32.totalorder %s74, %s75
      %p84 = scmp.eq.s32.totalorder %s57, 0
      %p85 = por %p83, %p84
      %p86 = scmp.ne.s32.totalorder %s74, %s75
      %p87 = scmp.eq.s32.totalorder %s58, 3
      %p88 = por %p86, %p87
      %p90 = scmp.ne.s32.totalorder %s75, %s89
      %p91 = scmp.eq.s32.totalorder %s58, 0
      %p92 = por %p90, %p91
      %s94 = sadd.s32 %s93, 1
      %p97 = scmp.eq.s32.totalorder %s52, 3
      %p98 = scmp.ne.s32.totalorder %s93, %s95
      %p99 = scmp.eq.s32.totalorder %s52, 0
      %p100 = por %p98, %p99
      %p101 = scmp.ne.s32.totalorder %s93, %s95
      %p102 = scmp.eq.s32.totalorder %s57, 3
      %p103 = por %p101, %p102
      %p104 = scmp.ne.s32.totalorder %s95, %s96
      %p105 = scmp.eq.s32.totalorder %s57, 0
      %p106 = por %p104, %p105
      %p107 = scmp.ne.s32.totalorder %s95, %s96
      %p108 = scmp.eq.s32.totalorder %s58, 3
      %p109 = por %p107, %p108
      %p111 = scmp.ne.s32.totalorder %s96, %s110
      %p112 = scmp.eq.s32.totalorder %s58, 0
      %p113 = por %p111, %p112
      %s115 = sadd.s32 %s114, 1
      %p118 = scmp.eq.s32.totalorder %s52, 3
      %p119 = scmp.ne.s32.totalorder %s114, %s116
      %p120 = scmp.eq.s32.totalorder %s52, 0
      %p121 = por %p119, %p120
      %p122 = scmp.ne.s32.totalorder %s114, %s116
      %p123 = scmp.eq.s32.totalorder %s57, 3
      %p124 = por %p122, %p123
      %p125 = scmp.ne.s32.totalorder %s116, %s117
      %p126 = scmp.eq.s32.totalorder %s57, 0
      %p127 = por %p125, %p126
      %p128 = scmp.ne.s32.totalorder %s116, %s117
      %p129 = scmp.eq.s32.totalorder %s58, 3
      %p130 = por %p128, %p129
      %p132 = scmp.ne.s32.totalorder %s117, %s131
      %p133 = scmp.eq.s32.totalorder %s58, 0
      %p134 = por %p132, %p133
      %s136 = sadd.s32 %s135, 1
      %p139 = scmp.eq.s32.totalorder %s52, 3
      %p140 = scmp.ne.s32.totalorder %s135, %s137
      %p141 = scmp.eq.s32.totalorder %s52, 0
      %p142 = por %p140, %p141
      %p143 = scmp.ne.s32.totalorder %s135, %s137
      %p144 = scmp.eq.s32.totalorder %s57, 3
      %p145 = por %p143, %p144
      %p146 = scmp.ne.s32.totalorder %s137, %s138
      %p147 = scmp.eq.s32.totalorder %s57, 0
      %p148 = por %p146, %p147
      %p149 = scmp.ne.s32.totalorder %s137, %s138
      %p150 = scmp.eq.s32.totalorder %s58, 3
      %p151 = por %p149, %p150
      %p153 = scmp.ne.s32.totalorder %s138, %s152
      %p154 = scmp.eq.s32.totalorder %s58, 0
      %p155 = por %p153, %p154
      %s157 = sadd.s32 %s156, 1
      %p160 = scmp.eq.s32.totalorder %s52, 3
      %p161 = scmp.ne.s32.totalorder %s156, %s158
      %p162 = scmp.eq.s32.totalorder %s52, 0
      %p163 = por %p161, %p162
      %p164 = scmp.ne.s32.totalorder %s156, %s158
      %p165 = scmp.eq.s32.totalorder %s57, 3
      %p166 = por %p164, %p165
      %p167 = scmp.ne.s32.totalorder %s158, %s159
      %p168 = scmp.eq.s32.totalorder %s57, 0
      %p169 = por %p167, %p168
      %p170 = scmp.ne.s32.totalorder %s158, %s159
      %p171 = scmp.eq.s32.totalorder %s58, 3
      %p172 = por %p170, %p171
      %p174 = scmp.ne.s32.totalorder %s159, %s173
      %p175 = scmp.eq.s32.totalorder %s58, 0
      %p176 = por %p174, %p175
      %s178 = sadd.s32 %s177, 1
      %p181 = scmp.eq.s32.totalorder %s52, 3
      %p182 = scmp.ne.s32.totalorder %s177, %s179
      %p183 = scmp.eq.s32.totalorder %s52, 0
      %p184 = por %p182, %p183
      %p185 = scmp.ne.s32.totalorder %s177, %s179
      %p186 = scmp.eq.s32.totalorder %s57, 3
      %p187 = por %p185, %p186
      %p188 = scmp.ne.s32.totalorder %s179, %s180
      %p189 = scmp.eq.s32.totalorder %s57, 0
      %p190 = por %p188, %p189
      %p191 = scmp.ne.s32.totalorder %s179, %s180
      %p192 = scmp.eq.s32.totalorder %s58, 3
      %p193 = por %p191, %p192
      %p195 = scmp.ne.s32.totalorder %s180, %s194
      %p196 = scmp.eq.s32.totalorder %s58, 0
      %p197 = por %p195, %p196
      %s199 = sadd.s32 %s198, 1
      %p202 = scmp.eq.s32.totalorder %s52, 3
      %p203 = scmp.ne.s32.totalorder %s198, %s200
      %p204 = scmp.eq.s32.totalorder %s52, 0
      %p205 = por %p203, %p204
      %p206 = scmp.ne.s32.totalorder %s198, %s200
      %p207 = scmp.eq.s32.totalorder %s57, 3
      %p208 = por %p206, %p207
      %p209 = scmp.ne.s32.totalorder %s200, %s201
      %p210 = scmp.eq.s32.totalorder %s57, 0
      %p211 = por %p209, %p210
      %p212 = scmp.ne.s32.totalorder %s200, %s201
      %p213 = scmp.eq.s32.totalorder %s58, 3
      %p214 = por %p212, %p213
      %p216 = scmp.ne.s32.totalorder %s201, %s215
      %p217 = scmp.eq.s32.totalorder %s58, 0
      %p218 = por %p216, %p217
      %s220 = sadd.s32 %s219, 1
      %p223 = scmp.eq.s32.totalorder %s52, 3
      %p224 = scmp.ne.s32.totalorder %s219, %s221
      %p225 = scmp.eq.s32.totalorder %s52, 0
      %p226 = por %p224, %p225
      %p227 = scmp.ne.s32.totalorder %s219, %s221
      %p228 = scmp.eq.s32.totalorder %s57, 3
      %p229 = por %p227, %p228
      %p230 = scmp.ne.s32.totalorder %s221, %s222
      %p231 = scmp.eq.s32.totalorder %s57, 0
      %p232 = por %p230, %p231
      %p233 = scmp.ne.s32.totalorder %s221, %s222
      %p234 = scmp.eq.s32.totalorder %s58, 3
      %p235 = por %p233, %p234
      %p237 = scmp.ne.s32.totalorder %s222, %s236
      %p238 = scmp.eq.s32.totalorder %s58, 0
      %p239 = por %p237, %p238
      %s241 = sadd.s32 %s240, 1
      %p244 = scmp.eq.s32.totalorder %s52, 3
      %p245 = scmp.ne.s32.totalorder %s240, %s242
      %p246 = scmp.eq.s32.totalorder %s52, 0
      %p247 = por %p245, %p246
      %p248 = scmp.ne.s32.totalorder %s240, %s242
      %p249 = scmp.eq.s32.totalorder %s57, 3
      %p250 = por %p248, %p249
      %p251 = scmp.ne.s32.totalorder %s242, %s243
      %p252 = scmp.eq.s32.totalorder %s57, 0
      %p253 = por %p251, %p252
      %p254 = scmp.ne.s32.totalorder %s242, %s243
      %p255 = scmp.eq.s32.totalorder %s58, 3
      %p256 = por %p254, %p255
      %p258 = scmp.ne.s32.totalorder %s243, %s257
      %p259 = scmp.eq.s32.totalorder %s58, 0
      %p260 = por %p258, %p259
      %s262 = sadd.s32 %s261, 1
      %p265 = scmp.eq.s32.totalorder %s52, 3
      %p266 = scmp.ne.s32.totalorder %s261, %s263
      %p267 = scmp.eq.s32.totalorder %s52, 0
      %p268 = por %p266, %p267
      %p269 = scmp.ne.s32.totalorder %s261, %s263
      %p270 = scmp.eq.s32.totalorder %s57, 3
      %p271 = por %p269, %p270
      %p272 = scmp.ne.s32.totalorder %s263, %s264
      %p273 = scmp.eq.s32.totalorder %s57, 0
      %p274 = por %p272, %p273
      %p275 = scmp.ne.s32.totalorder %s263, %s264
      %p276 = scmp.eq.s32.totalorder %s58, 3
      %p277 = por %p275, %p276
      %p279 = scmp.ne.s32.totalorder %s264, %s278
      %p280 = scmp.eq.s32.totalorder %s58, 0
      %p281 = por %p279, %p280
      %s283 = sadd.s32 %s282, 1
      %p286 = scmp.eq.s32.totalorder %s52, 3
      %p287 = scmp.ne.s32.totalorder %s282, %s284
      %p288 = scmp.eq.s32.totalorder %s52, 0
      %p289 = por %p287, %p288
      %p290 = scmp.ne.s32.totalorder %s282, %s284
      %p291 = scmp.eq.s32.totalorder %s57, 3
      %p292 = por %p290, %p291
      %p293 = scmp.ne.s32.totalorder %s284, %s285
      %p294 = scmp.eq.s32.totalorder %s57, 0
      %p295 = por %p293, %p294
      %p296 = scmp.ne.s32.totalorder %s284, %s285
      %p297 = scmp.eq.s32.totalorder %s58, 3
      %p298 = por %p296, %p297
      %p300 = scmp.ne.s32.totalorder %s285, %s299
      %p301 = scmp.eq.s32.totalorder %s58, 0
      %p302 = por %p300, %p301
      %s304 = sadd.s32 %s303, 1
      %p307 = scmp.eq.s32.totalorder %s52, 3
      %p308 = scmp.ne.s32.totalorder %s303, %s305
      %p309 = scmp.eq.s32.totalorder %s52, 0
      %p310 = por %p308, %p309
      %p311 = scmp.ne.s32.totalorder %s303, %s305
      %p312 = scmp.eq.s32.totalorder %s57, 3
      %p313 = por %p311, %p312
      %p314 = scmp.ne.s32.totalorder %s305, %s306
      %p315 = scmp.eq.s32.totalorder %s57, 0
      %p316 = por %p314, %p315
      %p317 = scmp.ne.s32.totalorder %s305, %s306
      %p318 = scmp.eq.s32.totalorder %s58, 3
      %p319 = por %p317, %p318
      %p321 = scmp.ne.s32.totalorder %s306, %s320
      %p322 = scmp.eq.s32.totalorder %s58, 0
      %p323 = por %p321, %p322
      %s325 = sadd.s32 %s324, 1
      %p328 = scmp.eq.s32.totalorder %s52, 3
      %p329 = scmp.ne.s32.totalorder %s324, %s326
      %p330 = scmp.eq.s32.totalorder %s52, 0
      %p331 = por %p329, %p330
      %p332 = scmp.ne.s32.totalorder %s324, %s326
      %p333 = scmp.eq.s32.totalorder %s57, 3
      %p334 = por %p332, %p333
      %p335 = scmp.ne.s32.totalorder %s326, %s327
      %p336 = scmp.eq.s32.totalorder %s57, 0
      %p337 = por %p335, %p336
      %p338 = scmp.ne.s32.totalorder %s326, %s327
      %p339 = scmp.eq.s32.totalorder %s58, 3
      %p340 = por %p338, %p339
      %p342 = scmp.ne.s32.totalorder %s327, %s341
      %p343 = scmp.eq.s32.totalorder %s58, 0
      %p344 = por %p342, %p343
      %s346 = sadd.s32 %s345, 1
      %p349 = scmp.eq.s32.totalorder %s52, 3
      %p350 = scmp.ne.s32.totalorder %s345, %s347
      %p351 = scmp.eq.s32.totalorder %s52, 0
      %p352 = por %p350, %p351
      %p353 = scmp.ne.s32.totalorder %s345, %s347
      %p354 = scmp.eq.s32.totalorder %s57, 3
      %p355 = por %p353, %p354
      %p356 = scmp.ne.s32.totalorder %s347, %s348
      %p357 = scmp.eq.s32.totalorder %s57, 0
      %p358 = por %p356, %p357
      %p359 = scmp.ne.s32.totalorder %s347, %s348
      %p360 = scmp.eq.s32.totalorder %s58, 3
      %p361 = por %p359, %p360
      %p363 = scmp.ne.s32.totalorder %s348, %s362
      %p364 = scmp.eq.s32.totalorder %s58, 0
      %p365 = por %p363, %p364
      %s367 = sadd.s32 %s366, 1
      %p370 = scmp.eq.s32.totalorder %s52, 3
      %p371 = scmp.ne.s32.totalorder %s366, %s368
      %p372 = scmp.eq.s32.totalorder %s52, 0
      %p373 = por %p371, %p372
      %p374 = scmp.ne.s32.totalorder %s366, %s368
      %p375 = scmp.eq.s32.totalorder %s57, 3
      %p376 = por %p374, %p375
      %p377 = scmp.ne.s32.totalorder %s368, %s369
      %p378 = scmp.eq.s32.totalorder %s57, 0
      %p379 = por %p377, %p378
      %p380 = scmp.ne.s32.totalorder %s368, %s369
      %p381 = scmp.eq.s32.totalorder %s58, 3
      %p382 = por %p380, %p381
      %p384 = scmp.ne.s32.totalorder %s369, %s383
      %p385 = scmp.eq.s32.totalorder %s58, 0
      %p386 = por %p384, %p385
      %s388 = sadd.s32 %s387, 1
      %p391 = scmp.eq.s32.totalorder %s52, 3
      %p392 = scmp.ne.s32.totalorder %s387, %s389
      %p393 = scmp.eq.s32.totalorder %s52, 0
      %p394 = por %p392, %p393
      %p395 = scmp.ne.s32.totalorder %s387, %s389
      %p396 = scmp.eq.s32.totalorder %s57, 3
      %p397 = por %p395, %p396
      %p398 = scmp.ne.s32.totalorder %s389, %s390
      %p399 = scmp.eq.s32.totalorder %s57, 0
      %p400 = por %p398, %p399
      %p401 = scmp.ne.s32.totalorder %s389, %s390
      %p402 = scmp.eq.s32.totalorder %s58, 3
      %p403 = por %p401, %p402
      %p405 = scmp.ne.s32.totalorder %s390, %s404
      %p406 = scmp.eq.s32.totalorder %s58, 0
      %p407 = por %p405, %p406
      %s409 = sadd.s32 %s408, 1
      %p412 = scmp.eq.s32.totalorder %s52, 3
      %p413 = scmp.ne.s32.totalorder %s408, %s410
      %p414 = scmp.eq.s32.totalorder %s52, 0
      %p415 = por %p413, %p414
      %p416 = scmp.ne.s32.totalorder %s408, %s410
      %p417 = scmp.eq.s32.totalorder %s57, 3
      %p418 = por %p416, %p417
      %p419 = scmp.ne.s32.totalorder %s410, %s411
      %p420 = scmp.eq.s32.totalorder %s57, 0
      %p421 = por %p419, %p420
      %p422 = scmp.ne.s32.totalorder %s410, %s411
      %p423 = scmp.eq.s32.totalorder %s58, 3
      %p424 = por %p422, %p423
      %p426 = scmp.ne.s32.totalorder %s411, %s425
      %p427 = scmp.eq.s32.totalorder %s58, 0
      %p428 = por %p426, %p427
      %s429 = smul.u32 %s59, 2
      %s430 = sadd.s32 %s429, %s60
      %s431 = smul.u32 %s71, 2
      %s432 = sadd.s32 %s431, %s67
      %s433 = ssub.s32 %s430, %s432
      %p434 = scmp.eq.s32.totalorder %s433, 0
      %s436 = sadd.s32 %s435, 1
      %s437 = scalar_select %p434, %s435, %s436
      %p440 = pneg %p434
      %p441 = scmp.eq.s32.totalorder %s52, 3
      %p442 = por %p440, %p441
      %p443 = scmp.ne.s32.totalorder %s435, %s438
      %p444 = scmp.eq.s32.totalorder %s52, 0
      %p445 = por %p443, %p444
      %p446 = scmp.ne.s32.totalorder %s435, %s438
      %p447 = scmp.eq.s32.totalorder %s57, 3
      %p448 = por %p446, %p447
      %p449 = scmp.ne.s32.totalorder %s438, %s439
      %p450 = scmp.eq.s32.totalorder %s57, 0
      %p451 = por %p449, %p450
      %p452 = scmp.ne.s32.totalorder %s438, %s439
      %p453 = scmp.eq.s32.totalorder %s58, 3
      %p454 = por %p452, %p453
      %p456 = scmp.ne.s32.totalorder %s439, %s455
      %p457 = scmp.eq.s32.totalorder %s58, 0
      %p458 = por %p456, %p457
      %s459 = smul.u32 %s59, 2
      %s460 = sadd.s32 %s459, %s60
      %s461 = smul.u32 %s71, 2
      %s462 = sadd.s32 %s461, %s67
      %s463 = ssub.s32 %s460, %s462
      %p464 = scmp.eq.s32.totalorder %s463, 0
      %s466 = sadd.s32 %s465, 1
      %s467 = scalar_select %p464, %s465, %s466
      %p470 = pneg %p464
      %p471 = scmp.eq.s32.totalorder %s52, 3
      %p472 = por %p470, %p471
      %p473 = scmp.ne.s32.totalorder %s465, %s468
      %p474 = scmp.eq.s32.totalorder %s52, 0
      %p475 = por %p473, %p474
      %p476 = scmp.ne.s32.totalorder %s465, %s468
      %p477 = scmp.eq.s32.totalorder %s57, 3
      %p478 = por %p476, %p477
      %p479 = scmp.ne.s32.totalorder %s468, %s469
      %p480 = scmp.eq.s32.totalorder %s57, 0
      %p481 = por %p479, %p480
      %p482 = scmp.ne.s32.totalorder %s468, %s469
      %p483 = scmp.eq.s32.totalorder %s58, 3
      %p484 = por %p482, %p483
      %p486 = scmp.ne.s32.totalorder %s469, %s485
      %p487 = scmp.eq.s32.totalorder %s58, 0
      %p488 = por %p486, %p487
      %s489 = smul.u32 %s59, 2
      %s490 = sadd.s32 %s489, %s60
      %s491 = smul.u32 %s71, 2
      %s492 = sadd.s32 %s491, %s67
      %s493 = ssub.s32 %s490, %s492
      %p494 = scmp.eq.s32.totalorder %s493, 0
      %s496 = sadd.s32 %s495, 1
      %s497 = scalar_select %p494, %s495, %s496
      %p500 = pneg %p494
      %p501 = scmp.eq.s32.totalorder %s52, 3
      %p502 = por %p500, %p501
      %p503 = scmp.ne.s32.totalorder %s495, %s498
      %p504 = scmp.eq.s32.totalorder %s52, 0
      %p505 = por %p503, %p504
      %p506 = scmp.ne.s32.totalorder %s495, %s498
      %p507 = scmp.eq.s32.totalorder %s57, 3
      %p508 = por %p506, %p507
      %p509 = scmp.ne.s32.totalorder %s498, %s499
      %p510 = scmp.eq.s32.totalorder %s57, 0
      %p511 = por %p509, %p510
      %p512 = scmp.ne.s32.totalorder %s498, %s499
      %p513 = scmp.eq.s32.totalorder %s58, 3
      %p514 = por %p512, %p513
      %p516 = scmp.ne.s32.totalorder %s499, %s515
      %p517 = scmp.eq.s32.totalorder %s58, 0
      %p518 = por %p516, %p517
      %s519 = smul.u32 %s59, 2
      %s520 = sadd.s32 %s519, %s60
      %s521 = smul.u32 %s71, 2
      %s522 = sadd.s32 %s521, %s67
      %s523 = ssub.s32 %s520, %s522
      %p524 = scmp.eq.s32.totalorder %s523, 0
      %s526 = sadd.s32 %s525, 1
      %s527 = scalar_select %p524, %s525, %s526
      %p530 = pneg %p524
      %p531 = scmp.eq.s32.totalorder %s52, 3
      %p532 = por %p530, %p531
      %p533 = scmp.ne.s32.totalorder %s525, %s528
      %p534 = scmp.eq.s32.totalorder %s52, 0
      %p535 = por %p533, %p534
      %p536 = scmp.ne.s32.totalorder %s525, %s528
      %p537 = scmp.eq.s32.totalorder %s57, 3
      %p538 = por %p536, %p537
      %p539 = scmp.ne.s32.totalorder %s528, %s529
      %p540 = scmp.eq.s32.totalorder %s57, 0
      %p541 = por %p539, %p540
      %p542 = scmp.ne.s32.totalorder %s528, %s529
      %p543 = scmp.eq.s32.totalorder %s58, 3
      %p544 = por %p542, %p543
      %p546 = scmp.ne.s32.totalorder %s529, %s545
      %p547 = scmp.eq.s32.totalorder %s58, 0
      %p548 = por %p546, %p547
      %s549 = smul.u32 %s59, 2
      %s550 = sadd.s32 %s549, %s60
      %s551 = smul.u32 %s71, 2
      %s552 = sadd.s32 %s551, %s67
      %s553 = ssub.s32 %s550, %s552
      %p554 = scmp.eq.s32.totalorder %s553, 0
      %s556 = sadd.s32 %s555, 1
      %s557 = scalar_select %p554, %s555, %s556
      %p560 = pneg %p554
      %p561 = scmp.eq.s32.totalorder %s52, 3
      %p562 = por %p560, %p561
      %p563 = scmp.ne.s32.totalorder %s555, %s558
      %p564 = scmp.eq.s32.totalorder %s52, 0
      %p565 = por %p563, %p564
      %p566 = scmp.ne.s32.totalorder %s555, %s558
      %p567 = scmp.eq.s32.totalorder %s57, 3
      %p568 = por %p566, %p567
      %p569 = scmp.ne.s32.totalorder %s558, %s559
      %p570 = scmp.eq.s32.totalorder %s57, 0
      %p571 = por %p569, %p570
      %p572 = scmp.ne.s32.totalorder %s558, %s559
      %p573 = scmp.eq.s32.totalorder %s58, 3
      %p574 = por %p572, %p573
      %p576 = scmp.ne.s32.totalorder %s559, %s575
      %p577 = scmp.eq.s32.totalorder %s58, 0
      %p578 = por %p576, %p577
      %s579 = smul.u32 %s59, 2
      %s580 = sadd.s32 %s579, %s60
      %s581 = smul.u32 %s71, 2
      %s582 = sadd.s32 %s581, %s67
      %s583 = ssub.s32 %s580, %s582
      %p584 = scmp.eq.s32.totalorder %s583, 0
      %s586 = sadd.s32 %s585, 1
      %s587 = scalar_select %p584, %s585, %s586
      %p590 = pneg %p584
      %p591 = scmp.eq.s32.totalorder %s52, 3
      %p592 = por %p590, %p591
      %p593 = scmp.ne.s32.totalorder %s585, %s588
      %p594 = scmp.eq.s32.totalorder %s52, 0
      %p595 = por %p593, %p594
      %p596 = scmp.ne.s32.totalorder %s585, %s588
      %p597 = scmp.eq.s32.totalorder %s57, 3
      %p598 = por %p596, %p597
      %p599 = scmp.ne.s32.totalorder %s588, %s589
      %p600 = scmp.eq.s32.totalorder %s57, 0
      %p601 = por %p599, %p600
      %p602 = scmp.ne.s32.totalorder %s588, %s589
      %p603 = scmp.eq.s32.totalorder %s58, 3
      %p604 = por %p602, %p603
      %p606 = scmp.ne.s32.totalorder %s589, %s605
      %p607 = scmp.eq.s32.totalorder %s58, 0
      %p608 = por %p606, %p607
      %s609 = ssub.s32 %s59, %s71
      %p610 = scmp.eq.s32.totalorder %s609, 0
      %s612 = sadd.s32 %s611, 1
      %s613 = scalar_select %p610, %s611, %s612
      %p616 = pneg %p610
      %p617 = scmp.eq.s32.totalorder %s52, 3
      %p618 = por %p616, %p617
      %p619 = scmp.ne.s32.totalorder %s611, %s614
      %p620 = scmp.eq.s32.totalorder %s52, 0
      %p621 = por %p619, %p620
      %p622 = scmp.ne.s32.totalorder %s611, %s614
      %p623 = scmp.eq.s32.totalorder %s57, 3
      %p624 = por %p622, %p623
      %p625 = scmp.ne.s32.totalorder %s614, %s615
      %p626 = scmp.eq.s32.totalorder %s57, 0
      %p627 = por %p625, %p626
      %p628 = scmp.ne.s32.totalorder %s614, %s615
      %p629 = scmp.eq.s32.totalorder %s58, 3
      %p630 = por %p628, %p629
      %p632 = scmp.ne.s32.totalorder %s615, %s631
      %p633 = scmp.eq.s32.totalorder %s58, 0
      %p634 = por %p632, %p633
      %s635 = ssub.s32 %s59, %s71
      %p636 = scmp.eq.s32.totalorder %s635, 0
      %s638 = sadd.s32 %s637, 1
      %s639 = scalar_select %p636, %s637, %s638
      %p642 = pneg %p636
      %p643 = scmp.eq.s32.totalorder %s52, 3
      %p644 = por %p642, %p643
      %p645 = scmp.ne.s32.totalorder %s637, %s640
      %p646 = scmp.eq.s32.totalorder %s52, 0
      %p647 = por %p645, %p646
      %p648 = scmp.ne.s32.totalorder %s637, %s640
      %p649 = scmp.eq.s32.totalorder %s57, 3
      %p650 = por %p648, %p649
      %p651 = scmp.ne.s32.totalorder %s640, %s641
      %p652 = scmp.eq.s32.totalorder %s57, 0
      %p653 = por %p651, %p652
      %p654 = scmp.ne.s32.totalorder %s640, %s641
      %p655 = scmp.eq.s32.totalorder %s58, 3
      %p656 = por %p654, %p655
      %p658 = scmp.ne.s32.totalorder %s641, %s657
      %p659 = scmp.eq.s32.totalorder %s58, 0
      %p660 = por %p658, %p659
      %s661 = ssub.s32 %s59, %s71
      %p662 = scmp.eq.s32.totalorder %s661, 0
      %s664 = sadd.s32 %s663, 1
      %s665 = scalar_select %p662, %s663, %s664
      %p668 = pneg %p662
      %p669 = scmp.eq.s32.totalorder %s52, 3
      %p670 = por %p668, %p669
      %p671 = scmp.ne.s32.totalorder %s663, %s666
      %p672 = scmp.eq.s32.totalorder %s52, 0
      %p673 = por %p671, %p672
      %p674 = scmp.ne.s32.totalorder %s663, %s666
      %p675 = scmp.eq.s32.totalorder %s57, 3
      %p676 = por %p674, %p675
      %p677 = scmp.ne.s32.totalorder %s666, %s667
      %p678 = scmp.eq.s32.totalorder %s57, 0
      %p679 = por %p677, %p678
      %p680 = scmp.ne.s32.totalorder %s666, %s667
      %p681 = scmp.eq.s32.totalorder %s58, 3
      %p682 = por %p680, %p681
      %p684 = scmp.ne.s32.totalorder %s667, %s683
      %p685 = scmp.eq.s32.totalorder %s58, 0
      %p686 = por %p684, %p685
      %s687 = ssub.s32 %s59, %s71
      %p688 = scmp.eq.s32.totalorder %s687, 0
      %s690 = sadd.s32 %s689, 1
      %s691 = scalar_select %p688, %s689, %s690
      %p694 = pneg %p688
      %p695 = scmp.eq.s32.totalorder %s52, 3
      %p696 = por %p694, %p695
      %p697 = scmp.ne.s32.totalorder %s689, %s692
      %p698 = scmp.eq.s32.totalorder %s52, 0
      %p699 = por %p697, %p698
      %p700 = scmp.ne.s32.totalorder %s689, %s692
      %p701 = scmp.eq.s32.totalorder %s57, 3
      %p702 = por %p700, %p701
      %p703 = scmp.ne.s32.totalorder %s692, %s693
      %p704 = scmp.eq.s32.totalorder %s57, 0
      %p705 = por %p703, %p704
      %p706 = scmp.ne.s32.totalorder %s692, %s693
      %p707 = scmp.eq.s32.totalorder %s58, 3
      %p708 = por %p706, %p707
      %p710 = scmp.ne.s32.totalorder %s693, %s709
      %p711 = scmp.eq.s32.totalorder %s58, 0
      %p712 = por %p710, %p711
      %p713 = scmp.le.s32.totalorder 1, %s52
      %p714 = scmp.lt.s32.totalorder %s52, 5
      %p715 = pnand %p713, %p714
      %p716 = pneg %p715
      // Predicated region
      $region9: #{tpu_custom_call.1} parent=5 // pred_check
        _
      $region10: #{tpu_custom_call.1} parent=5 // pred_check_branch
        %718 = sbr.rel (%p715) target = $region12
      $region11: #{tpu_custom_call.1} parent=5 // pred_region
        %s719 = ssub.s32 %s52, 1
        // Predicated region
        $region13: #{tpu_custom_call.1} parent=11 // pred_check
          %p720 = pneg %p85
        $region14: #{tpu_custom_call.1} parent=11 // pred_check_branch
          %722 = sbr.rel (%p720) target = $region16
        $region15: #{tpu_custom_call.1} parent=11 // pred_region
          %s724 = ssub.s32 128, 128
          %725 = vsyncadd [#allocation8], %s724
          %s727 = sshll.u32 [#allocation7], 4
          %s728 = int_to_ptr.vmem [resolvable:$true] %s727
          %730 = dma.hbm_to_vmem [thread:$0]  %s0, 128, %s728, [#allocation8]
        $region16: #{tpu_custom_call.1} parent=11 // pred_fallthru
          _
        // Predicated region
        $region17: #{tpu_custom_call.1} parent=11 // pred_check
          %p731 = pneg %p106
        $region18: #{tpu_custom_call.1} parent=11 // pred_check_branch
          %733 = sbr.rel (%p731) target = $region20
        $region19: #{tpu_custom_call.1} parent=11 // pred_region
          %s735 = ssub.s32 128, 128
          %736 = vsyncadd [#allocation11], %s735
          %s738 = sshll.u32 [#allocation10], 4
          %s739 = int_to_ptr.vmem [resolvable:$true] %s738
          %741 = dma.hbm_to_vmem [thread:$0]  %s1, 128, %s739, [#allocation11]
        $region20: #{tpu_custom_call.1} parent=11 // pred_fallthru
          _
        // Predicated region
        $region21: #{tpu_custom_call.1} parent=11 // pred_check
          %p742 = pneg %p127
        $region22: #{tpu_custom_call.1} parent=11 // pred_check_branch
          %744 = sbr.rel (%p742) target = $region24
        $region23: #{tpu_custom_call.1} parent=11 // pred_region
          %s746 = ssub.s32 128, 128
          %747 = vsyncadd [#allocation11], %s746
          %s749 = sshll.u32 [#allocation12], 4
          %s750 = int_to_ptr.vmem [resolvable:$true] %s749
          %752 = dma.hbm_to_vmem [thread:$0]  %s2, 128, %s750, [#allocation11]
        $region24: #{tpu_custom_call.1} parent=11 // pred_fallthru
          _
        // Predicated region
        $region25: #{tpu_custom_call.1} parent=11 // pred_check
          %p753 = pneg %p148
        $region26: #{tpu_custom_call.1} parent=11 // pred_check_branch
          %755 = sbr.rel (%p753) target = $region28
        $region27: #{tpu_custom_call.1} parent=11 // pred_region
          %s757 = ssub.s32 256, 256
          %758 = vsyncadd [#allocation14], %s757
          %s759 = sshll.u32 [#allocation13], 4
          %s760 = int_to_ptr.vmem [resolvable:$true] %s759
          %765 = dma.hbm_to_vmem [thread:$0]  %s3, 256, %s760, [#allocation14], 64, 64, 4
        $region28: #{tpu_custom_call.1} parent=11 // pred_fallthru
          _
        // Predicated region
        $region29: #{tpu_custom_call.1} parent=11 // pred_check
          %p766 = pneg %p169
        $region30: #{tpu_custom_call.1} parent=11 // pred_check_branch
          %768 = sbr.rel (%p766) target = $region32
        $region31: #{tpu_custom_call.1} parent=11 // pred_region
          %s770 = ssub.s32 256, 256
          %771 = vsyncadd [#allocation14], %s770
          %s772 = sshll.u32 [#allocation15], 4
          %s773 = int_to_ptr.vmem [resolvable:$true] %s772
          %778 = dma.hbm_to_vmem [thread:$0]  %s4, 256, %s773, [#allocation14], 64, 64, 4
        $region32: #{tpu_custom_call.1} parent=11 // pred_fallthru
          _
        // Predicated region
        $region33: #{tpu_custom_call.1} parent=11 // pred_check
          %p779 = pneg %p190
        $region34: #{tpu_custom_call.1} parent=11 // pred_check_branch
          %781 = sbr.rel (%p779) target = $region36
        $region35: #{tpu_custom_call.1} parent=11 // pred_region
          %s783 = ssub.s32 16, 16
          %784 = vsyncadd [#allocation17], %s783
          %s786 = sshll.u32 [#allocation16], 4
          %s787 = int_to_ptr.vmem [resolvable:$true] %s786
          %789 = dma.hbm_to_vmem [thread:$0]  %s5, 16, %s787, [#allocation17]
        $region36: #{tpu_custom_call.1} parent=11 // pred_fallthru
          _
        // Predicated region
        $region37: #{tpu_custom_call.1} parent=11 // pred_check
          %p790 = pneg %p211
        $region38: #{tpu_custom_call.1} parent=11 // pred_check_branch
          %792 = sbr.rel (%p790) target = $region40
        $region39: #{tpu_custom_call.1} parent=11 // pred_region
          %s794 = ssub.s32 16, 16
          %795 = vsyncadd [#allocation17], %s794
          %s797 = sshll.u32 [#allocation18], 4
          %s798 = int_to_ptr.vmem [resolvable:$true] %s797
          %800 = dma.hbm_to_vmem [thread:$0]  %s6, 16, %s798, [#allocation17]
        $region40: #{tpu_custom_call.1} parent=11 // pred_fallthru
          _
        // Predicated region
        $region41: #{tpu_custom_call.1} parent=11 // pred_check
          %p801 = pneg %p232
        $region42: #{tpu_custom_call.1} parent=11 // pred_check_branch
          %803 = sbr.rel (%p801) target = $region44
        $region43: #{tpu_custom_call.1} parent=11 // pred_region
          %s805 = ssub.s32 16, 16
          %806 = vsyncadd [#allocation20], %s805
          %s808 = sshll.u32 [#allocation19], 4
          %s809 = int_to_ptr.vmem [resolvable:$true] %s808
          %811 = dma.hbm_to_vmem [thread:$0]  %s7, 16, %s809, [#allocation20]
        $region44: #{tpu_custom_call.1} parent=11 // pred_fallthru
          _
        // Predicated region
        $region45: #{tpu_custom_call.1} parent=11 // pred_check
          %p812 = pneg %p253
        $region46: #{tpu_custom_call.1} parent=11 // pred_check_branch
          %814 = sbr.rel (%p812) target = $region48
        $region47: #{tpu_custom_call.1} parent=11 // pred_region
          _
        $region48: #{tpu_custom_call.1} parent=11 // pred_fallthru
          _
        // Predicated region
        $region49: #{tpu_custom_call.1} parent=11 // pred_check
          %p815 = pneg %p274
        $region50: #{tpu_custom_call.1} parent=11 // pred_check_branch
          %817 = sbr.rel (%p815) target = $region52
        $region51: #{tpu_custom_call.1} parent=11 // pred_region
          _
        $region52: #{tpu_custom_call.1} parent=11 // pred_fallthru
          _
        // Predicated region
        $region53: #{tpu_custom_call.1} parent=11 // pred_check
          %p818 = pneg %p295
        $region54: #{tpu_custom_call.1} parent=11 // pred_check_branch
          %820 = sbr.rel (%p818) target = $region56
        $region55: #{tpu_custom_call.1} parent=11 // pred_region
          _
        $region56: #{tpu_custom_call.1} parent=11 // pred_fallthru
          _
        // Predicated region
        $region57: #{tpu_custom_call.1} parent=11 // pred_check
          %p821 = pneg %p316
        $region58: #{tpu_custom_call.1} parent=11 // pred_check_branch
          %823 = sbr.rel (%p821) target = $region60
        $region59: #{tpu_custom_call.1} parent=11 // pred_region
          %s825 = ssub.s32 256, 256
          %826 = vsyncadd [#allocation20], %s825
          %s827 = sshll.u32 [#allocation21], 4
          %s828 = int_to_ptr.vmem [resolvable:$true] %s827
          %833 = dma.hbm_to_vmem [thread:$0]  %s11, 256, %s828, [#allocation20], 64, 64, 4
        $region60: #{tpu_custom_call.1} parent=11 // pred_fallthru
          _
        // Predicated region
        $region61: #{tpu_custom_call.1} parent=11 // pred_check
          %p834 = pneg %p337
        $region62: #{tpu_custom_call.1} parent=11 // pred_check_branch
          %836 = sbr.rel (%p834) target = $region64
        $region63: #{tpu_custom_call.1} parent=11 // pred_region
          %s838 = ssub.s32 16, 16
          %839 = vsyncadd [#allocation23], %s838
          %s841 = sshll.u32 [#allocation22], 4
          %s842 = int_to_ptr.vmem [resolvable:$true] %s841
          %844 = dma.hbm_to_vmem [thread:$0]  %s12, 16, %s842, [#allocation23]
        $region64: #{tpu_custom_call.1} parent=11 // pred_fallthru
          _
        // Predicated region
        $region65: #{tpu_custom_call.1} parent=11 // pred_check
          %p845 = pneg %p358
        $region66: #{tpu_custom_call.1} parent=11 // pred_check_branch
          %847 = sbr.rel (%p845) target = $region68
        $region67: #{tpu_custom_call.1} parent=11 // pred_region
          %s849 = ssub.s32 16, 16
          %850 = vsyncadd [#allocation23], %s849
          %s852 = sshll.u32 [#allocation24], 4
          %s853 = int_to_ptr.vmem [resolvable:$true] %s852
          %855 = dma.hbm_to_vmem [thread:$0]  %s13, 16, %s853, [#allocation23]
        $region68: #{tpu_custom_call.1} parent=11 // pred_fallthru
          _
        // Predicated region
        $region69: #{tpu_custom_call.1} parent=11 // pred_check
          %p856 = pneg %p379
        $region70: #{tpu_custom_call.1} parent=11 // pred_check_branch
          %858 = sbr.rel (%p856) target = $region72
        $region71: #{tpu_custom_call.1} parent=11 // pred_region
          %s860 = ssub.s32 16, 16
          %861 = vsyncadd [#allocation26], %s860
          %s863 = sshll.u32 [#allocation25], 4
          %s864 = int_to_ptr.vmem [resolvable:$true] %s863
          %866 = dma.hbm_to_vmem [thread:$0]  %s14, 16, %s864, [#allocation26]
        $region72: #{tpu_custom_call.1} parent=11 // pred_fallthru
          _
        // Predicated region
        $region73: #{tpu_custom_call.1} parent=11 // pred_check
          %p867 = pneg %p400
        $region74: #{tpu_custom_call.1} parent=11 // pred_check_branch
          %869 = sbr.rel (%p867) target = $region76
        $region75: #{tpu_custom_call.1} parent=11 // pred_region
          %s871 = ssub.s32 16, 16
          %872 = vsyncadd [#allocation26], %s871
          %s874 = sshll.u32 [#allocation27], 4
          %s875 = int_to_ptr.vmem [resolvable:$true] %s874
          %877 = dma.hbm_to_vmem [thread:$0]  %s15, 16, %s875, [#allocation26]
        $region76: #{tpu_custom_call.1} parent=11 // pred_fallthru
          _
        // Predicated region
        $region77: #{tpu_custom_call.1} parent=11 // pred_check
          %p878 = pneg %p421
        $region78: #{tpu_custom_call.1} parent=11 // pred_check_branch
          %880 = sbr.rel (%p878) target = $region80
        $region79: #{tpu_custom_call.1} parent=11 // pred_region
          %s882 = ssub.s32 16, 16
          %883 = vsyncadd [#allocation29], %s882
          %s885 = sshll.u32 [#allocation28], 4
          %s886 = int_to_ptr.vmem [resolvable:$true] %s885
          %888 = dma.hbm_to_vmem [thread:$0]  %s16, 16, %s886, [#allocation29]
        $region80: #{tpu_custom_call.1} parent=11 // pred_fallthru
          _
      $region12: #{tpu_custom_call.1} parent=5 // pred_fallthru
        _
      %p889 = scmp.lt.s32.totalorder %s52, 4
      // Predicated region
      $region81: #{tpu_custom_call.1} parent=5 // pred_check
        %p890 = pneg %p889
      $region82: #{tpu_custom_call.1} parent=5 // pred_check_branch
        %892 = sbr.rel (%p890) target = $region84
      $region83: #{tpu_custom_call.1} parent=5 // pred_region
        // Predicated region
        $region85: #{tpu_custom_call.1} parent=83 // pred_check
          %p893 = pneg %p445
        $region86: #{tpu_custom_call.1} parent=83 // pred_check_branch
          %895 = sbr.rel (%p893) target = $region88
        $region87: #{tpu_custom_call.1} parent=83 // pred_region
          %s896 = sand.u32 %s52, 1
          %s897 = scalar_lea.sflag [#allocation8], %s896
          %s898 = sand.u32 %s435, 1
          %s899 = smul.addr %s898, 32
          %s900 = scalar_lea.vmem [#allocation30], %s899
          %s901 = smul.u32 %s59, 2
          %s902 = sadd.s32 %s901, %s60
          %s903 = smul.u32 4, %s902
          %s905 = ssub.s32 512, 512
          %906 = vsyncadd %s897, %s905
          %s907 = smul.addr %s903, 128
          %s908 = scalar_lea.hbm %s17, %s907
          %s910 = sshll.u32 %s900, 4
          %s911 = int_to_ptr.vmem [resolvable:$true] %s910
          %913 = dma.hbm_to_vmem [thread:$0]  %s908, 512, %s911, %s897
        $region88: #{tpu_custom_call.1} parent=83 // pred_fallthru
          _
        // Predicated region
        $region89: #{tpu_custom_call.1} parent=83 // pred_check
          %p914 = pneg %p475
        $region90: #{tpu_custom_call.1} parent=83 // pred_check_branch
          %916 = sbr.rel (%p914) target = $region92
        $region91: #{tpu_custom_call.1} parent=83 // pred_region
          %s917 = smul.u32 %s59, 2
          %s918 = sadd.s32 %s917, %s60
          %s919 = smul.u32 4, %s918
          %p920 = scmp.lt.s32.totalorder %s919, 15
          %s921 = scalar_select %p920, %s919, 15
          %s922 = scalar_lea.vmem %s18, %s921
          %s923 = smul.u32 %s59, 2
          %s924 = sadd.s32 %s923, %s60
          %s925 = smul.u32 4, %s924
        $region92: #{tpu_custom_call.1} parent=83 // pred_fallthru
          _
        // Predicated region
        $region93: #{tpu_custom_call.1} parent=83 // pred_check
          %p926 = pneg %p505
        $region94: #{tpu_custom_call.1} parent=83 // pred_check_branch
          %928 = sbr.rel (%p926) target = $region96
        $region95: #{tpu_custom_call.1} parent=83 // pred_region
          %s929 = sand.u32 %s52, 1
          %s930 = scalar_lea.sflag [#allocation8], %s929
          %s931 = sand.u32 %s495, 1
          %s932 = smul.addr %s931, 32
          %s933 = scalar_lea.vmem [#allocation31], %s932
          %s934 = smul.u32 %s59, 2
          %s935 = sadd.s32 %s934, %s60
          %s936 = smul.u32 4, %s935
          %s938 = ssub.s32 512, 512
          %939 = vsyncadd %s930, %s938
          %s940 = smul.addr %s936, 128
          %s941 = scalar_lea.hbm %s19, %s940
          %s943 = sshll.u32 %s933, 4
          %s944 = int_to_ptr.vmem [resolvable:$true] %s943
          %946 = dma.hbm_to_vmem [thread:$0]  %s941, 512, %s944, %s930
        $region96: #{tpu_custom_call.1} parent=83 // pred_fallthru
          _
        // Predicated region
        $region97: #{tpu_custom_call.1} parent=83 // pred_check
          %p947 = pneg %p535
        $region98: #{tpu_custom_call.1} parent=83 // pred_check_branch
          %949 = sbr.rel (%p947) target = $region100
        $region99: #{tpu_custom_call.1} parent=83 // pred_region
          %s950 = sand.u32 %s52, 1
          %s951 = scalar_lea.sflag [#allocation8], %s950
          %s952 = sand.u32 %s525, 1
          %s953 = smul.addr %s952, 4
          %s954 = scalar_lea.vmem [#allocation32], %s953
          %s955 = smul.u32 %s59, 2
          %s956 = sadd.s32 %s955, %s60
          %s957 = smul.u32 4, %s956
          %s959 = ssub.s32 64, 64
          %960 = vsyncadd %s951, %s959
          %s961 = smul.addr %s957, 16
          %s962 = scalar_lea.hbm %s20, %s961
          %s964 = sshll.u32 %s954, 4
          %s965 = int_to_ptr.vmem [resolvable:$true] %s964
          %967 = dma.hbm_to_vmem [thread:$0]  %s962, 64, %s965, %s951
        $region100: #{tpu_custom_call.1} parent=83 // pred_fallthru
          _
        // Predicated region
        $region101: #{tpu_custom_call.1} parent=83 // pred_check
          %p968 = pneg %p565
        $region102: #{tpu_custom_call.1} parent=83 // pred_check_branch
          %970 = sbr.rel (%p968) target = $region104
        $region103: #{tpu_custom_call.1} parent=83 // pred_region
          %s971 = sand.u32 %s52, 1
          %s972 = scalar_lea.sflag [#allocation8], %s971
          %s973 = sand.u32 %s555, 1
          %s974 = smul.addr %s973, 4
          %s975 = scalar_lea.vmem [#allocation33], %s974
          %s976 = smul.u32 %s59, 2
          %s977 = sadd.s32 %s976, %s60
          %s978 = smul.u32 4, %s977
          %s980 = ssub.s32 64, 64
          %981 = vsyncadd %s972, %s980
          %s982 = smul.addr %s978, 16
          %s983 = scalar_lea.hbm %s21, %s982
          %s985 = sshll.u32 %s975, 4
          %s986 = int_to_ptr.vmem [resolvable:$true] %s985
          %988 = dma.hbm_to_vmem [thread:$0]  %s983, 64, %s986, %s972
        $region104: #{tpu_custom_call.1} parent=83 // pred_fallthru
          _
      $region84: #{tpu_custom_call.1} parent=5 // pred_fallthru
        _
      %p989 = scmp.le.s32.totalorder 1, %s52
      %p990 = scmp.lt.s32.totalorder %s52, 5
      %p991 = pnand %p989, %p990
      %p992 = pneg %p991
      // Predicated region
      $region105: #{tpu_custom_call.1} parent=5 // pred_check
        _
      $region106: #{tpu_custom_call.1} parent=5 // pred_check_branch
        %994 = sbr.rel (%p991) target = $region108
      $region107: #{tpu_custom_call.1} parent=5 // pred_region
        %s995 = ssub.s32 %s52, 1
        // Predicated region
        $region109: #{tpu_custom_call.1} parent=107 // pred_check
          %p996 = pneg %p85
        $region110: #{tpu_custom_call.1} parent=107 // pred_check_branch
          %998 = sbr.rel (%p996) target = $region112
        $region111: #{tpu_custom_call.1} parent=107 // pred_region
          %999 = dma.done [#allocation8], 128
        $region112: #{tpu_custom_call.1} parent=107 // pred_fallthru
          _
        // Predicated region
        $region113: #{tpu_custom_call.1} parent=107 // pred_check
          %p1000 = pneg %p106
        $region114: #{tpu_custom_call.1} parent=107 // pred_check_branch
          %1002 = sbr.rel (%p1000) target = $region116
        $region115: #{tpu_custom_call.1} parent=107 // pred_region
          %1003 = dma.done [#allocation11], 128
        $region116: #{tpu_custom_call.1} parent=107 // pred_fallthru
          _
        // Predicated region
        $region117: #{tpu_custom_call.1} parent=107 // pred_check
          %p1004 = pneg %p127
        $region118: #{tpu_custom_call.1} parent=107 // pred_check_branch
          %1006 = sbr.rel (%p1004) target = $region120
        $region119: #{tpu_custom_call.1} parent=107 // pred_region
          %1007 = dma.done [#allocation11], 128
        $region120: #{tpu_custom_call.1} parent=107 // pred_fallthru
          _
        // Predicated region
        $region121: #{tpu_custom_call.1} parent=107 // pred_check
          %p1008 = pneg %p148
        $region122: #{tpu_custom_call.1} parent=107 // pred_check_branch
          %1010 = sbr.rel (%p1008) target = $region124
        $region123: #{tpu_custom_call.1} parent=107 // pred_region
          %1011 = dma.done [#allocation14], 256
        $region124: #{tpu_custom_call.1} parent=107 // pred_fallthru
          _
        // Predicated region
        $region125: #{tpu_custom_call.1} parent=107 // pred_check
          %p1012 = pneg %p169
        $region126: #{tpu_custom_call.1} parent=107 // pred_check_branch
          %1014 = sbr.rel (%p1012) target = $region128
        $region127: #{tpu_custom_call.1} parent=107 // pred_region
          %1015 = dma.done [#allocation14], 256
        $region128: #{tpu_custom_call.1} parent=107 // pred_fallthru
          _
        // Predicated region
        $region129: #{tpu_custom_call.1} parent=107 // pred_check
          %p1016 = pneg %p190
        $region130: #{tpu_custom_call.1} parent=107 // pred_check_branch
          %1018 = sbr.rel (%p1016) target = $region132
        $region131: #{tpu_custom_call.1} parent=107 // pred_region
          %1019 = dma.done [#allocation17], 16
        $region132: #{tpu_custom_call.1} parent=107 // pred_fallthru
          _
        // Predicated region
        $region133: #{tpu_custom_call.1} parent=107 // pred_check
          %p1020 = pneg %p211
        $region134: #{tpu_custom_call.1} parent=107 // pred_check_branch
          %1022 = sbr.rel (%p1020) target = $region136
        $region135: #{tpu_custom_call.1} parent=107 // pred_region
          %1023 = dma.done [#allocation17], 16
        $region136: #{tpu_custom_call.1} parent=107 // pred_fallthru
          _
        // Predicated region
        $region137: #{tpu_custom_call.1} parent=107 // pred_check
          %p1024 = pneg %p232
        $region138: #{tpu_custom_call.1} parent=107 // pred_check_branch
          %1026 = sbr.rel (%p1024) target = $region140
        $region139: #{tpu_custom_call.1} parent=107 // pred_region
          %1027 = dma.done [#allocation20], 16
        $region140: #{tpu_custom_call.1} parent=107 // pred_fallthru
          _
        // Predicated region
        $region141: #{tpu_custom_call.1} parent=107 // pred_check
          %p1028 = pneg %p316
        $region142: #{tpu_custom_call.1} parent=107 // pred_check_branch
          %1030 = sbr.rel (%p1028) target = $region144
        $region143: #{tpu_custom_call.1} parent=107 // pred_region
          %1031 = dma.done [#allocation20], 256
        $region144: #{tpu_custom_call.1} parent=107 // pred_fallthru
          _
        // Predicated region
        $region145: #{tpu_custom_call.1} parent=107 // pred_check
          %p1032 = pneg %p337
        $region146: #{tpu_custom_call.1} parent=107 // pred_check_branch
          %1034 = sbr.rel (%p1032) target = $region148
        $region147: #{tpu_custom_call.1} parent=107 // pred_region
          %1035 = dma.done [#allocation23], 16
        $region148: #{tpu_custom_call.1} parent=107 // pred_fallthru
          _
        // Predicated region
        $region149: #{tpu_custom_call.1} parent=107 // pred_check
          %p1036 = pneg %p358
        $region150: #{tpu_custom_call.1} parent=107 // pred_check_branch
          %1038 = sbr.rel (%p1036) target = $region152
        $region151: #{tpu_custom_call.1} parent=107 // pred_region
          %1039 = dma.done [#allocation23], 16
        $region152: #{tpu_custom_call.1} parent=107 // pred_fallthru
          _
        // Predicated region
        $region153: #{tpu_custom_call.1} parent=107 // pred_check
          %p1040 = pneg %p379
        $region154: #{tpu_custom_call.1} parent=107 // pred_check_branch
          %1042 = sbr.rel (%p1040) target = $region156
        $region155: #{tpu_custom_call.1} parent=107 // pred_region
          %1043 = dma.done [#allocation26], 16
        $region156: #{tpu_custom_call.1} parent=107 // pred_fallthru
          _
        // Predicated region
        $region157: #{tpu_custom_call.1} parent=107 // pred_check
          %p1044 = pneg %p400
        $region158: #{tpu_custom_call.1} parent=107 // pred_check_branch
          %1046 = sbr.rel (%p1044) target = $region160
        $region159: #{tpu_custom_call.1} parent=107 // pred_region
          %1047 = dma.done [#allocation26], 16
        $region160: #{tpu_custom_call.1} parent=107 // pred_fallthru
          _
        // Predicated region
        $region161: #{tpu_custom_call.1} parent=107 // pred_check
          %p1048 = pneg %p421
        $region162: #{tpu_custom_call.1} parent=107 // pred_check_branch
          %1050 = sbr.rel (%p1048) target = $region164
        $region163: #{tpu_custom_call.1} parent=107 // pred_region
          %1051 = dma.done [#allocation29], 16
        $region164: #{tpu_custom_call.1} parent=107 // pred_fallthru
          _
        %s1052 = sand.u32 %s57, 1
        %s1053 = scalar_lea.sflag [#allocation8], %s1052
        %s1054 = sand.u32 %s438, 1
        %s1055 = smul.addr %s1054, 32
        %s1056 = scalar_lea.vmem [#allocation30], %s1055
        // Predicated region
        $region165: #{tpu_custom_call.1} parent=107 // pred_check
          %p1057 = pneg %p451
        $region166: #{tpu_custom_call.1} parent=107 // pred_check_branch
          %1059 = sbr.rel (%p1057) target = $region168
        $region167: #{tpu_custom_call.1} parent=107 // pred_region
          %1060 = dma.done %s1053, 512
        $region168: #{tpu_custom_call.1} parent=107 // pred_fallthru
          _
        %s1061 = sand.u32 %s57, 1
        %s1062 = scalar_lea.sflag [#allocation8], %s1061
        %s1063 = sand.u32 %s498, 1
        %s1064 = smul.addr %s1063, 32
        %s1065 = scalar_lea.vmem [#allocation31], %s1064
        // Predicated region
        $region169: #{tpu_custom_call.1} parent=107 // pred_check
          %p1066 = pneg %p511
        $region170: #{tpu_custom_call.1} parent=107 // pred_check_branch
          %1068 = sbr.rel (%p1066) target = $region172
        $region171: #{tpu_custom_call.1} parent=107 // pred_region
          %1069 = dma.done %s1062, 512
        $region172: #{tpu_custom_call.1} parent=107 // pred_fallthru
          _
        %s1070 = sand.u32 %s57, 1
        %s1071 = scalar_lea.sflag [#allocation8], %s1070
        %s1072 = sand.u32 %s528, 1
        %s1073 = smul.addr %s1072, 4
        %s1074 = scalar_lea.vmem [#allocation32], %s1073
        // Predicated region
        $region173: #{tpu_custom_call.1} parent=107 // pred_check
          %p1075 = pneg %p541
        $region174: #{tpu_custom_call.1} parent=107 // pred_check_branch
          %1077 = sbr.rel (%p1075) target = $region176
        $region175: #{tpu_custom_call.1} parent=107 // pred_region
          %1078 = dma.done %s1071, 64
        $region176: #{tpu_custom_call.1} parent=107 // pred_fallthru
          _
        %s1079 = sand.u32 %s57, 1
        %s1080 = scalar_lea.sflag [#allocation8], %s1079
        %s1081 = sand.u32 %s558, 1
        %s1082 = smul.addr %s1081, 4
        %s1083 = scalar_lea.vmem [#allocation33], %s1082
        // Predicated region
        $region177: #{tpu_custom_call.1} parent=107 // pred_check
          %p1084 = pneg %p571
        $region178: #{tpu_custom_call.1} parent=107 // pred_check_branch
          %1086 = sbr.rel (%p1084) target = $region180
        $region179: #{tpu_custom_call.1} parent=107 // pred_region
          %1087 = dma.done %s1080, 64
        $region180: #{tpu_custom_call.1} parent=107 // pred_fallthru
          _
        %p1088 = pneg %p85
        %p1089 = pneg %p82
        %p1090 = pneg %p106
        %p1091 = pneg %p103
        %p1092 = pneg %p127
        %p1093 = pneg %p124
        %p1094 = pneg %p148
        %p1095 = pneg %p145
        %p1096 = pneg %p169
        %p1097 = pneg %p166
        %p1098 = pneg %p190
        %p1099 = pneg %p187
        %p1100 = pneg %p211
        %p1101 = pneg %p208
        %p1102 = pneg %p232
        %p1103 = pneg %p229
        %p1104 = pneg %p253
        %p1105 = pneg %p250
        %p1106 = pneg %p274
        %p1107 = pneg %p271
        %p1108 = pneg %p295
        %p1109 = pneg %p292
        %p1110 = pneg %p316
        %p1111 = pneg %p313
        %p1112 = pneg %p337
        %p1113 = pneg %p334
        %p1114 = pneg %p358
        %p1115 = pneg %p355
        %p1116 = pneg %p379
        %p1117 = pneg %p376
        %p1118 = pneg %p400
        %p1119 = pneg %p397
        %p1120 = pneg %p421
        %p1121 = pneg %p418
        %s1122 = sand.u32 %s57, 1
        %s1123 = scalar_lea.sflag [#allocation8], %s1122
        %s1124 = sand.u32 %s438, 1
        %s1125 = smul.addr %s1124, 32
        %s1126 = scalar_lea.vmem [#allocation30], %s1125
        %p1127 = pneg %p451
        %p1128 = pneg %p448
        %s1129 = smul.u32 %s61, 2
        %s1130 = sadd.s32 %s1129, %s62
        %s1131 = smul.u32 4, %s1130
        %p1132 = scmp.lt.s32.totalorder %s1131, 15
        %s1133 = scalar_select %p1132, %s1131, 15
        %s1134 = scalar_lea.vmem %s18, %s1133
        %p1135 = pneg %p481
        %p1136 = pneg %p478
        %s1137 = sand.u32 %s57, 1
        %s1138 = scalar_lea.sflag [#allocation8], %s1137
        %s1139 = sand.u32 %s498, 1
        %s1140 = smul.addr %s1139, 32
        %s1141 = scalar_lea.vmem [#allocation31], %s1140
        %p1142 = pneg %p511
        %p1143 = pneg %p508
        %s1144 = sand.u32 %s57, 1
        %s1145 = scalar_lea.sflag [#allocation8], %s1144
        %s1146 = sand.u32 %s528, 1
        %s1147 = smul.addr %s1146, 4
        %s1148 = scalar_lea.vmem [#allocation32], %s1147
        %p1149 = pneg %p541
        %p1150 = pneg %p538
        %s1151 = sand.u32 %s57, 1
        %s1152 = scalar_lea.sflag [#allocation8], %s1151
        %s1153 = sand.u32 %s558, 1
        %s1154 = smul.addr %s1153, 4
        %s1155 = scalar_lea.vmem [#allocation33], %s1154
        %p1156 = pneg %p571
        %p1157 = pneg %p568
        %p1158 = pneg %p601
        %p1159 = pneg %p598
        %s1160 = sand.u32 %s588, 1
        %s1161 = scalar_lea.sflag [#allocation9], %s1160
        %s1162 = sand.u32 %s588, 1
        %s1163 = smul.addr %s1162, 32
        %s1164 = scalar_lea.vmem [#allocation34], %s1163
        %p1165 = pneg %p627
        %p1166 = pneg %p624
        %s1167 = sand.u32 %s57, 1
        %s1168 = scalar_lea.sflag [#allocation36], %s1167
        %s1169 = sand.u32 %s614, 1
        %s1170 = smul.addr %s1169, 8
        %s1171 = scalar_lea.vmem [#allocation35], %s1170
        %p1172 = pneg %p653
        %p1173 = pneg %p650
        %s1174 = sand.u32 %s57, 1
        %s1175 = scalar_lea.sflag [#allocation36], %s1174
        %s1176 = sand.u32 %s640, 1
        %s1177 = smul.addr %s1176, 8
        %s1178 = scalar_lea.vmem [#allocation37], %s1177
        %p1179 = pneg %p679
        %p1180 = pneg %p676
        %s1181 = sand.u32 %s57, 1
        %s1182 = scalar_lea.sflag [#allocation39], %s1181
        %s1183 = sand.u32 %s666, 1
        %s1184 = smul.addr %s1183, 8
        %s1185 = scalar_lea.vmem [#allocation38], %s1184
        %p1186 = pneg %p705
        %p1187 = pneg %p702
        %s1188 = sand.u32 %s57, 1
        %s1189 = scalar_lea.sflag [#allocation39], %s1188
        %s1190 = sand.u32 %s692, 1
        %s1191 = smul.addr %s1190, 8
        %s1192 = scalar_lea.vmem [#allocation40], %s1191
        %s1193 = smul.u32 %s61, 2
        %s1194 = sadd.s32 %s1193, %s62
        %s1195 = smul.u32 4, %s1194
        %s1196 = smul.u32 %s61, 2
        %s1197 = sadd.s32 %s1196, %s62
        %s1198 = smul.u32 4, %s1197
        %p1199 = scmp.lt.s32.totalorder %s1198, 15
        %s1200 = scalar_select %p1199, %s1198, 15
        %s1201 = scalar_lea.vmem %s18, %s1200
        %s1202 = smul.u32 %s61, 2
        %s1203 = sadd.s32 %s1202, %s62
        %s1204 = smul.u32 4, %s1203
        %s1205 = smul.u32 %s61, 2
        %s1206 = sadd.s32 %s1205, %s62
        %s1207 = smul.u32 4, %s1206
        %s1208 = smul.u32 %s61, 2
        %s1209 = sadd.s32 %s1208, %s62
        %s1210 = smul.u32 4, %s1209
        %s1211 = smul.u32 %s61, 2
        %s1212 = sadd.s32 %s1211, %s62
        %s1213 = smul.u32 4, %s1212
        %s1214 = smul.u32 %s61, 2
        %s1215 = sadd.s32 %s1214, %s62
        %s1216 = smul.u32 4, %s1215
        %p1218 = scmp.eq.s32.totalorder %s62, 0
        // Predicated region
        $region181: #{tpu_custom_call.1} parent=107 // pred_check
          %p1219 = pneg %p1218
        $region182: #{tpu_custom_call.1} parent=107 // pred_check_branch
          %1221 = sbr.rel (%p1219) target = $region184
        $region183: #{tpu_custom_call.1} parent=107 // pred_region
          %v1222 = vld [vmem:[#allocation7] sm:$0xff]
          %v1223 = vld [vmem:[#allocation10] sm:$0xff]
          %v1224 = vld [vmem:[#allocation12] sm:$0xff]
          %v1225 = vpack.c.bf16 %v1222, %v1222
          %v1226 = vld [vmem:[#allocation13] sm:$0xf]
          %v1227 = vld [vmem:[#allocation13 + $0x4] sm:$0xf]
          %v1228 = vld [vmem:[#allocation13 + $0x8] sm:$0xf]
          %v1229 = vld [vmem:[#allocation13 + $0xc] sm:$0xf]
          %v1230 = vpack.c.bf16 %v1223, %v1223
          %v1231 = vld [vmem:[#allocation15] sm:$0xf]
          %v1232 = vld [vmem:[#allocation15 + $0x4] sm:$0xf]
          %v1233 = vld [vmem:[#allocation15 + $0x8] sm:$0xf]
          %v1234 = vld [vmem:[#allocation15 + $0xc] sm:$0xf]
          %v1239 = vunpack.c.l.b16 %v1231
          %v1240 = vunpack.c.l.b16 %v1232
          %v1241 = vunpack.c.l.b16 %v1233
          %v1242 = vunpack.c.l.b16 %v1234
          %v1243 = vpack.c.b16 %v1240, %v1239
          %v1244 = vpack.c.b16 %v1242, %v1241
          %vm1247 = vcmask 261120
          %v1249 = vsel %vm1247, %v1230, 0
          %1251 = vmatprep.subr.bf16.mxu0 0
          %1252 = vmatpush1.bf16.msra.mxu0 0
          %1253 = vmatprep.subr.bf16.mxu0 0
          %1254 = vmatpush1.bf16.msra.mxu0 0
          %1255 = vmatprep.subr.bf16.mxu0 0
          %1256 = vmatpush1.bf16.msra.mxu0 0
          %1257 = vmatprep.subr.bf16.mxu0 0
          %1258 = vmatpush1.bf16.msra.mxu0 0
          %1259 = vmatprep.subr.bf16.mxu0 0
          %1260 = vmatpush1.bf16.msra.mxu0 0
          %1261 = vmatprep.subr.bf16.mxu0 0
          %1262 = vmatpush1.bf16.msra.mxu0 0
          %1263 = vmatprep.subr.bf16.mxu0 0
          %1264 = vmatpush1.bf16.msra.mxu0 %v1244
          %1265 = vmatprep.subr.bf16.mxu0 0
          %1266 = vmatpush1.bf16.msra.mxu0 %v1243
          %1267 = vmatprep.subr.bf16.mxu0 0
          %1268 = vmatpush2.bf16.msra.mxu0 0
          %1269 = vmatprep.subr.bf16.mxu0 0
          %1270 = vmatpush2.bf16.msra.mxu0 0
          %1271 = vmatprep.subr.bf16.mxu0 0
          %1272 = vmatpush2.bf16.msra.mxu0 0
          %1273 = vmatprep.subr.bf16.mxu0 0
          %1274 = vmatpush2.bf16.msra.mxu0 0
          %1275 = vmatprep.subr.bf16.mxu0 0
          %1276 = vmatpush2.bf16.msra.mxu0 0
          %1277 = vmatprep.subr.bf16.mxu0 0
          %1278 = vmatpush2.bf16.msra.mxu0 0
          %1279 = vmatprep.subr.bf16.mxu0 0
          %1280 = vmatpush2.bf16.msra.mxu0 0
          %1281 = vmatprep.subr.bf16.mxu0 0
          %1282 = vmatpush2.bf16.msra.mxu0 0
          %1283 = vmatprep.mubr.bf16.mxu0 0
          %1284 = vmatmul.mubr.bf16.gmra.mxu0 %v1249
          %v1285 = vpop.f32.mrf.mxu0
          %v1286 = vadd.f32 0.0, %v1285
          %v1287 = vpop.f32.mrf.mxu0
          %v1288 = vpop.f32.mrf.mxu0
          %v1289 = vpop.f32.mrf.mxu0
          %1290 = vdwg.mxu0
          %v1295 = vunpack.c.l.b16 %v1226
          %v1296 = vunpack.c.l.b16 %v1227
          %v1297 = vunpack.c.l.b16 %v1228
          %v1298 = vunpack.c.l.b16 %v1229
          %v1299 = vpack.c.b16 %v1296, %v1295
          %v1300 = vpack.c.b16 %v1298, %v1297
          %v1304 = vsel %vm1247, %v1225, 0
          %1306 = vmatprep.subr.bf16.mxu0 0
          %1307 = vmatpush1.bf16.msra.mxu0 0
          %1308 = vmatprep.subr.bf16.mxu0 0
          %1309 = vmatpush1.bf16.msra.mxu0 0
          %1310 = vmatprep.subr.bf16.mxu0 0
          %1311 = vmatpush1.bf16.msra.mxu0 0
          %1312 = vmatprep.subr.bf16.mxu0 0
          %1313 = vmatpush1.bf16.msra.mxu0 0
          %1314 = vmatprep.subr.bf16.mxu0 0
          %1315 = vmatpush1.bf16.msra.mxu0 0
          %1316 = vmatprep.subr.bf16.mxu0 0
          %1317 = vmatpush1.bf16.msra.mxu0 0
          %1318 = vmatprep.subr.bf16.mxu0 0
          %1319 = vmatpush1.bf16.msra.mxu0 %v1300
          %1320 = vmatprep.subr.bf16.mxu0 0
          %1321 = vmatpush1.bf16.msra.mxu0 %v1299
          %1322 = vmatprep.subr.bf16.mxu0 0
          %1323 = vmatpush2.bf16.msra.mxu0 0
          %1324 = vmatprep.subr.bf16.mxu0 0
          %1325 = vmatpush2.bf16.msra.mxu0 0
          %1326 = vmatprep.subr.bf16.mxu0 0
          %1327 = vmatpush2.bf16.msra.mxu0 0
          %1328 = vmatprep.subr.bf16.mxu0 0
          %1329 = vmatpush2.bf16.msra.mxu0 0
          %1330 = vmatprep.subr.bf16.mxu0 0
          %1331 = vmatpush2.bf16.msra.mxu0 0
          %1332 = vmatprep.subr.bf16.mxu0 0
          %1333 = vmatpush2.bf16.msra.mxu0 0
          %1334 = vmatprep.subr.bf16.mxu0 0
          %1335 = vmatpush2.bf16.msra.mxu0 0
          %1336 = vmatprep.subr.bf16.mxu0 0
          %1337 = vmatpush2.bf16.msra.mxu0 0
          %1338 = vmatprep.mubr.bf16.mxu0 0
          %1339 = vmatmul.mubr.bf16.gmra.mxu0 %v1304
          %v1340 = vpop.f32.mrf.mxu0
          %v1341 = vadd.f32 %v1286, %v1340
          %v1342 = vpop.f32.mrf.mxu0
          %v1343 = vpop.f32.mrf.mxu0
          %v1344 = vpop.f32.mrf.mxu0
          %1345 = vdwg.mxu0
          %v1346 = vld [vmem:[#allocation16] sm:$0x1]
          %v1348 = vlaneseq
          %v1349 = vshrl.u32 %v1348, 7
          %v1350 = vsub.s32 0, %v1349
          %v1351 = vrot.slane %v1346, %v1350
          %v1353 = vadd.f32 %v1341, %v1351
          %v1354 = vmax.f32 %v1353, 0.0
          %v1355 = vld [vmem:[#allocation18] sm:$0x1]
          %v1357 = vlaneseq
          %v1358 = vshrl.u32 %v1357, 7
          %v1359 = vsub.s32 0, %v1358
          %v1360 = vrot.slane %v1355, %v1359
          %v1362 = vmul.f32 %v1224, %v1360
          %v1363 = vsel %vm1247, %v1362, 0.0
          %1364 = vadd.xlane.f32.xlu0 %v1363
          %v1365 = vpop.xlane.xlu0 %1364
          %v1366 = vld [vmem:[#allocation19] sm:$0x1]
          %v1368 = vlaneseq
          %v1369 = vshrl.u32 %v1368, 7
          %v1370 = vsub.s32 0, %v1369
          %v1371 = vrot.slane %v1366, %v1370
          %v1373 = vmul.f32 %v1354, %v1371
          %v1374 = vsel %vm1247, %v1373, 0.0
          %1375 = vadd.xlane.f32.xlu0 %v1374
          %v1376 = vpop.xlane.xlu0 %1375
          %v1377 = vadd.f32 %v1365, %v1376
          %v1378 = vld [vmem:[#allocation6] sm:$0x1]
          %v1380 = vlaneseq
          %v1381 = vshrl.u32 %v1380, 7
          %v1382 = vsub.s32 0, %v1381
          %v1383 = vrot.slane %v1378, %v1382
          %v1385 = vadd.f32 %v1377, %v1383
          %v1386 = vxor.u32 %v1385, 2147483648
          %v1387 = vmul.f32 %v1386, 1.442695
          %v1388 = vpow.pop %v1387
          %v1389 = vadd.f32 %v1388, 1.0
          %v1390 = vrcp.pop %v1389
          %v1391 = vmul.f32 1.0, %v1390
          %1393 = vset.pattern.permute.xlu0 0
          %1394 = vperm.xlu0 %1393, %v1391
          %v1395 = vpop.permute.xlu0 %1394
          %1397 = vst [vmem:[%s1178] sm:$0xff] %v1395
          %v1398 = vpack.c.bf16 %v1354, %v1354
          %v1399 = vld [vmem:[%s9] sm:$0xf]
          %v1400 = vld [vmem:[%s9 + $0x4] sm:$0xf]
          %v1401 = vld [vmem:[%s9 + $0x8] sm:$0xf]
          %v1402 = vld [vmem:[%s9 + $0xc] sm:$0xf]
          %v1403 = vld [vmem:[%s10] sm:$0x1]
          %v1405 = vlaneseq
          %v1406 = vshrl.u32 %v1405, 7
          %v1407 = vsub.s32 0, %v1406
          %v1408 = vrot.slane %v1403, %v1407
          %v1414 = vunpack.c.l.b16 %v1399
          %v1415 = vunpack.c.l.b16 %v1400
          %v1416 = vunpack.c.l.b16 %v1401
          %v1417 = vunpack.c.l.b16 %v1402
          %v1418 = vpack.c.b16 %v1415, %v1414
          %v1419 = vpack.c.b16 %v1417, %v1416
          %v1423 = vsel %vm1247, %v1398, 0
          %1425 = vmatprep.subr.bf16.mxu0 0
          %1426 = vmatpush1.bf16.msra.mxu0 0
          %1427 = vmatprep.subr.bf16.mxu0 0
          %1428 = vmatpush1.bf16.msra.mxu0 0
          %1429 = vmatprep.subr.bf16.mxu0 0
          %1430 = vmatpush1.bf16.msra.mxu0 0
          %1431 = vmatprep.subr.bf16.mxu0 0
          %1432 = vmatpush1.bf16.msra.mxu0 0
          %1433 = vmatprep.subr.bf16.mxu0 0
          %1434 = vmatpush1.bf16.msra.mxu0 0
          %1435 = vmatprep.subr.bf16.mxu0 0
          %1436 = vmatpush1.bf16.msra.mxu0 0
          %1437 = vmatprep.subr.bf16.mxu0 0
          %1438 = vmatpush1.bf16.msra.mxu0 %v1419
          %1439 = vmatprep.subr.bf16.mxu0 0
          %1440 = vmatpush1.bf16.msra.mxu0 %v1418
          %1441 = vmatprep.subr.bf16.mxu0 0
          %1442 = vmatpush2.bf16.msra.mxu0 0
          %1443 = vmatprep.subr.bf16.mxu0 0
          %1444 = vmatpush2.bf16.msra.mxu0 0
          %1445 = vmatprep.subr.bf16.mxu0 0
          %1446 = vmatpush2.bf16.msra.mxu0 0
          %1447 = vmatprep.subr.bf16.mxu0 0
          %1448 = vmatpush2.bf16.msra.mxu0 0
          %1449 = vmatprep.subr.bf16.mxu0 0
          %1450 = vmatpush2.bf16.msra.mxu0 0
          %1451 = vmatprep.subr.bf16.mxu0 0
          %1452 = vmatpush2.bf16.msra.mxu0 0
          %1453 = vmatprep.subr.bf16.mxu0 0
          %1454 = vmatpush2.bf16.msra.mxu0 0
          %1455 = vmatprep.subr.bf16.mxu0 0
          %1456 = vmatpush2.bf16.msra.mxu0 0
          %1457 = vmatprep.mubr.bf16.mxu0 0
          %1458 = vmatmul.mubr.bf16.gmra.mxu0 %v1423
          %v1459 = vpop.f32.mrf.mxu0
          %v1460 = vadd.f32 %v1408, %v1459
          %v1461 = vpop.f32.mrf.mxu0
          %v1462 = vpop.f32.mrf.mxu0
          %v1463 = vpop.f32.mrf.mxu0
          %1464 = vdwg.mxu0
          %v1465 = vpack.c.bf16 %v1224, %v1224
          %v1466 = vld [vmem:[#allocation21] sm:$0xf]
          %v1467 = vld [vmem:[#allocation21 + $0x4] sm:$0xf]
          %v1468 = vld [vmem:[#allocation21 + $0x8] sm:$0xf]
          %v1469 = vld [vmem:[#allocation21 + $0xc] sm:$0xf]
          %v1470 = vld [vmem:[#allocation22] sm:$0x1]
          %v1472 = vlaneseq
          %v1473 = vshrl.u32 %v1472, 7
          %v1474 = vsub.s32 0, %v1473
          %v1475 = vrot.slane %v1470, %v1474
          %v1481 = vunpack.c.l.b16 %v1466
          %v1482 = vunpack.c.l.b16 %v1467
          %v1483 = vunpack.c.l.b16 %v1468
          %v1484 = vunpack.c.l.b16 %v1469
          %v1485 = vpack.c.b16 %v1482, %v1481
          %v1486 = vpack.c.b16 %v1484, %v1483
          %v1490 = vsel %vm1247, %v1465, 0
          %1492 = vmatprep.subr.bf16.mxu0 0
          %1493 = vmatpush1.bf16.msra.mxu0 0
          %1494 = vmatprep.subr.bf16.mxu0 0
          %1495 = vmatpush1.bf16.msra.mxu0 0
          %1496 = vmatprep.subr.bf16.mxu0 0
          %1497 = vmatpush1.bf16.msra.mxu0 0
          %1498 = vmatprep.subr.bf16.mxu0 0
          %1499 = vmatpush1.bf16.msra.mxu0 0
          %1500 = vmatprep.subr.bf16.mxu0 0
          %1501 = vmatpush1.bf16.msra.mxu0 0
          %1502 = vmatprep.subr.bf16.mxu0 0
          %1503 = vmatpush1.bf16.msra.mxu0 0
          %1504 = vmatprep.subr.bf16.mxu0 0
          %1505 = vmatpush1.bf16.msra.mxu0 %v1486
          %1506 = vmatprep.subr.bf16.mxu0 0
          %1507 = vmatpush1.bf16.msra.mxu0 %v1485
          %1508 = vmatprep.subr.bf16.mxu0 0
          %1509 = vmatpush2.bf16.msra.mxu0 0
          %1510 = vmatprep.subr.bf16.mxu0 0
          %1511 = vmatpush2.bf16.msra.mxu0 0
          %1512 = vmatprep.subr.bf16.mxu0 0
          %1513 = vmatpush2.bf16.msra.mxu0 0
          %1514 = vmatprep.subr.bf16.mxu0 0
          %1515 = vmatpush2.bf16.msra.mxu0 0
          %1516 = vmatprep.subr.bf16.mxu0 0
          %1517 = vmatpush2.bf16.msra.mxu0 0
          %1518 = vmatprep.subr.bf16.mxu0 0
          %1519 = vmatpush2.bf16.msra.mxu0 0
          %1520 = vmatprep.subr.bf16.mxu0 0
          %1521 = vmatpush2.bf16.msra.mxu0 0
          %1522 = vmatprep.subr.bf16.mxu0 0
          %1523 = vmatpush2.bf16.msra.mxu0 0
          %1524 = vmatprep.mubr.bf16.mxu0 0
          %1525 = vmatmul.mubr.bf16.gmra.mxu0 %v1490
          %v1526 = vpop.f32.mrf.mxu0
          %v1527 = vadd.f32 %v1475, %v1526
          %v1528 = vpop.f32.mrf.mxu0
          %v1529 = vpop.f32.mrf.mxu0
          %v1530 = vpop.f32.mrf.mxu0
          %1531 = vdwg.mxu0
          %v1532 = vld [vmem:[#allocation24] sm:$0x1]
          %v1533 = vld [vmem:[#allocation25] sm:$0x1]
          %v1534 = vld [vmem:[#allocation27] sm:$0x1]
          %v1535 = vld [vmem:[#allocation28] sm:$0x1]
          %v1536 = vsel %vm1247, %v1460, 0.0
          %1537 = vadd.xlane.f32.xlu0 %v1536
          %v1538 = vpop.xlane.xlu0 %1537
          %v1539 = vrcp.pop 32.0
          %v1540 = vmul.f32 %v1538, %v1539
          %v1541 = vsub.f32 %v1460, %v1540
          %v1542 = vmul.f32 %v1541, %v1541
          %v1543 = vsel %vm1247, %v1542, 0.0
          %1544 = vadd.xlane.f32.xlu0 %v1543
          %v1545 = vpop.xlane.xlu0 %1544
          %v1546 = vmul.f32 %v1545, %v1539
          %v1547 = vadd.f32 %v1546, 1e-05
          %v1548 = vrsqrt.pop %v1547
          %v1549 = vmul.f32 %v1541, %v1548
          %v1551 = vlaneseq
          %v1552 = vshrl.u32 %v1551, 7
          %v1553 = vsub.s32 0, %v1552
          %v1554 = vrot.slane %v1532, %v1553
          %v1556 = vmul.f32 %v1549, %v1554
          %v1558 = vlaneseq
          %v1559 = vshrl.u32 %v1558, 7
          %v1560 = vsub.s32 0, %v1559
          %v1561 = vrot.slane %v1533, %v1560
          %v1563 = vadd.f32 %v1556, %v1561
          %v1564 = vsel %vm1247, %v1527, 0.0
          %1565 = vadd.xlane.f32.xlu0 %v1564
          %v1566 = vpop.xlane.xlu0 %1565
          %v1567 = vmul.f32 %v1566, %v1539
          %v1568 = vsub.f32 %v1527, %v1567
          %v1569 = vmul.f32 %v1568, %v1568
          %v1570 = vsel %vm1247, %v1569, 0.0
          %1571 = vadd.xlane.f32.xlu0 %v1570
          %v1572 = vpop.xlane.xlu0 %1571
          %v1573 = vmul.f32 %v1572, %v1539
          %v1574 = vadd.f32 %v1573, 1e-05
          %v1575 = vrsqrt.pop %v1574
          %v1576 = vmul.f32 %v1568, %v1575
          %v1578 = vlaneseq
          %v1579 = vshrl.u32 %v1578, 7
          %v1580 = vsub.s32 0, %v1579
          %v1581 = vrot.slane %v1534, %v1580
          %v1583 = vmul.f32 %v1576, %v1581
          %v1585 = vlaneseq
          %v1586 = vshrl.u32 %v1585, 7
          %v1587 = vsub.s32 0, %v1586
          %v1588 = vrot.slane %v1535, %v1587
          %v1590 = vadd.f32 %v1583, %v1588
          %v1591 = vadd.f32 %v1563, %v1590
          %v1592 = vxor.u32 %v1591, 2147483648
          %v1593 = vmul.f32 %v1592, 1.442695
          %v1594 = vpow.pop %v1593
          %v1595 = vadd.f32 %v1594, 1.0
          %v1596 = vrcp.pop %v1595
          %v1597 = vmul.f32 1.0, %v1596
          %1599 = vrot.lane.b32.xlu0 %v1460, 96
          %v1600 = vpop.permute.xlu0 %1599
          %v1602 = vsel %vm1247, %v1600, 0.0
          %1603 = vadd.xlane.f32.xlu0 %v1602
          %v1604 = vpop.xlane.xlu0 %1603
          %v1605 = vmul.f32 %v1604, %v1539
          %v1606 = vsub.f32 %v1460, %v1605
          %v1607 = vmul.f32 %v1606, %v1606
          %1609 = vrot.lane.b32.xlu0 %v1607, 96
          %v1610 = vpop.permute.xlu0 %1609
          %v1612 = vsel %vm1247, %v1610, 0.0
          %1613 = vadd.xlane.f32.xlu0 %v1612
          %v1614 = vpop.xlane.xlu0 %1613
          %v1615 = vmul.f32 %v1614, %v1539
          %v1616 = vadd.f32 %v1615, 1e-05
          %v1617 = vrsqrt.pop %v1616
          %v1618 = vmul.f32 %v1606, %v1617
          %v1619 = vmul.f32 %v1618, %v1554
          %v1620 = vadd.f32 %v1619, %v1561
          %1622 = vrot.lane.b32.xlu0 %v1527, 96
          %v1623 = vpop.permute.xlu0 %1622
          %v1625 = vsel %vm1247, %v1623, 0.0
          %1626 = vadd.xlane.f32.xlu0 %v1625
          %v1627 = vpop.xlane.xlu0 %1626
          %v1628 = vmul.f32 %v1627, %v1539
          %v1629 = vsub.f32 %v1527, %v1628
          %v1630 = vmul.f32 %v1629, %v1629
          %1632 = vrot.lane.b32.xlu0 %v1630, 96
          %v1633 = vpop.permute.xlu0 %1632
          %v1635 = vsel %vm1247, %v1633, 0.0
          %1636 = vadd.xlane.f32.xlu0 %v1635
          %v1637 = vpop.xlane.xlu0 %1636
          %v1638 = vmul.f32 %v1637, %v1539
          %v1639 = vadd.f32 %v1638, 1e-05
          %v1640 = vrsqrt.pop %v1639
          %v1641 = vmul.f32 %v1629, %v1640
          %v1642 = vmul.f32 %v1641, %v1581
          %v1643 = vadd.f32 %v1642, %v1588
          %v1644 = vadd.f32 %v1620, %v1643
          %v1645 = vxor.u32 %v1644, 2147483648
          %v1646 = vmul.f32 %v1645, 1.442695
          %v1647 = vpow.pop %v1646
          %v1648 = vadd.f32 %v1647, 1.0
          %v1649 = vrcp.pop %v1648
          %v1650 = vmul.f32 1.0, %v1649
          %1651 = vrot.lane.b32.xlu0 %v1460, 64
          %v1652 = vpop.permute.xlu0 %1651
          %v1654 = vsel %vm1247, %v1652, 0.0
          %1655 = vadd.xlane.f32.xlu0 %v1654
          %v1656 = vpop.xlane.xlu0 %1655
          %v1657 = vmul.f32 %v1656, %v1539
          %v1658 = vsub.f32 %v1460, %v1657
          %v1659 = vmul.f32 %v1658, %v1658
          %1661 = vrot.lane.b32.xlu0 %v1659, 64
          %v1662 = vpop.permute.xlu0 %1661
          %v1664 = vsel %vm1247, %v1662, 0.0
          %1665 = vadd.xlane.f32.xlu0 %v1664
          %v1666 = vpop.xlane.xlu0 %1665
          %v1667 = vmul.f32 %v1666, %v1539
          %v1668 = vadd.f32 %v1667, 1e-05
          %v1669 = vrsqrt.pop %v1668
          %v1670 = vmul.f32 %v1658, %v1669
          %v1671 = vmul.f32 %v1670, %v1554
          %v1672 = vadd.f32 %v1671, %v1561
          %1673 = vrot.lane.b32.xlu0 %v1527, 64
          %v1674 = vpop.permute.xlu0 %1673
          %v1676 = vsel %vm1247, %v1674, 0.0
          %1677 = vadd.xlane.f32.xlu0 %v1676
          %v1678 = vpop.xlane.xlu0 %1677
          %v1679 = vmul.f32 %v1678, %v1539
          %v1680 = vsub.f32 %v1527, %v1679
          %v1681 = vmul.f32 %v1680, %v1680
          %1683 = vrot.lane.b32.xlu0 %v1681, 64
          %v1684 = vpop.permute.xlu0 %1683
          %v1686 = vsel %vm1247, %v1684, 0.0
          %1687 = vadd.xlane.f32.xlu0 %v1686
          %v1688 = vpop.xlane.xlu0 %1687
          %v1689 = vmul.f32 %v1688, %v1539
          %v1690 = vadd.f32 %v1689, 1e-05
          %v1691 = vrsqrt.pop %v1690
          %v1692 = vmul.f32 %v1680, %v1691
          %v1693 = vmul.f32 %v1692, %v1581
          %v1694 = vadd.f32 %v1693, %v1588
          %1696 = vrot.lane.b32.xlu0 %v1694, 64
          %v1697 = vpop.permute.xlu0 %1696
          %v1699 = vmul.f32 %v1597, %v1697
          %1701 = vrot.lane.b32.xlu0 %v1699, 64
          %v1702 = vpop.permute.xlu0 %1701
          %v1704 = vadd.f32 %v1672, %v1702
          %v1705 = vtanh.pop %v1704
          %v1706 = vsub.f32 1.0, %v1650
          %1708 = vrot.lane.b32.xlu0 %v1705, 96
          %v1709 = vpop.permute.xlu0 %1708
          %v1711 = vmul.f32 %v1706, %v1709
          %1713 = vrot.lane.b32.xlu0 %v1224, 32
          %v1714 = vpop.permute.xlu0 %1713
          %v1716 = vmul.f32 %v1650, %v1714
          %v1717 = vadd.f32 %v1711, %v1716
          %1719 = vrot.lane.b32.xlu0 %v1717, 96
          %v1720 = vpop.permute.xlu0 %1719
          %1722 = vst.msk [vmem:[%s1171] sm:$0xff] %vm1247, %v1720
          %v1723 = vpack.c.bf16 %v1717, %v1717
          %v1725 = vunpack.c.l.b16 %v1723
          %v1726 = vpack.c.b16 %v1725, %v1725
          %1727 = vrot.lane.b32.xlu0 %v1726, 96
          %v1728 = vpop.permute.xlu0 %1727
          %vm1730 = vcmask 257024
          %1731 = vst.msk [vmem:[#allocation2] sm:$0xf] %vm1730, %v1728
          %1732 = vst.msk [vmem:[#allocation3] sm:$0xf] %vm1730, %v1230
          %vm1733 = vcmask 7168
          %1734 = vst.msk [vmem:[#allocation4] sm:$0xff] %vm1733, -inf
          %1735 = vst.msk [vmem:[#allocation5] sm:$0xff] %vm1733, 0.0
        $region184: #{tpu_custom_call.1} parent=107 // pred_fallthru
          _
        %v1736 = vld [vmem:[%s1056] sm:$0xff]
        %v1737 = vld [vmem:[%s1056 + $0x8] sm:$0xff]
        %v1738 = vld [vmem:[%s1056 + $0x10] sm:$0xff]
        %v1739 = vld [vmem:[%s1056 + $0x18] sm:$0xff]
        %v1740 = vunpack.c.l.s8.bf16 %v1736
        %v1741 = vunpack.c.l.s8.bf16 %v1737
        %v1742 = vunpack.c.l.s8.bf16 %v1738
        %v1743 = vunpack.c.l.s8.bf16 %v1739
        %v1744 = vunpack.c.h.s8.bf16 %v1736
        %v1745 = vunpack.c.h.s8.bf16 %v1737
        %v1746 = vunpack.c.h.s8.bf16 %v1738
        %v1747 = vunpack.c.h.s8.bf16 %v1739
        %v1748 = vld [vmem:[%s1065] sm:$0xff]
        %v1749 = vld [vmem:[%s1065 + $0x8] sm:$0xff]
        %v1750 = vld [vmem:[%s1065 + $0x10] sm:$0xff]
        %v1751 = vld [vmem:[%s1065 + $0x18] sm:$0xff]
        %v1752 = vunpack.c.l.s8.bf16 %v1748
        %v1753 = vunpack.c.l.s8.bf16 %v1749
        %v1754 = vunpack.c.l.s8.bf16 %v1750
        %v1755 = vunpack.c.l.s8.bf16 %v1751
        %v1756 = vunpack.c.h.s8.bf16 %v1748
        %v1757 = vunpack.c.h.s8.bf16 %v1749
        %v1758 = vunpack.c.h.s8.bf16 %v1750
        %v1759 = vunpack.c.h.s8.bf16 %v1751
        %v1760 = vld [vmem:[#allocation2] sm:$0xf]
        %vm1761 = vcmask 261120
        %v1763 = vsel %vm1761, %v1760, 0
        %1765 = vmatprep.subr.bf16.mxu0 0
        %1766 = vmatpush1.bf16.msra.mxu0 0
        %1767 = vmatprep.subr.bf16.mxu0 0
        %1768 = vmatpush1.bf16.msra.mxu0 0
        %1769 = vmatprep.subr.bf16.mxu0 0
        %1770 = vmatpush1.bf16.msra.mxu0 0
        %1771 = vmatprep.subr.bf16.mxu0 0
        %1772 = vmatpush1.bf16.msra.mxu0 0
        %1773 = vmatprep.subr.bf16.mxu0 0
        %1774 = vmatpush1.bf16.msra.mxu0 0
        %1775 = vmatprep.subr.bf16.mxu0 0
        %1776 = vmatpush1.bf16.msra.mxu0 0
        %1777 = vmatprep.subr.bf16.mxu0 %v1745
        %1778 = vmatpush1.bf16.msra.mxu0 %v1744
        %1779 = vmatprep.subr.bf16.mxu0 %v1741
        %1780 = vmatpush1.bf16.msra.mxu0 %v1740
        %1781 = vmatprep.subr.bf16.mxu0 0
        %1782 = vmatpush2.bf16.msra.mxu0 0
        %1783 = vmatprep.subr.bf16.mxu0 0
        %1784 = vmatpush2.bf16.msra.mxu0 0
        %1785 = vmatprep.subr.bf16.mxu0 0
        %1786 = vmatpush2.bf16.msra.mxu0 0
        %1787 = vmatprep.subr.bf16.mxu0 0
        %1788 = vmatpush2.bf16.msra.mxu0 0
        %1789 = vmatprep.subr.bf16.mxu0 0
        %1790 = vmatpush2.bf16.msra.mxu0 0
        %1791 = vmatprep.subr.bf16.mxu0 0
        %1792 = vmatpush2.bf16.msra.mxu0 0
        %1793 = vmatprep.subr.bf16.mxu0 0
        %1794 = vmatpush2.bf16.msra.mxu0 0
        %1795 = vmatprep.subr.bf16.mxu0 0
        %1796 = vmatpush2.bf16.msra.mxu0 0
        %1797 = vmatprep.mubr.bf16.mxu0 0
        %1798 = vmatmul.mubr.bf16.gmra.mxu0 %v1763
        %v1799 = vpop.f32.mrf.mxu0
        %v1800 = vadd.f32 0.0, %v1799
        %v1801 = vpop.f32.mrf.mxu0
        %v1802 = vadd.f32 0.0, %v1801
        %v1803 = vpop.f32.mrf.mxu0
        %v1804 = vpop.f32.mrf.mxu0
        %1805 = vdwg.mxu0
        %1806 = vmatprep.subr.bf16.mxu0 0
        %1807 = vmatpush1.bf16.msra.mxu0 0
        %1808 = vmatprep.subr.bf16.mxu0 0
        %1809 = vmatpush1.bf16.msra.mxu0 0
        %1810 = vmatprep.subr.bf16.mxu0 0
        %1811 = vmatpush1.bf16.msra.mxu0 0
        %1812 = vmatprep.subr.bf16.mxu0 0
        %1813 = vmatpush1.bf16.msra.mxu0 0
        %1814 = vmatprep.subr.bf16.mxu0 0
        %1815 = vmatpush1.bf16.msra.mxu0 0
        %1816 = vmatprep.subr.bf16.mxu0 0
        %1817 = vmatpush1.bf16.msra.mxu0 0
        %1818 = vmatprep.subr.bf16.mxu0 %v1747
        %1819 = vmatpush1.bf16.msra.mxu0 %v1746
        %1820 = vmatprep.subr.bf16.mxu0 %v1743
        %1821 = vmatpush1.bf16.msra.mxu0 %v1742
        %1822 = vmatprep.subr.bf16.mxu0 0
        %1823 = vmatpush2.bf16.msra.mxu0 0
        %1824 = vmatprep.subr.bf16.mxu0 0
        %1825 = vmatpush2.bf16.msra.mxu0 0
        %1826 = vmatprep.subr.bf16.mxu0 0
        %1827 = vmatpush2.bf16.msra.mxu0 0
        %1828 = vmatprep.subr.bf16.mxu0 0
        %1829 = vmatpush2.bf16.msra.mxu0 0
        %1830 = vmatprep.subr.bf16.mxu0 0
        %1831 = vmatpush2.bf16.msra.mxu0 0
        %1832 = vmatprep.subr.bf16.mxu0 0
        %1833 = vmatpush2.bf16.msra.mxu0 0
        %1834 = vmatprep.subr.bf16.mxu0 0
        %1835 = vmatpush2.bf16.msra.mxu0 0
        %1836 = vmatprep.subr.bf16.mxu0 0
        %1837 = vmatpush2.bf16.msra.mxu0 0
        %1838 = vmatprep.mubr.bf16.mxu0 0
        %1839 = vmatmul.mubr.bf16.gmra.mxu0 %v1763
        %v1840 = vpop.f32.mrf.mxu0
        %v1841 = vadd.f32 0.0, %v1840
        %v1842 = vpop.f32.mrf.mxu0
        %v1843 = vadd.f32 0.0, %v1842
        %v1844 = vpop.f32.mrf.mxu0
        %v1845 = vpop.f32.mrf.mxu0
        %1846 = vdwg.mxu0
        %v1847 = vld [vmem:[%s1201] sm:$0xf]
        %v1849 = vlaneseq
        %v1850 = vshrl.u32 %v1849, 7
        %v1851 = vsub.s32 0, %v1850
        %v1852 = vrot.slane %v1847, %v1851
        %v1853 = vlaneseq
        %v1854 = vshrl.u32 %v1853, 7
        %v1855 = vsub.s32 1, %v1854
        %v1856 = vrot.slane %v1847, %v1855
        %v1857 = vlaneseq
        %v1858 = vshrl.u32 %v1857, 7
        %v1859 = vsub.s32 2, %v1858
        %v1860 = vrot.slane %v1847, %v1859
        %v1861 = vlaneseq
        %v1862 = vshrl.u32 %v1861, 7
        %v1863 = vsub.s32 3, %v1862
        %v1864 = vrot.slane %v1847, %v1863
        %v1869 = vmul.f32 %v1800, %v1852
        %v1870 = vmul.f32 %v1802, %v1856
        %v1871 = vmul.f32 %v1841, %v1860
        %v1872 = vmul.f32 %v1843, %v1864
        %v1873 = vld [vmem:[#allocation3] sm:$0xf]
        %v1875 = vsel %vm1761, %v1873, 0
        %1877 = vmatprep.subr.bf16.mxu0 0
        %1878 = vmatpush1.bf16.msra.mxu0 0
        %1879 = vmatprep.subr.bf16.mxu0 0
        %1880 = vmatpush1.bf16.msra.mxu0 0
        %1881 = vmatprep.subr.bf16.mxu0 0
        %1882 = vmatpush1.bf16.msra.mxu0 0
        %1883 = vmatprep.subr.bf16.mxu0 0
        %1884 = vmatpush1.bf16.msra.mxu0 0
        %1885 = vmatprep.subr.bf16.mxu0 0
        %1886 = vmatpush1.bf16.msra.mxu0 0
        %1887 = vmatprep.subr.bf16.mxu0 0
        %1888 = vmatpush1.bf16.msra.mxu0 0
        %1889 = vmatprep.subr.bf16.mxu0 %v1757
        %1890 = vmatpush1.bf16.msra.mxu0 %v1756
        %1891 = vmatprep.subr.bf16.mxu0 %v1753
        %1892 = vmatpush1.bf16.msra.mxu0 %v1752
        %1893 = vmatprep.subr.bf16.mxu0 0
        %1894 = vmatpush2.bf16.msra.mxu0 0
        %1895 = vmatprep.subr.bf16.mxu0 0
        %1896 = vmatpush2.bf16.msra.mxu0 0
        %1897 = vmatprep.subr.bf16.mxu0 0
        %1898 = vmatpush2.bf16.msra.mxu0 0
        %1899 = vmatprep.subr.bf16.mxu0 0
        %1900 = vmatpush2.bf16.msra.mxu0 0
        %1901 = vmatprep.subr.bf16.mxu0 0
        %1902 = vmatpush2.bf16.msra.mxu0 0
        %1903 = vmatprep.subr.bf16.mxu0 0
        %1904 = vmatpush2.bf16.msra.mxu0 0
        %1905 = vmatprep.subr.bf16.mxu0 0
        %1906 = vmatpush2.bf16.msra.mxu0 0
        %1907 = vmatprep.subr.bf16.mxu0 0
        %1908 = vmatpush2.bf16.msra.mxu0 0
        %1909 = vmatprep.mubr.bf16.mxu0 0
        %1910 = vmatmul.mubr.bf16.gmra.mxu0 %v1875
        %v1911 = vpop.f32.mrf.mxu0
        %v1912 = vadd.f32 0.0, %v1911
        %v1913 = vpop.f32.mrf.mxu0
        %v1914 = vadd.f32 0.0, %v1913
        %v1915 = vpop.f32.mrf.mxu0
        %v1916 = vpop.f32.mrf.mxu0
        %1917 = vdwg.mxu0
        %1918 = vmatprep.subr.bf16.mxu0 0
        %1919 = vmatpush1.bf16.msra.mxu0 0
        %1920 = vmatprep.subr.bf16.mxu0 0
        %1921 = vmatpush1.bf16.msra.mxu0 0
        %1922 = vmatprep.subr.bf16.mxu0 0
        %1923 = vmatpush1.bf16.msra.mxu0 0
        %1924 = vmatprep.subr.bf16.mxu0 0
        %1925 = vmatpush1.bf16.msra.mxu0 0
        %1926 = vmatprep.subr.bf16.mxu0 0
        %1927 = vmatpush1.bf16.msra.mxu0 0
        %1928 = vmatprep.subr.bf16.mxu0 0
        %1929 = vmatpush1.bf16.msra.mxu0 0
        %1930 = vmatprep.subr.bf16.mxu0 %v1759
        %1931 = vmatpush1.bf16.msra.mxu0 %v1758
        %1932 = vmatprep.subr.bf16.mxu0 %v1755
        %1933 = vmatpush1.bf16.msra.mxu0 %v1754
        %1934 = vmatprep.subr.bf16.mxu0 0
        %1935 = vmatpush2.bf16.msra.mxu0 0
        %1936 = vmatprep.subr.bf16.mxu0 0
        %1937 = vmatpush2.bf16.msra.mxu0 0
        %1938 = vmatprep.subr.bf16.mxu0 0
        %1939 = vmatpush2.bf16.msra.mxu0 0
        %1940 = vmatprep.subr.bf16.mxu0 0
        %1941 = vmatpush2.bf16.msra.mxu0 0
        %1942 = vmatprep.subr.bf16.mxu0 0
        %1943 = vmatpush2.bf16.msra.mxu0 0
        %1944 = vmatprep.subr.bf16.mxu0 0
        %1945 = vmatpush2.bf16.msra.mxu0 0
        %1946 = vmatprep.subr.bf16.mxu0 0
        %1947 = vmatpush2.bf16.msra.mxu0 0
        %1948 = vmatprep.subr.bf16.mxu0 0
        %1949 = vmatpush2.bf16.msra.mxu0 0
        %1950 = vmatprep.mubr.bf16.mxu0 0
        %1951 = vmatmul.mubr.bf16.gmra.mxu0 %v1875
        %v1952 = vpop.f32.mrf.mxu0
        %v1953 = vadd.f32 0.0, %v1952
        %v1954 = vpop.f32.mrf.mxu0
        %v1955 = vadd.f32 0.0, %v1954
        %v1956 = vpop.f32.mrf.mxu0
        %v1957 = vpop.f32.mrf.mxu0
        %1958 = vdwg.mxu0
        %v1959 = vld [vmem:[%s1074] sm:$0xf]
        %v1961 = vlaneseq
        %v1962 = vshrl.u32 %v1961, 7
        %v1963 = vsub.s32 0, %v1962
        %v1964 = vrot.slane %v1959, %v1963
        %v1965 = vlaneseq
        %v1966 = vshrl.u32 %v1965, 7
        %v1967 = vsub.s32 1, %v1966
        %v1968 = vrot.slane %v1959, %v1967
        %v1969 = vlaneseq
        %v1970 = vshrl.u32 %v1969, 7
        %v1971 = vsub.s32 2, %v1970
        %v1972 = vrot.slane %v1959, %v1971
        %v1973 = vlaneseq
        %v1974 = vshrl.u32 %v1973, 7
        %v1975 = vsub.s32 3, %v1974
        %v1976 = vrot.slane %v1959, %v1975
        %v1981 = vmul.f32 %v1912, %v1964
        %v1982 = vmul.f32 %v1914, %v1968
        %v1983 = vmul.f32 %v1953, %v1972
        %v1984 = vmul.f32 %v1955, %v1976
        %v1985 = vadd.f32 %v1869, %v1981
        %v1986 = vadd.f32 %v1870, %v1982
        %v1987 = vadd.f32 %v1871, %v1983
        %v1988 = vadd.f32 %v1872, %v1984
        %v1989 = vld [vmem:[%s1083] sm:$0xf]
        %v1991 = vlaneseq
        %v1992 = vshrl.u32 %v1991, 7
        %v1993 = vsub.s32 0, %v1992
        %v1994 = vrot.slane %v1989, %v1993
        %v1995 = vlaneseq
        %v1996 = vshrl.u32 %v1995, 7
        %v1997 = vsub.s32 1, %v1996
        %v1998 = vrot.slane %v1989, %v1997
        %v1999 = vlaneseq
        %v2000 = vshrl.u32 %v1999, 7
        %v2001 = vsub.s32 2, %v2000
        %v2002 = vrot.slane %v1989, %v2001
        %v2003 = vlaneseq
        %v2004 = vshrl.u32 %v2003, 7
        %v2005 = vsub.s32 3, %v2004
        %v2006 = vrot.slane %v1989, %v2005
        %v2011 = vadd.f32 %v1985, %v1994
        %v2012 = vadd.f32 %v1986, %v1998
        %v2013 = vadd.f32 %v1987, %v2002
        %v2014 = vadd.f32 %v1988, %v2006
        %2015 = vst [vmem:[%s1164] sm:$0xff] %v2011
        %2016 = vst [vmem:[%s1164 + $0x8] sm:$0xff] %v2012
        %2017 = vst [vmem:[%s1164 + $0x10] sm:$0xff] %v2013
        %2018 = vst [vmem:[%s1164 + $0x18] sm:$0xff] %v2014
        %v2019 = vld [vmem:[#allocation4] sm:$0xff]
        %v2020 = vmax.f32 %v2011, %v2012
        %v2021 = vmax.f32 %v2013, %v2014
        %v2022 = vmax.f32 %v2020, %v2021
        %2023 = vmax.xlane.f32.xlu0 %v2022
        %v2024 = vpop.xlane.xlu0 %2023
        %v2025 = vmax.f32 %v2019, %v2024
        %v2026 = vld [vmem:[#allocation5] sm:$0xff]
        %v2027 = vsub.f32 %v2019, %v2025
        %v2028 = vmul.f32 %v2027, 1.442695
        %v2029 = vpow.pop %v2028
        %v2030 = vmul.f32 %v2026, %v2029
        %2032 = vset.pattern.permute.xlu0 0
        %2033 = vperm.xlu0 %2032, %v2025
        %v2034 = vpop.permute.xlu0 %2033
        %v2036 = vsub.f32 %v2011, %v2034
        %v2037 = vsub.f32 %v2012, %v2034
        %v2038 = vsub.f32 %v2013, %v2034
        %v2039 = vsub.f32 %v2014, %v2034
        %v2040 = vmul.f32 %v2036, 1.442695
        %v2041 = vpow.pop %v2040
        %v2042 = vmul.f32 %v2037, 1.442695
        %v2043 = vpow.pop %v2042
        %v2044 = vmul.f32 %v2038, 1.442695
        %v2045 = vpow.pop %v2044
        %v2046 = vmul.f32 %v2039, 1.442695
        %v2047 = vpow.pop %v2046
        %v2048 = vadd.f32 %v2041, %v2043
        %v2049 = vadd.f32 %v2048, %v2045
        %v2050 = vadd.f32 %v2049, %v2047
        %2051 = vadd.xlane.f32.xlu0 %v2050
        %v2052 = vpop.xlane.xlu0 %2051
        %v2053 = vadd.f32 %v2030, %v2052
        %vm2054 = vcmask 7168
        %2055 = vst.msk [vmem:[#allocation5] sm:$0xff] %vm2054, %v2053
        %2056 = vst.msk [vmem:[#allocation4] sm:$0xff] %vm2054, %v2025
        %p2057 = scmp.eq.s32.totalorder %s62, 1
        // Predicated region
        $region185: #{tpu_custom_call.1} parent=107 // pred_check
          %p2058 = pneg %p2057
        $region186: #{tpu_custom_call.1} parent=107 // pred_check_branch
          %2060 = sbr.rel (%p2058) target = $region188
        $region187: #{tpu_custom_call.1} parent=107 // pred_region
          %v2061 = vld [vmem:[#allocation4] sm:$0xff]
          %2063 = vset.pattern.permute.xlu0 0
          %2064 = vperm.xlu0 %2063, %v2061
          %v2065 = vpop.permute.xlu0 %2064
          %2067 = vst [vmem:[%s1185] sm:$0xff] %v2065
          %v2068 = vld [vmem:[#allocation5] sm:$0xff]
          %2070 = vset.pattern.permute.xlu0 0
          %2071 = vperm.xlu0 %2070, %v2068
          %v2072 = vpop.permute.xlu0 %2071
          %2074 = vst [vmem:[%s1192] sm:$0xff] %v2072
        $region188: #{tpu_custom_call.1} parent=107 // pred_fallthru
          _
        %s2075 = sand.u32 %s588, 1
        %s2076 = scalar_lea.sflag [#allocation9], %s2075
        %s2077 = sand.u32 %s588, 1
        %s2078 = smul.addr %s2077, 32
        %s2079 = scalar_lea.vmem [#allocation34], %s2078
        %s2080 = sand.u32 %s57, 1
        %s2081 = scalar_lea.sflag [#allocation36], %s2080
        %s2082 = sand.u32 %s614, 1
        %s2083 = smul.addr %s2082, 8
        %s2084 = scalar_lea.vmem [#allocation35], %s2083
        %s2085 = sand.u32 %s57, 1
        %s2086 = scalar_lea.sflag [#allocation36], %s2085
        %s2087 = sand.u32 %s640, 1
        %s2088 = smul.addr %s2087, 8
        %s2089 = scalar_lea.vmem [#allocation37], %s2088
        %s2090 = sand.u32 %s57, 1
        %s2091 = scalar_lea.sflag [#allocation39], %s2090
        %s2092 = sand.u32 %s666, 1
        %s2093 = smul.addr %s2092, 8
        %s2094 = scalar_lea.vmem [#allocation38], %s2093
        %s2095 = sand.u32 %s57, 1
        %s2096 = scalar_lea.sflag [#allocation39], %s2095
        %s2097 = sand.u32 %s692, 1
        %s2098 = smul.addr %s2097, 8
        %s2099 = scalar_lea.vmem [#allocation40], %s2098
        // Predicated region
        $region189: #{tpu_custom_call.1} parent=107 // pred_check
          %p2100 = pneg %p598
        $region190: #{tpu_custom_call.1} parent=107 // pred_check_branch
          %2102 = sbr.rel (%p2100) target = $region192
        $region191: #{tpu_custom_call.1} parent=107 // pred_region
          %s2103 = smul.u32 %s61, 2
          %s2104 = sadd.s32 %s2103, %s62
          %s2105 = smul.u32 4, %s2104
          %s2107 = ssub.s32 512, 512
          %2108 = vsyncadd %s2076, %s2107
          %s2109 = smul.addr %s2105, 128
          %s2110 = scalar_lea.hbm %s22, %s2109
          %s2112 = sshll.u32 %s2079, 4
          %s2113 = int_to_ptr.vmem [resolvable:$true] %s2112
          %2115 = dma.vmem_to_hbm [thread:$0]  %s2113, 512, %s2110, %s2076
        $region192: #{tpu_custom_call.1} parent=107 // pred_fallthru
          _
        // Predicated region
        $region193: #{tpu_custom_call.1} parent=107 // pred_check
          %p2116 = pneg %p624
        $region194: #{tpu_custom_call.1} parent=107 // pred_check_branch
          %2118 = sbr.rel (%p2116) target = $region196
        $region195: #{tpu_custom_call.1} parent=107 // pred_region
          %s2120 = ssub.s32 128, 128
          %2121 = vsyncadd %s2081, %s2120
          %s2122 = smul.addr %s61, 128
          %s2123 = scalar_lea.hbm %s23, %s2122
          %s2125 = sshll.u32 %s2084, 4
          %s2126 = int_to_ptr.vmem [resolvable:$true] %s2125
          %2128 = dma.vmem_to_hbm [thread:$0]  %s2126, 128, %s2123, %s2081
        $region196: #{tpu_custom_call.1} parent=107 // pred_fallthru
          _
        // Predicated region
        $region197: #{tpu_custom_call.1} parent=107 // pred_check
          %p2129 = pneg %p650
        $region198: #{tpu_custom_call.1} parent=107 // pred_check_branch
          %2131 = sbr.rel (%p2129) target = $region200
        $region199: #{tpu_custom_call.1} parent=107 // pred_region
          %s2133 = ssub.s32 128, 128
          %2134 = vsyncadd %s2086, %s2133
          %s2135 = smul.addr %s61, 128
          %s2136 = scalar_lea.hbm %s24, %s2135
          %s2138 = sshll.u32 %s2089, 4
          %s2139 = int_to_ptr.vmem [resolvable:$true] %s2138
          %2141 = dma.vmem_to_hbm [thread:$0]  %s2139, 128, %s2136, %s2086
        $region200: #{tpu_custom_call.1} parent=107 // pred_fallthru
          _
        // Predicated region
        $region201: #{tpu_custom_call.1} parent=107 // pred_check
          %p2142 = pneg %p676
        $region202: #{tpu_custom_call.1} parent=107 // pred_check_branch
          %2144 = sbr.rel (%p2142) target = $region204
        $region203: #{tpu_custom_call.1} parent=107 // pred_region
          %s2146 = ssub.s32 128, 128
          %2147 = vsyncadd %s2091, %s2146
          %s2148 = smul.addr %s61, 128
          %s2149 = scalar_lea.hbm %s25, %s2148
          %s2151 = sshll.u32 %s2094, 4
          %s2152 = int_to_ptr.vmem [resolvable:$true] %s2151
          %2154 = dma.vmem_to_hbm [thread:$0]  %s2152, 128, %s2149, %s2091
        $region204: #{tpu_custom_call.1} parent=107 // pred_fallthru
          _
        // Predicated region
        $region205: #{tpu_custom_call.1} parent=107 // pred_check
          %p2155 = pneg %p702
        $region206: #{tpu_custom_call.1} parent=107 // pred_check_branch
          %2157 = sbr.rel (%p2155) target = $region208
        $region207: #{tpu_custom_call.1} parent=107 // pred_region
          %s2159 = ssub.s32 128, 128
          %2160 = vsyncadd %s2096, %s2159
          %s2161 = smul.addr %s61, 128
          %s2162 = scalar_lea.hbm %s26, %s2161
          %s2164 = sshll.u32 %s2099, 4
          %s2165 = int_to_ptr.vmem [resolvable:$true] %s2164
          %2167 = dma.vmem_to_hbm [thread:$0]  %s2165, 128, %s2162, %s2096
        $region208: #{tpu_custom_call.1} parent=107 // pred_fallthru
          _
      $region108: #{tpu_custom_call.1} parent=5 // pred_fallthru
        _
      %p2168 = scmp.le.s32.totalorder 2, %s52
      // Predicated region
      $region209: #{tpu_custom_call.1} parent=5 // pred_check
        %p2169 = pneg %p2168
      $region210: #{tpu_custom_call.1} parent=5 // pred_check_branch
        %2171 = sbr.rel (%p2169) target = $region212
      $region211: #{tpu_custom_call.1} parent=5 // pred_region
        %s2172 = ssub.s32 %s52, 2
        // Predicated region
        $region213: #{tpu_custom_call.1} parent=211 // pred_check
          %p2173 = pneg %p604
        $region214: #{tpu_custom_call.1} parent=211 // pred_check_branch
          %2175 = sbr.rel (%p2173) target = $region216
        $region215: #{tpu_custom_call.1} parent=211 // pred_region
          %s2176 = sand.u32 %s589, 1
          %s2177 = scalar_lea.sflag [#allocation9], %s2176
          %s2178 = sand.u32 %s589, 1
          %s2179 = smul.addr %s2178, 32
          %s2180 = scalar_lea.vmem [#allocation34], %s2179
          %2181 = dma.done %s2177, 512
        $region216: #{tpu_custom_call.1} parent=211 // pred_fallthru
          _
        // Predicated region
        $region217: #{tpu_custom_call.1} parent=211 // pred_check
          %p2182 = pneg %p630
        $region218: #{tpu_custom_call.1} parent=211 // pred_check_branch
          %2184 = sbr.rel (%p2182) target = $region220
        $region219: #{tpu_custom_call.1} parent=211 // pred_region
          %s2185 = sand.u32 %s58, 1
          %s2186 = scalar_lea.sflag [#allocation36], %s2185
          %s2187 = sand.u32 %s615, 1
          %s2188 = smul.addr %s2187, 8
          %s2189 = scalar_lea.vmem [#allocation35], %s2188
          %2190 = dma.done %s2186, 128
        $region220: #{tpu_custom_call.1} parent=211 // pred_fallthru
          _
        // Predicated region
        $region221: #{tpu_custom_call.1} parent=211 // pred_check
          %p2191 = pneg %p656
        $region222: #{tpu_custom_call.1} parent=211 // pred_check_branch
          %2193 = sbr.rel (%p2191) target = $region224
        $region223: #{tpu_custom_call.1} parent=211 // pred_region
          %s2194 = sand.u32 %s58, 1
          %s2195 = scalar_lea.sflag [#allocation36], %s2194
          %s2196 = sand.u32 %s641, 1
          %s2197 = smul.addr %s2196, 8
          %s2198 = scalar_lea.vmem [#allocation37], %s2197
          %2199 = dma.done %s2195, 128
        $region224: #{tpu_custom_call.1} parent=211 // pred_fallthru
          _
        // Predicated region
        $region225: #{tpu_custom_call.1} parent=211 // pred_check
          %p2200 = pneg %p682
        $region226: #{tpu_custom_call.1} parent=211 // pred_check_branch
          %2202 = sbr.rel (%p2200) target = $region228
        $region227: #{tpu_custom_call.1} parent=211 // pred_region
          %s2203 = sand.u32 %s58, 1
          %s2204 = scalar_lea.sflag [#allocation39], %s2203
          %s2205 = sand.u32 %s667, 1
          %s2206 = smul.addr %s2205, 8
          %s2207 = scalar_lea.vmem [#allocation38], %s2206
          %2208 = dma.done %s2204, 128
        $region228: #{tpu_custom_call.1} parent=211 // pred_fallthru
          _
        // Predicated region
        $region229: #{tpu_custom_call.1} parent=211 // pred_check
          %p2209 = pneg %p708
        $region230: #{tpu_custom_call.1} parent=211 // pred_check_branch
          %2211 = sbr.rel (%p2209) target = $region232
        $region231: #{tpu_custom_call.1} parent=211 // pred_region
          %s2212 = sand.u32 %s58, 1
          %s2213 = scalar_lea.sflag [#allocation39], %s2212
          %s2214 = sand.u32 %s693, 1
          %s2215 = smul.addr %s2214, 8
          %s2216 = scalar_lea.vmem [#allocation40], %s2215
          %2217 = dma.done %s2213, 128
        $region232: #{tpu_custom_call.1} parent=211 // pred_fallthru
          _
      $region212: #{tpu_custom_call.1} parent=5 // pred_fallthru
        _
    $region6: #{tpu_custom_call.1} parent=1 // loop_footer
      %s56 = sadd.s32 1, %s52
    $region7: #{tpu_custom_call.1} parent=1 // loop_footer_branch
      %51 = sbr.rel target = $region3
    $region8: #{tpu_custom_call.1} parent=1 // loop_exit
      _
    %2218 = vsyncpa [#allocation8], 1
    %s2219 = scalar_lea.sflag [#allocation8], 1
    %2220 = vsyncpa %s2219, 1
    %2221 = vsyncpa [#allocation11], 1
    %2222 = vsyncpa [#allocation14], 1
    %2223 = vsyncpa [#allocation17], 1
    %2224 = vsyncpa [#allocation20], 1
    %2225 = vsyncpa [#allocation23], 1
    %2226 = vsyncpa [#allocation26], 1
    %2227 = vsyncpa [#allocation29], 1
    %2228 = vsyncpa [#allocation9], 1
    %s2229 = scalar_lea.sflag [#allocation9], 1
    %2230 = vsyncpa %s2229, 1
    %2231 = vsyncpa [#allocation36], 1
    %s2232 = scalar_lea.sflag [#allocation36], 1
    %2233 = vsyncpa %s2232, 1
    %2234 = vsyncpa [#allocation39], 1
    %s2235 = scalar_lea.sflag [#allocation39], 1
    %2236 = vsyncpa %s2235, 1

</llo_original>
